<compile_context>
chip_gen: v5e
topology: v5e:2x2
jax: 0.10.0
libtpu: 0.0.40
codegen_flags: <defaults>
</compile_context>

<pallas_src>
import jax
import jax.numpy as jnp
from jax.experimental import pallas as pl
from jax.experimental.pallas import tpu as pltpu


def pool_fc_kernel(x_ref, w_ref, o_ref):
    """x_ref: (Bt, C, HW) features.  w_ref: (num_out, C) fc weight.  o_ref: (Bt, num_out)."""
    # AdaptiveAvgPool2d((1,1)) + flatten == mean over the HW (lane) axis.
    # Sum in f32 (safe even for bf16 inputs), then scale by 1/HW — matches the
    # reference mean-then-dot numerics exactly.
    inv_hw = 1.0 / x_ref.shape[-1]
    pooled = jnp.sum(x_ref[...].astype(jnp.float32), axis=-1) * inv_hw      # (Bt, C)
    # nn.Linear(C, num_out): contract the channel axis against the lane-dense
    # (num_out, C) weight on the MXU; accumulate in f32.
    o_ref[...] = jax.lax.dot_general(
        pooled, w_ref[...],
        dimension_numbers=(((1,), (1,)), ((), ())),
        preferred_element_type=jnp.float32)                                  # (Bt, num_out)


def clip_classifier_v3_head(feats_nchw, fc_w, fc_b):
    """feats_nchw: (B, C, H, W) feature map (what encode_image with attnpool=Identity
    returns).  fc_w: (num_out, C) nn.Linear weight.  fc_b: (num_out,) bias."""
    B, C, H, W = feats_nchw.shape
    hw = H * W
    num_out = fc_w.shape[0]

    # Free reshape only — no transpose, no extra HBM pass over the feature map.
    x = feats_nchw.reshape(B, C, hw)
    w = fc_w.astype(jnp.float32)                  # (num_out, C), tiny (16 KiB)

    # Batch tile: keeps the double-buffered feature block small (bt*C*hw*4 bytes
    # per buffer) so it fits every generation's scoped-VMEM default, and gives
    # the pipeline something to overlap.  bt must be a multiple of 8 or equal
    # the full batch extent (output-block sublane constraint).
    if B > 8 and B % 8 == 0:
        bt = 8
    else:
        bt = B
    grid = (B // bt,)

    logits = pl.pallas_call(
        pool_fc_kernel,
        out_shape=jax.ShapeDtypeStruct((B, num_out), jnp.float32),
        grid=grid,
        in_specs=[
            pl.BlockSpec((bt, C, hw), lambda i: (i, 0, 0)),      # features (native layout)
            pl.BlockSpec((num_out, C), lambda i: (0, 0)),        # lane-dense fc weight
        ],
        out_specs=pl.BlockSpec((bt, num_out), lambda i: (i, 0)),
        compiler_params=pltpu.CompilerParams(
            dimension_semantics=("parallel",)),                  # megacore: split batch
    )(x, w)

    # Tiny (B, num_out) bias add in the wrapper — avoids a pointless padded
    # (8, 128) double-buffered VMEM operand inside the kernel.
    return logits + fc_b.astype(jnp.float32)


if __name__ == "__main__":
    # Shapes consistent with the module: RN50 @ 224x224 -> (B, 2048, 7, 7),
    # fc = nn.Linear(2048, 2).
    B, C, H, W = 2, 2048, 7, 7

    key = jax.random.PRNGKey(0)
    k_x, k_w, k_b = jax.random.split(key, 3)

    feats = jax.random.normal(k_x, (B, C, H, W), dtype=jnp.float32)
    fc_w = jax.random.normal(k_w, (2, C), dtype=jnp.float32) * 0.02
    fc_b = jax.random.normal(k_b, (2,), dtype=jnp.float32) * 0.01

    logits = jax.block_until_ready(clip_classifier_v3_head(feats, fc_w, fc_b))

    # Pure-JAX reference for the implemented head (pool -> flatten -> fc).
    ref = jnp.mean(feats, axis=(2, 3)) @ fc_w.T + fc_b
    assert logits.shape == (B, 2)
    assert jnp.allclose(logits, ref, atol=1e-4, rtol=1e-4), float(
        jnp.max(jnp.abs(logits - ref)))

    print("KERNEL_OK")
</pallas_src>

<mosaic_0001>
module attributes {stable_mosaic.version = 11 : i64} {
  func.func @pool_fc_kernel(%arg0: i32, %arg1: memref<2x2048x49xf32, #tpu.memory_space<vmem>>, %arg2: memref<2x2048xf32, #tpu.memory_space<vmem>>, %arg3: memref<2x2xf32, #tpu.memory_space<vmem>>) attributes {dimension_semantics = [#tpu.dimension_semantics<parallel>], iteration_bounds = array<i64: 1>, scalar_prefetch = 0 : i64, scratch_operands = 0 : i64, tpu.core_type = #tpu.core_type<tc>, window_params = [{transform_indices = @transform_0, window_bounds = array<i64: 2, 2048, 49>}, {pipeline_mode = #tpu.pipeline_mode<synchronous>, transform_indices = @transform_1, window_bounds = array<i64: 2, 2048>}, {transform_indices = @transform_2, window_bounds = array<i64: 2, 2>}]} {
    %c0 = arith.constant 0 : index
    %c0_0 = arith.constant 0 : index
    %c0_1 = arith.constant 0 : index
    %0 = vector.load %arg1[%c0, %c0_0, %c0_1] : memref<2x2048x49xf32, #tpu.memory_space<vmem>>, vector<2x2048x49xf32>
    %cst = arith.constant dense<0.000000e+00> : vector<2x2048xf32>
    %1 = vector.multi_reduction <add>, %0, %cst [2] : vector<2x2048x49xf32> to vector<2x2048xf32>
    %cst_2 = arith.constant 0.0204081628 : f32
    %2 = vector.broadcast %cst_2 : f32 to vector<2x2048xf32>
    %3 = arith.mulf %1, %2 : vector<2x2048xf32>
    %c0_3 = arith.constant 0 : index
    %c0_4 = arith.constant 0 : index
    %4 = vector.load %arg2[%c0_3, %c0_4] : memref<2x2048xf32, #tpu.memory_space<vmem>>, vector<2x2048xf32>
    %cst_5 = arith.constant dense<0.000000e+00> : vector<2x2xf32>
    %5 = tpu.matmul %3, %4, %cst_5 {dimension_numbers = #tpu.dot_dimension_numbers<[1], [1], [0], [0], [0, 0, 1, 0], [], []>} : vector<2x2048xf32>, vector<2x2048xf32>, vector<2x2xf32> -> vector<2x2xf32>
    %c0_6 = arith.constant 0 : index
    %c0_7 = arith.constant 0 : index
    %6 = vector.load %arg3[%c0_6, %c0_7] : memref<2x2xf32, #tpu.memory_space<vmem>>, vector<2x2xf32>
    tpu.vector_store %arg3[%c0_6, %c0_7], %5 {strides = array<i32>} : memref<2x2xf32, #tpu.memory_space<vmem>>, vector<2x2xf32>,
    return
  }
  func.func @transform_0(%arg0: i32) -> (i32, i32, i32) {
    %c0_i32 = arith.constant 0 : i32
    %c0_i32_0 = arith.constant 0 : i32
    %c0_i32_1 = arith.constant 0 : i32
    return %arg0, %c0_i32, %c0_i32_0 : i32, i32, i32
  }
  func.func @transform_1(%arg0: i32) -> (i32, i32) {
    %c0_i32 = arith.constant 0 : i32
    %c0_i32_0 = arith.constant 0 : i32
    %c0_i32_1 = arith.constant 0 : i32
    return %c0_i32, %c0_i32_0 : i32, i32
  }
  func.func @transform_2(%arg0: i32) -> (i32, i32) {
    %c0_i32 = arith.constant 0 : i32
    %c0_i32_0 = arith.constant 0 : i32
    return %arg0, %c0_i32 : i32, i32
  }
}

</mosaic_0001>

<llo_original>
// kernel: tpu_custom_call.1
$region0: #{tpu_custom_call.1}
  #allocation0 [shape = 'u32[]', space=smem, size = 0x4, offset = 0x4, fixed_abs, tag = 'smem constant byte address 0x4 - core index']
  #allocation1 [shape = 'u32[72,128]{1,0:T(1,128)}', space=vmem, size = 0x9000, scoped, tag = 'internal scratch']
  %s0 = inlined_call_operand.vmem [shape: f32[2,2048,49], index: 0, kind: input, shape index: {}]
  %s1 = inlined_call_operand.vmem [shape: f32[2,2048], index: 1, kind: input, shape index: {}]
  %s2 = inlined_call_operand.hbm [shape: f32[2,2], index: 2, kind: output, shape index: {}]
  %s3 = sld [smem:[#allocation0]]
  $region18: #{tpu_custom_call.1} parent=0
    _
  %s5 = ssub.s32 1, %s3
  %s6 = scalar_select 0, %s5, %s3
  $region1: #{tpu_custom_call.1} parent=0
    #allocation2 [shape = 'u8[1024]{0}', space=vmem, size = 0x400, scoped, tag = 'output window, operand 0, single buffered']
    #allocation3 [shape = 's32[1]{0}', space=sflag, size = 0x4, scoped, tag = 'scoped memory for tpu_custom_call.1']
    %7 = vsyncpa [#allocation3], 0
    // Predicated region
    $region2: #{tpu_custom_call.1} parent=1 // pred_check
      _
    $region3: #{tpu_custom_call.1} parent=1 // pred_check_branch
      %9 = sbr.rel (0) target = $region5
    $region4: #{tpu_custom_call.1} parent=1 // pred_region
      _
    $region5: #{tpu_custom_call.1} parent=1 // pred_fallthru
      _
    // Predicated region
    $region6: #{tpu_custom_call.1} parent=1 // pred_check
      _
    $region7: #{tpu_custom_call.1} parent=1 // pred_check_branch
      %11 = sbr.rel (0) target = $region9
    $region8: #{tpu_custom_call.1} parent=1 // pred_region
      _
    $region9: #{tpu_custom_call.1} parent=1 // pred_fallthru
      _
    %v12 = vld [vmem:[%s0] sm:$0xff]
    %v13 = vld [vmem:[%s0 + $0x8] sm:$0xff]
    %v14 = vld [vmem:[%s0 + $0x10] sm:$0xff]
    %v15 = vld [vmem:[%s0 + $0x18] sm:$0xff]
    %v16 = vld [vmem:[%s0 + $0x20] sm:$0xff]
    %v17 = vld [vmem:[%s0 + $0x28] sm:$0xff]
    %v18 = vld [vmem:[%s0 + $0x30] sm:$0xff]
    %v19 = vld [vmem:[%s0 + $0x38] sm:$0xff]
    %v20 = vld [vmem:[%s0 + $0x40] sm:$0xff]
    %v21 = vld [vmem:[%s0 + $0x48] sm:$0xff]
    %v22 = vld [vmem:[%s0 + $0x50] sm:$0xff]
    %v23 = vld [vmem:[%s0 + $0x58] sm:$0xff]
    %v24 = vld [vmem:[%s0 + $0x60] sm:$0xff]
    %v25 = vld [vmem:[%s0 + $0x68] sm:$0xff]
    %v26 = vld [vmem:[%s0 + $0x70] sm:$0xff]
    %v27 = vld [vmem:[%s0 + $0x78] sm:$0xff]
    %v28 = vld [vmem:[%s0 + $0x80] sm:$0xff]
    %v29 = vld [vmem:[%s0 + $0x88] sm:$0xff]
    %v30 = vld [vmem:[%s0 + $0x90] sm:$0xff]
    %v31 = vld [vmem:[%s0 + $0x98] sm:$0xff]
    %v32 = vld [vmem:[%s0 + $0xa0] sm:$0xff]
    %v33 = vld [vmem:[%s0 + $0xa8] sm:$0xff]
    %v34 = vld [vmem:[%s0 + $0xb0] sm:$0xff]
    %v35 = vld [vmem:[%s0 + $0xb8] sm:$0xff]
    %v36 = vld [vmem:[%s0 + $0xc0] sm:$0xff]
    %v37 = vld [vmem:[%s0 + $0xc8] sm:$0xff]
    %v38 = vld [vmem:[%s0 + $0xd0] sm:$0xff]
    %v39 = vld [vmem:[%s0 + $0xd8] sm:$0xff]
    %v40 = vld [vmem:[%s0 + $0xe0] sm:$0xff]
    %v41 = vld [vmem:[%s0 + $0xe8] sm:$0xff]
    %v42 = vld [vmem:[%s0 + $0xf0] sm:$0xff]
    %v43 = vld [vmem:[%s0 + $0xf8] sm:$0xff]
    %v44 = vld [vmem:[%s0 + $0x100] sm:$0xff]
    %v45 = vld [vmem:[%s0 + $0x108] sm:$0xff]
    %v46 = vld [vmem:[%s0 + $0x110] sm:$0xff]
    %v47 = vld [vmem:[%s0 + $0x118] sm:$0xff]
    %v48 = vld [vmem:[%s0 + $0x120] sm:$0xff]
    %v49 = vld [vmem:[%s0 + $0x128] sm:$0xff]
    %v50 = vld [vmem:[%s0 + $0x130] sm:$0xff]
    %v51 = vld [vmem:[%s0 + $0x138] sm:$0xff]
    %v52 = vld [vmem:[%s0 + $0x140] sm:$0xff]
    %v53 = vld [vmem:[%s0 + $0x148] sm:$0xff]
    %v54 = vld [vmem:[%s0 + $0x150] sm:$0xff]
    %v55 = vld [vmem:[%s0 + $0x158] sm:$0xff]
    %v56 = vld [vmem:[%s0 + $0x160] sm:$0xff]
    %v57 = vld [vmem:[%s0 + $0x168] sm:$0xff]
    %v58 = vld [vmem:[%s0 + $0x170] sm:$0xff]
    %v59 = vld [vmem:[%s0 + $0x178] sm:$0xff]
    %v60 = vld [vmem:[%s0 + $0x180] sm:$0xff]
    %v61 = vld [vmem:[%s0 + $0x188] sm:$0xff]
    %v62 = vld [vmem:[%s0 + $0x190] sm:$0xff]
    %v63 = vld [vmem:[%s0 + $0x198] sm:$0xff]
    %v64 = vld [vmem:[%s0 + $0x1a0] sm:$0xff]
    %v65 = vld [vmem:[%s0 + $0x1a8] sm:$0xff]
    %v66 = vld [vmem:[%s0 + $0x1b0] sm:$0xff]
    %v67 = vld [vmem:[%s0 + $0x1b8] sm:$0xff]
    %v68 = vld [vmem:[%s0 + $0x1c0] sm:$0xff]
    %v69 = vld [vmem:[%s0 + $0x1c8] sm:$0xff]
    %v70 = vld [vmem:[%s0 + $0x1d0] sm:$0xff]
    %v71 = vld [vmem:[%s0 + $0x1d8] sm:$0xff]
    %v72 = vld [vmem:[%s0 + $0x1e0] sm:$0xff]
    %v73 = vld [vmem:[%s0 + $0x1e8] sm:$0xff]
    %v74 = vld [vmem:[%s0 + $0x1f0] sm:$0xff]
    %v75 = vld [vmem:[%s0 + $0x1f8] sm:$0xff]
    %v76 = vld [vmem:[%s0 + $0x200] sm:$0xff]
    %v77 = vld [vmem:[%s0 + $0x208] sm:$0xff]
    %v78 = vld [vmem:[%s0 + $0x210] sm:$0xff]
    %v79 = vld [vmem:[%s0 + $0x218] sm:$0xff]
    %v80 = vld [vmem:[%s0 + $0x220] sm:$0xff]
    %v81 = vld [vmem:[%s0 + $0x228] sm:$0xff]
    %v82 = vld [vmem:[%s0 + $0x230] sm:$0xff]
    %v83 = vld [vmem:[%s0 + $0x238] sm:$0xff]
    %v84 = vld [vmem:[%s0 + $0x240] sm:$0xff]
    %v85 = vld [vmem:[%s0 + $0x248] sm:$0xff]
    %v86 = vld [vmem:[%s0 + $0x250] sm:$0xff]
    %v87 = vld [vmem:[%s0 + $0x258] sm:$0xff]
    %v88 = vld [vmem:[%s0 + $0x260] sm:$0xff]
    %v89 = vld [vmem:[%s0 + $0x268] sm:$0xff]
    %v90 = vld [vmem:[%s0 + $0x270] sm:$0xff]
    %v91 = vld [vmem:[%s0 + $0x278] sm:$0xff]
    %v92 = vld [vmem:[%s0 + $0x280] sm:$0xff]
    %v93 = vld [vmem:[%s0 + $0x288] sm:$0xff]
    %v94 = vld [vmem:[%s0 + $0x290] sm:$0xff]
    %v95 = vld [vmem:[%s0 + $0x298] sm:$0xff]
    %v96 = vld [vmem:[%s0 + $0x2a0] sm:$0xff]
    %v97 = vld [vmem:[%s0 + $0x2a8] sm:$0xff]
    %v98 = vld [vmem:[%s0 + $0x2b0] sm:$0xff]
    %v99 = vld [vmem:[%s0 + $0x2b8] sm:$0xff]
    %v100 = vld [vmem:[%s0 + $0x2c0] sm:$0xff]
    %v101 = vld [vmem:[%s0 + $0x2c8] sm:$0xff]
    %v102 = vld [vmem:[%s0 + $0x2d0] sm:$0xff]
    %v103 = vld [vmem:[%s0 + $0x2d8] sm:$0xff]
    %v104 = vld [vmem:[%s0 + $0x2e0] sm:$0xff]
    %v105 = vld [vmem:[%s0 + $0x2e8] sm:$0xff]
    %v106 = vld [vmem:[%s0 + $0x2f0] sm:$0xff]
    %v107 = vld [vmem:[%s0 + $0x2f8] sm:$0xff]
    %v108 = vld [vmem:[%s0 + $0x300] sm:$0xff]
    %v109 = vld [vmem:[%s0 + $0x308] sm:$0xff]
    %v110 = vld [vmem:[%s0 + $0x310] sm:$0xff]
    %v111 = vld [vmem:[%s0 + $0x318] sm:$0xff]
    %v112 = vld [vmem:[%s0 + $0x320] sm:$0xff]
    %v113 = vld [vmem:[%s0 + $0x328] sm:$0xff]
    %v114 = vld [vmem:[%s0 + $0x330] sm:$0xff]
    %v115 = vld [vmem:[%s0 + $0x338] sm:$0xff]
    %v116 = vld [vmem:[%s0 + $0x340] sm:$0xff]
    %v117 = vld [vmem:[%s0 + $0x348] sm:$0xff]
    %v118 = vld [vmem:[%s0 + $0x350] sm:$0xff]
    %v119 = vld [vmem:[%s0 + $0x358] sm:$0xff]
    %v120 = vld [vmem:[%s0 + $0x360] sm:$0xff]
    %v121 = vld [vmem:[%s0 + $0x368] sm:$0xff]
    %v122 = vld [vmem:[%s0 + $0x370] sm:$0xff]
    %v123 = vld [vmem:[%s0 + $0x378] sm:$0xff]
    %v124 = vld [vmem:[%s0 + $0x380] sm:$0xff]
    %v125 = vld [vmem:[%s0 + $0x388] sm:$0xff]
    %v126 = vld [vmem:[%s0 + $0x390] sm:$0xff]
    %v127 = vld [vmem:[%s0 + $0x398] sm:$0xff]
    %v128 = vld [vmem:[%s0 + $0x3a0] sm:$0xff]
    %v129 = vld [vmem:[%s0 + $0x3a8] sm:$0xff]
    %v130 = vld [vmem:[%s0 + $0x3b0] sm:$0xff]
    %v131 = vld [vmem:[%s0 + $0x3b8] sm:$0xff]
    %v132 = vld [vmem:[%s0 + $0x3c0] sm:$0xff]
    %v133 = vld [vmem:[%s0 + $0x3c8] sm:$0xff]
    %v134 = vld [vmem:[%s0 + $0x3d0] sm:$0xff]
    %v135 = vld [vmem:[%s0 + $0x3d8] sm:$0xff]
    %v136 = vld [vmem:[%s0 + $0x3e0] sm:$0xff]
    %v137 = vld [vmem:[%s0 + $0x3e8] sm:$0xff]
    %v138 = vld [vmem:[%s0 + $0x3f0] sm:$0xff]
    %v139 = vld [vmem:[%s0 + $0x3f8] sm:$0xff]
    %v140 = vld [vmem:[%s0 + $0x400] sm:$0xff]
    %v141 = vld [vmem:[%s0 + $0x408] sm:$0xff]
    %v142 = vld [vmem:[%s0 + $0x410] sm:$0xff]
    %v143 = vld [vmem:[%s0 + $0x418] sm:$0xff]
    %v144 = vld [vmem:[%s0 + $0x420] sm:$0xff]
    %v145 = vld [vmem:[%s0 + $0x428] sm:$0xff]
    %v146 = vld [vmem:[%s0 + $0x430] sm:$0xff]
    %v147 = vld [vmem:[%s0 + $0x438] sm:$0xff]
    %v148 = vld [vmem:[%s0 + $0x440] sm:$0xff]
    %v149 = vld [vmem:[%s0 + $0x448] sm:$0xff]
    %v150 = vld [vmem:[%s0 + $0x450] sm:$0xff]
    %v151 = vld [vmem:[%s0 + $0x458] sm:$0xff]
    %v152 = vld [vmem:[%s0 + $0x460] sm:$0xff]
    %v153 = vld [vmem:[%s0 + $0x468] sm:$0xff]
    %v154 = vld [vmem:[%s0 + $0x470] sm:$0xff]
    %v155 = vld [vmem:[%s0 + $0x478] sm:$0xff]
    %v156 = vld [vmem:[%s0 + $0x480] sm:$0xff]
    %v157 = vld [vmem:[%s0 + $0x488] sm:$0xff]
    %v158 = vld [vmem:[%s0 + $0x490] sm:$0xff]
    %v159 = vld [vmem:[%s0 + $0x498] sm:$0xff]
    %v160 = vld [vmem:[%s0 + $0x4a0] sm:$0xff]
    %v161 = vld [vmem:[%s0 + $0x4a8] sm:$0xff]
    %v162 = vld [vmem:[%s0 + $0x4b0] sm:$0xff]
    %v163 = vld [vmem:[%s0 + $0x4b8] sm:$0xff]
    %v164 = vld [vmem:[%s0 + $0x4c0] sm:$0xff]
    %v165 = vld [vmem:[%s0 + $0x4c8] sm:$0xff]
    %v166 = vld [vmem:[%s0 + $0x4d0] sm:$0xff]
    %v167 = vld [vmem:[%s0 + $0x4d8] sm:$0xff]
    %v168 = vld [vmem:[%s0 + $0x4e0] sm:$0xff]
    %v169 = vld [vmem:[%s0 + $0x4e8] sm:$0xff]
    %v170 = vld [vmem:[%s0 + $0x4f0] sm:$0xff]
    %v171 = vld [vmem:[%s0 + $0x4f8] sm:$0xff]
    %v172 = vld [vmem:[%s0 + $0x500] sm:$0xff]
    %v173 = vld [vmem:[%s0 + $0x508] sm:$0xff]
    %v174 = vld [vmem:[%s0 + $0x510] sm:$0xff]
    %v175 = vld [vmem:[%s0 + $0x518] sm:$0xff]
    %v176 = vld [vmem:[%s0 + $0x520] sm:$0xff]
    %v177 = vld [vmem:[%s0 + $0x528] sm:$0xff]
    %v178 = vld [vmem:[%s0 + $0x530] sm:$0xff]
    %v179 = vld [vmem:[%s0 + $0x538] sm:$0xff]
    %v180 = vld [vmem:[%s0 + $0x540] sm:$0xff]
    %v181 = vld [vmem:[%s0 + $0x548] sm:$0xff]
    %v182 = vld [vmem:[%s0 + $0x550] sm:$0xff]
    %v183 = vld [vmem:[%s0 + $0x558] sm:$0xff]
    %v184 = vld [vmem:[%s0 + $0x560] sm:$0xff]
    %v185 = vld [vmem:[%s0 + $0x568] sm:$0xff]
    %v186 = vld [vmem:[%s0 + $0x570] sm:$0xff]
    %v187 = vld [vmem:[%s0 + $0x578] sm:$0xff]
    %v188 = vld [vmem:[%s0 + $0x580] sm:$0xff]
    %v189 = vld [vmem:[%s0 + $0x588] sm:$0xff]
    %v190 = vld [vmem:[%s0 + $0x590] sm:$0xff]
    %v191 = vld [vmem:[%s0 + $0x598] sm:$0xff]
    %v192 = vld [vmem:[%s0 + $0x5a0] sm:$0xff]
    %v193 = vld [vmem:[%s0 + $0x5a8] sm:$0xff]
    %v194 = vld [vmem:[%s0 + $0x5b0] sm:$0xff]
    %v195 = vld [vmem:[%s0 + $0x5b8] sm:$0xff]
    %v196 = vld [vmem:[%s0 + $0x5c0] sm:$0xff]
    %v197 = vld [vmem:[%s0 + $0x5c8] sm:$0xff]
    %v198 = vld [vmem:[%s0 + $0x5d0] sm:$0xff]
    %v199 = vld [vmem:[%s0 + $0x5d8] sm:$0xff]
    %v200 = vld [vmem:[%s0 + $0x5e0] sm:$0xff]
    %v201 = vld [vmem:[%s0 + $0x5e8] sm:$0xff]
    %v202 = vld [vmem:[%s0 + $0x5f0] sm:$0xff]
    %v203 = vld [vmem:[%s0 + $0x5f8] sm:$0xff]
    %v204 = vld [vmem:[%s0 + $0x600] sm:$0xff]
    %v205 = vld [vmem:[%s0 + $0x608] sm:$0xff]
    %v206 = vld [vmem:[%s0 + $0x610] sm:$0xff]
    %v207 = vld [vmem:[%s0 + $0x618] sm:$0xff]
    %v208 = vld [vmem:[%s0 + $0x620] sm:$0xff]
    %v209 = vld [vmem:[%s0 + $0x628] sm:$0xff]
    %v210 = vld [vmem:[%s0 + $0x630] sm:$0xff]
    %v211 = vld [vmem:[%s0 + $0x638] sm:$0xff]
    %v212 = vld [vmem:[%s0 + $0x640] sm:$0xff]
    %v213 = vld [vmem:[%s0 + $0x648] sm:$0xff]
    %v214 = vld [vmem:[%s0 + $0x650] sm:$0xff]
    %v215 = vld [vmem:[%s0 + $0x658] sm:$0xff]
    %v216 = vld [vmem:[%s0 + $0x660] sm:$0xff]
    %v217 = vld [vmem:[%s0 + $0x668] sm:$0xff]
    %v218 = vld [vmem:[%s0 + $0x670] sm:$0xff]
    %v219 = vld [vmem:[%s0 + $0x678] sm:$0xff]
    %v220 = vld [vmem:[%s0 + $0x680] sm:$0xff]
    %v221 = vld [vmem:[%s0 + $0x688] sm:$0xff]
    %v222 = vld [vmem:[%s0 + $0x690] sm:$0xff]
    %v223 = vld [vmem:[%s0 + $0x698] sm:$0xff]
    %v224 = vld [vmem:[%s0 + $0x6a0] sm:$0xff]
    %v225 = vld [vmem:[%s0 + $0x6a8] sm:$0xff]
    %v226 = vld [vmem:[%s0 + $0x6b0] sm:$0xff]
    %v227 = vld [vmem:[%s0 + $0x6b8] sm:$0xff]
    %v228 = vld [vmem:[%s0 + $0x6c0] sm:$0xff]
    %v229 = vld [vmem:[%s0 + $0x6c8] sm:$0xff]
    %v230 = vld [vmem:[%s0 + $0x6d0] sm:$0xff]
    %v231 = vld [vmem:[%s0 + $0x6d8] sm:$0xff]
    %v232 = vld [vmem:[%s0 + $0x6e0] sm:$0xff]
    %v233 = vld [vmem:[%s0 + $0x6e8] sm:$0xff]
    %v234 = vld [vmem:[%s0 + $0x6f0] sm:$0xff]
    %v235 = vld [vmem:[%s0 + $0x6f8] sm:$0xff]
    %v236 = vld [vmem:[%s0 + $0x700] sm:$0xff]
    %v237 = vld [vmem:[%s0 + $0x708] sm:$0xff]
    %v238 = vld [vmem:[%s0 + $0x710] sm:$0xff]
    %v239 = vld [vmem:[%s0 + $0x718] sm:$0xff]
    %v240 = vld [vmem:[%s0 + $0x720] sm:$0xff]
    %v241 = vld [vmem:[%s0 + $0x728] sm:$0xff]
    %v242 = vld [vmem:[%s0 + $0x730] sm:$0xff]
    %v243 = vld [vmem:[%s0 + $0x738] sm:$0xff]
    %v244 = vld [vmem:[%s0 + $0x740] sm:$0xff]
    %v245 = vld [vmem:[%s0 + $0x748] sm:$0xff]
    %v246 = vld [vmem:[%s0 + $0x750] sm:$0xff]
    %v247 = vld [vmem:[%s0 + $0x758] sm:$0xff]
    %v248 = vld [vmem:[%s0 + $0x760] sm:$0xff]
    %v249 = vld [vmem:[%s0 + $0x768] sm:$0xff]
    %v250 = vld [vmem:[%s0 + $0x770] sm:$0xff]
    %v251 = vld [vmem:[%s0 + $0x778] sm:$0xff]
    %v252 = vld [vmem:[%s0 + $0x780] sm:$0xff]
    %v253 = vld [vmem:[%s0 + $0x788] sm:$0xff]
    %v254 = vld [vmem:[%s0 + $0x790] sm:$0xff]
    %v255 = vld [vmem:[%s0 + $0x798] sm:$0xff]
    %v256 = vld [vmem:[%s0 + $0x7a0] sm:$0xff]
    %v257 = vld [vmem:[%s0 + $0x7a8] sm:$0xff]
    %v258 = vld [vmem:[%s0 + $0x7b0] sm:$0xff]
    %v259 = vld [vmem:[%s0 + $0x7b8] sm:$0xff]
    %v260 = vld [vmem:[%s0 + $0x7c0] sm:$0xff]
    %v261 = vld [vmem:[%s0 + $0x7c8] sm:$0xff]
    %v262 = vld [vmem:[%s0 + $0x7d0] sm:$0xff]
    %v263 = vld [vmem:[%s0 + $0x7d8] sm:$0xff]
    %v264 = vld [vmem:[%s0 + $0x7e0] sm:$0xff]
    %v265 = vld [vmem:[%s0 + $0x7e8] sm:$0xff]
    %v266 = vld [vmem:[%s0 + $0x7f0] sm:$0xff]
    %v267 = vld [vmem:[%s0 + $0x7f8] sm:$0xff]
    %v268 = vld [vmem:[%s0 + $0x800] sm:$0xff]
    %v269 = vld [vmem:[%s0 + $0x808] sm:$0xff]
    %v270 = vld [vmem:[%s0 + $0x810] sm:$0xff]
    %v271 = vld [vmem:[%s0 + $0x818] sm:$0xff]
    %v272 = vld [vmem:[%s0 + $0x820] sm:$0xff]
    %v273 = vld [vmem:[%s0 + $0x828] sm:$0xff]
    %v274 = vld [vmem:[%s0 + $0x830] sm:$0xff]
    %v275 = vld [vmem:[%s0 + $0x838] sm:$0xff]
    %v276 = vld [vmem:[%s0 + $0x840] sm:$0xff]
    %v277 = vld [vmem:[%s0 + $0x848] sm:$0xff]
    %v278 = vld [vmem:[%s0 + $0x850] sm:$0xff]
    %v279 = vld [vmem:[%s0 + $0x858] sm:$0xff]
    %v280 = vld [vmem:[%s0 + $0x860] sm:$0xff]
    %v281 = vld [vmem:[%s0 + $0x868] sm:$0xff]
    %v282 = vld [vmem:[%s0 + $0x870] sm:$0xff]
    %v283 = vld [vmem:[%s0 + $0x878] sm:$0xff]
    %v284 = vld [vmem:[%s0 + $0x880] sm:$0xff]
    %v285 = vld [vmem:[%s0 + $0x888] sm:$0xff]
    %v286 = vld [vmem:[%s0 + $0x890] sm:$0xff]
    %v287 = vld [vmem:[%s0 + $0x898] sm:$0xff]
    %v288 = vld [vmem:[%s0 + $0x8a0] sm:$0xff]
    %v289 = vld [vmem:[%s0 + $0x8a8] sm:$0xff]
    %v290 = vld [vmem:[%s0 + $0x8b0] sm:$0xff]
    %v291 = vld [vmem:[%s0 + $0x8b8] sm:$0xff]
    %v292 = vld [vmem:[%s0 + $0x8c0] sm:$0xff]
    %v293 = vld [vmem:[%s0 + $0x8c8] sm:$0xff]
    %v294 = vld [vmem:[%s0 + $0x8d0] sm:$0xff]
    %v295 = vld [vmem:[%s0 + $0x8d8] sm:$0xff]
    %v296 = vld [vmem:[%s0 + $0x8e0] sm:$0xff]
    %v297 = vld [vmem:[%s0 + $0x8e8] sm:$0xff]
    %v298 = vld [vmem:[%s0 + $0x8f0] sm:$0xff]
    %v299 = vld [vmem:[%s0 + $0x8f8] sm:$0xff]
    %v300 = vld [vmem:[%s0 + $0x900] sm:$0xff]
    %v301 = vld [vmem:[%s0 + $0x908] sm:$0xff]
    %v302 = vld [vmem:[%s0 + $0x910] sm:$0xff]
    %v303 = vld [vmem:[%s0 + $0x918] sm:$0xff]
    %v304 = vld [vmem:[%s0 + $0x920] sm:$0xff]
    %v305 = vld [vmem:[%s0 + $0x928] sm:$0xff]
    %v306 = vld [vmem:[%s0 + $0x930] sm:$0xff]
    %v307 = vld [vmem:[%s0 + $0x938] sm:$0xff]
    %v308 = vld [vmem:[%s0 + $0x940] sm:$0xff]
    %v309 = vld [vmem:[%s0 + $0x948] sm:$0xff]
    %v310 = vld [vmem:[%s0 + $0x950] sm:$0xff]
    %v311 = vld [vmem:[%s0 + $0x958] sm:$0xff]
    %v312 = vld [vmem:[%s0 + $0x960] sm:$0xff]
    %v313 = vld [vmem:[%s0 + $0x968] sm:$0xff]
    %v314 = vld [vmem:[%s0 + $0x970] sm:$0xff]
    %v315 = vld [vmem:[%s0 + $0x978] sm:$0xff]
    %v316 = vld [vmem:[%s0 + $0x980] sm:$0xff]
    %v317 = vld [vmem:[%s0 + $0x988] sm:$0xff]
    %v318 = vld [vmem:[%s0 + $0x990] sm:$0xff]
    %v319 = vld [vmem:[%s0 + $0x998] sm:$0xff]
    %v320 = vld [vmem:[%s0 + $0x9a0] sm:$0xff]
    %v321 = vld [vmem:[%s0 + $0x9a8] sm:$0xff]
    %v322 = vld [vmem:[%s0 + $0x9b0] sm:$0xff]
    %v323 = vld [vmem:[%s0 + $0x9b8] sm:$0xff]
    %v324 = vld [vmem:[%s0 + $0x9c0] sm:$0xff]
    %v325 = vld [vmem:[%s0 + $0x9c8] sm:$0xff]
    %v326 = vld [vmem:[%s0 + $0x9d0] sm:$0xff]
    %v327 = vld [vmem:[%s0 + $0x9d8] sm:$0xff]
    %v328 = vld [vmem:[%s0 + $0x9e0] sm:$0xff]
    %v329 = vld [vmem:[%s0 + $0x9e8] sm:$0xff]
    %v330 = vld [vmem:[%s0 + $0x9f0] sm:$0xff]
    %v331 = vld [vmem:[%s0 + $0x9f8] sm:$0xff]
    %v332 = vld [vmem:[%s0 + $0xa00] sm:$0xff]
    %v333 = vld [vmem:[%s0 + $0xa08] sm:$0xff]
    %v334 = vld [vmem:[%s0 + $0xa10] sm:$0xff]
    %v335 = vld [vmem:[%s0 + $0xa18] sm:$0xff]
    %v336 = vld [vmem:[%s0 + $0xa20] sm:$0xff]
    %v337 = vld [vmem:[%s0 + $0xa28] sm:$0xff]
    %v338 = vld [vmem:[%s0 + $0xa30] sm:$0xff]
    %v339 = vld [vmem:[%s0 + $0xa38] sm:$0xff]
    %v340 = vld [vmem:[%s0 + $0xa40] sm:$0xff]
    %v341 = vld [vmem:[%s0 + $0xa48] sm:$0xff]
    %v342 = vld [vmem:[%s0 + $0xa50] sm:$0xff]
    %v343 = vld [vmem:[%s0 + $0xa58] sm:$0xff]
    %v344 = vld [vmem:[%s0 + $0xa60] sm:$0xff]
    %v345 = vld [vmem:[%s0 + $0xa68] sm:$0xff]
    %v346 = vld [vmem:[%s0 + $0xa70] sm:$0xff]
    %v347 = vld [vmem:[%s0 + $0xa78] sm:$0xff]
    %v348 = vld [vmem:[%s0 + $0xa80] sm:$0xff]
    %v349 = vld [vmem:[%s0 + $0xa88] sm:$0xff]
    %v350 = vld [vmem:[%s0 + $0xa90] sm:$0xff]
    %v351 = vld [vmem:[%s0 + $0xa98] sm:$0xff]
    %v352 = vld [vmem:[%s0 + $0xaa0] sm:$0xff]
    %v353 = vld [vmem:[%s0 + $0xaa8] sm:$0xff]
    %v354 = vld [vmem:[%s0 + $0xab0] sm:$0xff]
    %v355 = vld [vmem:[%s0 + $0xab8] sm:$0xff]
    %v356 = vld [vmem:[%s0 + $0xac0] sm:$0xff]
    %v357 = vld [vmem:[%s0 + $0xac8] sm:$0xff]
    %v358 = vld [vmem:[%s0 + $0xad0] sm:$0xff]
    %v359 = vld [vmem:[%s0 + $0xad8] sm:$0xff]
    %v360 = vld [vmem:[%s0 + $0xae0] sm:$0xff]
    %v361 = vld [vmem:[%s0 + $0xae8] sm:$0xff]
    %v362 = vld [vmem:[%s0 + $0xaf0] sm:$0xff]
    %v363 = vld [vmem:[%s0 + $0xaf8] sm:$0xff]
    %v364 = vld [vmem:[%s0 + $0xb00] sm:$0xff]
    %v365 = vld [vmem:[%s0 + $0xb08] sm:$0xff]
    %v366 = vld [vmem:[%s0 + $0xb10] sm:$0xff]
    %v367 = vld [vmem:[%s0 + $0xb18] sm:$0xff]
    %v368 = vld [vmem:[%s0 + $0xb20] sm:$0xff]
    %v369 = vld [vmem:[%s0 + $0xb28] sm:$0xff]
    %v370 = vld [vmem:[%s0 + $0xb30] sm:$0xff]
    %v371 = vld [vmem:[%s0 + $0xb38] sm:$0xff]
    %v372 = vld [vmem:[%s0 + $0xb40] sm:$0xff]
    %v373 = vld [vmem:[%s0 + $0xb48] sm:$0xff]
    %v374 = vld [vmem:[%s0 + $0xb50] sm:$0xff]
    %v375 = vld [vmem:[%s0 + $0xb58] sm:$0xff]
    %v376 = vld [vmem:[%s0 + $0xb60] sm:$0xff]
    %v377 = vld [vmem:[%s0 + $0xb68] sm:$0xff]
    %v378 = vld [vmem:[%s0 + $0xb70] sm:$0xff]
    %v379 = vld [vmem:[%s0 + $0xb78] sm:$0xff]
    %v380 = vld [vmem:[%s0 + $0xb80] sm:$0xff]
    %v381 = vld [vmem:[%s0 + $0xb88] sm:$0xff]
    %v382 = vld [vmem:[%s0 + $0xb90] sm:$0xff]
    %v383 = vld [vmem:[%s0 + $0xb98] sm:$0xff]
    %v384 = vld [vmem:[%s0 + $0xba0] sm:$0xff]
    %v385 = vld [vmem:[%s0 + $0xba8] sm:$0xff]
    %v386 = vld [vmem:[%s0 + $0xbb0] sm:$0xff]
    %v387 = vld [vmem:[%s0 + $0xbb8] sm:$0xff]
    %v388 = vld [vmem:[%s0 + $0xbc0] sm:$0xff]
    %v389 = vld [vmem:[%s0 + $0xbc8] sm:$0xff]
    %v390 = vld [vmem:[%s0 + $0xbd0] sm:$0xff]
    %v391 = vld [vmem:[%s0 + $0xbd8] sm:$0xff]
    %v392 = vld [vmem:[%s0 + $0xbe0] sm:$0xff]
    %v393 = vld [vmem:[%s0 + $0xbe8] sm:$0xff]
    %v394 = vld [vmem:[%s0 + $0xbf0] sm:$0xff]
    %v395 = vld [vmem:[%s0 + $0xbf8] sm:$0xff]
    %v396 = vld [vmem:[%s0 + $0xc00] sm:$0xff]
    %v397 = vld [vmem:[%s0 + $0xc08] sm:$0xff]
    %v398 = vld [vmem:[%s0 + $0xc10] sm:$0xff]
    %v399 = vld [vmem:[%s0 + $0xc18] sm:$0xff]
    %v400 = vld [vmem:[%s0 + $0xc20] sm:$0xff]
    %v401 = vld [vmem:[%s0 + $0xc28] sm:$0xff]
    %v402 = vld [vmem:[%s0 + $0xc30] sm:$0xff]
    %v403 = vld [vmem:[%s0 + $0xc38] sm:$0xff]
    %v404 = vld [vmem:[%s0 + $0xc40] sm:$0xff]
    %v405 = vld [vmem:[%s0 + $0xc48] sm:$0xff]
    %v406 = vld [vmem:[%s0 + $0xc50] sm:$0xff]
    %v407 = vld [vmem:[%s0 + $0xc58] sm:$0xff]
    %v408 = vld [vmem:[%s0 + $0xc60] sm:$0xff]
    %v409 = vld [vmem:[%s0 + $0xc68] sm:$0xff]
    %v410 = vld [vmem:[%s0 + $0xc70] sm:$0xff]
    %v411 = vld [vmem:[%s0 + $0xc78] sm:$0xff]
    %v412 = vld [vmem:[%s0 + $0xc80] sm:$0xff]
    %v413 = vld [vmem:[%s0 + $0xc88] sm:$0xff]
    %v414 = vld [vmem:[%s0 + $0xc90] sm:$0xff]
    %v415 = vld [vmem:[%s0 + $0xc98] sm:$0xff]
    %v416 = vld [vmem:[%s0 + $0xca0] sm:$0xff]
    %v417 = vld [vmem:[%s0 + $0xca8] sm:$0xff]
    %v418 = vld [vmem:[%s0 + $0xcb0] sm:$0xff]
    %v419 = vld [vmem:[%s0 + $0xcb8] sm:$0xff]
    %v420 = vld [vmem:[%s0 + $0xcc0] sm:$0xff]
    %v421 = vld [vmem:[%s0 + $0xcc8] sm:$0xff]
    %v422 = vld [vmem:[%s0 + $0xcd0] sm:$0xff]
    %v423 = vld [vmem:[%s0 + $0xcd8] sm:$0xff]
    %v424 = vld [vmem:[%s0 + $0xce0] sm:$0xff]
    %v425 = vld [vmem:[%s0 + $0xce8] sm:$0xff]
    %v426 = vld [vmem:[%s0 + $0xcf0] sm:$0xff]
    %v427 = vld [vmem:[%s0 + $0xcf8] sm:$0xff]
    %v428 = vld [vmem:[%s0 + $0xd00] sm:$0xff]
    %v429 = vld [vmem:[%s0 + $0xd08] sm:$0xff]
    %v430 = vld [vmem:[%s0 + $0xd10] sm:$0xff]
    %v431 = vld [vmem:[%s0 + $0xd18] sm:$0xff]
    %v432 = vld [vmem:[%s0 + $0xd20] sm:$0xff]
    %v433 = vld [vmem:[%s0 + $0xd28] sm:$0xff]
    %v434 = vld [vmem:[%s0 + $0xd30] sm:$0xff]
    %v435 = vld [vmem:[%s0 + $0xd38] sm:$0xff]
    %v436 = vld [vmem:[%s0 + $0xd40] sm:$0xff]
    %v437 = vld [vmem:[%s0 + $0xd48] sm:$0xff]
    %v438 = vld [vmem:[%s0 + $0xd50] sm:$0xff]
    %v439 = vld [vmem:[%s0 + $0xd58] sm:$0xff]
    %v440 = vld [vmem:[%s0 + $0xd60] sm:$0xff]
    %v441 = vld [vmem:[%s0 + $0xd68] sm:$0xff]
    %v442 = vld [vmem:[%s0 + $0xd70] sm:$0xff]
    %v443 = vld [vmem:[%s0 + $0xd78] sm:$0xff]
    %v444 = vld [vmem:[%s0 + $0xd80] sm:$0xff]
    %v445 = vld [vmem:[%s0 + $0xd88] sm:$0xff]
    %v446 = vld [vmem:[%s0 + $0xd90] sm:$0xff]
    %v447 = vld [vmem:[%s0 + $0xd98] sm:$0xff]
    %v448 = vld [vmem:[%s0 + $0xda0] sm:$0xff]
    %v449 = vld [vmem:[%s0 + $0xda8] sm:$0xff]
    %v450 = vld [vmem:[%s0 + $0xdb0] sm:$0xff]
    %v451 = vld [vmem:[%s0 + $0xdb8] sm:$0xff]
    %v452 = vld [vmem:[%s0 + $0xdc0] sm:$0xff]
    %v453 = vld [vmem:[%s0 + $0xdc8] sm:$0xff]
    %v454 = vld [vmem:[%s0 + $0xdd0] sm:$0xff]
    %v455 = vld [vmem:[%s0 + $0xdd8] sm:$0xff]
    %v456 = vld [vmem:[%s0 + $0xde0] sm:$0xff]
    %v457 = vld [vmem:[%s0 + $0xde8] sm:$0xff]
    %v458 = vld [vmem:[%s0 + $0xdf0] sm:$0xff]
    %v459 = vld [vmem:[%s0 + $0xdf8] sm:$0xff]
    %v460 = vld [vmem:[%s0 + $0xe00] sm:$0xff]
    %v461 = vld [vmem:[%s0 + $0xe08] sm:$0xff]
    %v462 = vld [vmem:[%s0 + $0xe10] sm:$0xff]
    %v463 = vld [vmem:[%s0 + $0xe18] sm:$0xff]
    %v464 = vld [vmem:[%s0 + $0xe20] sm:$0xff]
    %v465 = vld [vmem:[%s0 + $0xe28] sm:$0xff]
    %v466 = vld [vmem:[%s0 + $0xe30] sm:$0xff]
    %v467 = vld [vmem:[%s0 + $0xe38] sm:$0xff]
    %v468 = vld [vmem:[%s0 + $0xe40] sm:$0xff]
    %v469 = vld [vmem:[%s0 + $0xe48] sm:$0xff]
    %v470 = vld [vmem:[%s0 + $0xe50] sm:$0xff]
    %v471 = vld [vmem:[%s0 + $0xe58] sm:$0xff]
    %v472 = vld [vmem:[%s0 + $0xe60] sm:$0xff]
    %v473 = vld [vmem:[%s0 + $0xe68] sm:$0xff]
    %v474 = vld [vmem:[%s0 + $0xe70] sm:$0xff]
    %v475 = vld [vmem:[%s0 + $0xe78] sm:$0xff]
    %v476 = vld [vmem:[%s0 + $0xe80] sm:$0xff]
    %v477 = vld [vmem:[%s0 + $0xe88] sm:$0xff]
    %v478 = vld [vmem:[%s0 + $0xe90] sm:$0xff]
    %v479 = vld [vmem:[%s0 + $0xe98] sm:$0xff]
    %v480 = vld [vmem:[%s0 + $0xea0] sm:$0xff]
    %v481 = vld [vmem:[%s0 + $0xea8] sm:$0xff]
    %v482 = vld [vmem:[%s0 + $0xeb0] sm:$0xff]
    %v483 = vld [vmem:[%s0 + $0xeb8] sm:$0xff]
    %v484 = vld [vmem:[%s0 + $0xec0] sm:$0xff]
    %v485 = vld [vmem:[%s0 + $0xec8] sm:$0xff]
    %v486 = vld [vmem:[%s0 + $0xed0] sm:$0xff]
    %v487 = vld [vmem:[%s0 + $0xed8] sm:$0xff]
    %v488 = vld [vmem:[%s0 + $0xee0] sm:$0xff]
    %v489 = vld [vmem:[%s0 + $0xee8] sm:$0xff]
    %v490 = vld [vmem:[%s0 + $0xef0] sm:$0xff]
    %v491 = vld [vmem:[%s0 + $0xef8] sm:$0xff]
    %v492 = vld [vmem:[%s0 + $0xf00] sm:$0xff]
    %v493 = vld [vmem:[%s0 + $0xf08] sm:$0xff]
    %v494 = vld [vmem:[%s0 + $0xf10] sm:$0xff]
    %v495 = vld [vmem:[%s0 + $0xf18] sm:$0xff]
    %v496 = vld [vmem:[%s0 + $0xf20] sm:$0xff]
    %v497 = vld [vmem:[%s0 + $0xf28] sm:$0xff]
    %v498 = vld [vmem:[%s0 + $0xf30] sm:$0xff]
    %v499 = vld [vmem:[%s0 + $0xf38] sm:$0xff]
    %v500 = vld [vmem:[%s0 + $0xf40] sm:$0xff]
    %v501 = vld [vmem:[%s0 + $0xf48] sm:$0xff]
    %v502 = vld [vmem:[%s0 + $0xf50] sm:$0xff]
    %v503 = vld [vmem:[%s0 + $0xf58] sm:$0xff]
    %v504 = vld [vmem:[%s0 + $0xf60] sm:$0xff]
    %v505 = vld [vmem:[%s0 + $0xf68] sm:$0xff]
    %v506 = vld [vmem:[%s0 + $0xf70] sm:$0xff]
    %v507 = vld [vmem:[%s0 + $0xf78] sm:$0xff]
    %v508 = vld [vmem:[%s0 + $0xf80] sm:$0xff]
    %v509 = vld [vmem:[%s0 + $0xf88] sm:$0xff]
    %v510 = vld [vmem:[%s0 + $0xf90] sm:$0xff]
    %v511 = vld [vmem:[%s0 + $0xf98] sm:$0xff]
    %v512 = vld [vmem:[%s0 + $0xfa0] sm:$0xff]
    %v513 = vld [vmem:[%s0 + $0xfa8] sm:$0xff]
    %v514 = vld [vmem:[%s0 + $0xfb0] sm:$0xff]
    %v515 = vld [vmem:[%s0 + $0xfb8] sm:$0xff]
    %v516 = vld [vmem:[%s0 + $0xfc0] sm:$0xff]
    %v517 = vld [vmem:[%s0 + $0xfc8] sm:$0xff]
    %v518 = vld [vmem:[%s0 + $0xfd0] sm:$0xff]
    %v519 = vld [vmem:[%s0 + $0xfd8] sm:$0xff]
    %v520 = vld [vmem:[%s0 + $0xfe0] sm:$0xff]
    %v521 = vld [vmem:[%s0 + $0xfe8] sm:$0xff]
    %v522 = vld [vmem:[%s0 + $0xff0] sm:$0xff]
    %v523 = vld [vmem:[%s0 + $0xff8] sm:$0xff]
    %vm524 = vcmask 400384
    %v525 = vsel %vm524, %v12, 0.0
    %526 = vadd.xlane.f32.xlu0 %v525
    %v527 = vpop.xlane.xlu0 %526
    %v528 = vsel %vm524, %v13, 0.0
    %529 = vadd.xlane.f32.xlu0 %v528
    %v530 = vpop.xlane.xlu0 %529
    %v531 = vsel %vm524, %v14, 0.0
    %532 = vadd.xlane.f32.xlu0 %v531
    %v533 = vpop.xlane.xlu0 %532
    %v534 = vsel %vm524, %v15, 0.0
    %535 = vadd.xlane.f32.xlu0 %v534
    %v536 = vpop.xlane.xlu0 %535
    %v537 = vsel %vm524, %v16, 0.0
    %538 = vadd.xlane.f32.xlu0 %v537
    %v539 = vpop.xlane.xlu0 %538
    %v540 = vsel %vm524, %v17, 0.0
    %541 = vadd.xlane.f32.xlu0 %v540
    %v542 = vpop.xlane.xlu0 %541
    %v543 = vsel %vm524, %v18, 0.0
    %544 = vadd.xlane.f32.xlu0 %v543
    %v545 = vpop.xlane.xlu0 %544
    %v546 = vsel %vm524, %v19, 0.0
    %547 = vadd.xlane.f32.xlu0 %v546
    %v548 = vpop.xlane.xlu0 %547
    %v549 = vsel %vm524, %v20, 0.0
    %550 = vadd.xlane.f32.xlu0 %v549
    %v551 = vpop.xlane.xlu0 %550
    %v552 = vsel %vm524, %v21, 0.0
    %553 = vadd.xlane.f32.xlu0 %v552
    %v554 = vpop.xlane.xlu0 %553
    %v555 = vsel %vm524, %v22, 0.0
    %556 = vadd.xlane.f32.xlu0 %v555
    %v557 = vpop.xlane.xlu0 %556
    %v558 = vsel %vm524, %v23, 0.0
    %559 = vadd.xlane.f32.xlu0 %v558
    %v560 = vpop.xlane.xlu0 %559
    %v561 = vsel %vm524, %v24, 0.0
    %562 = vadd.xlane.f32.xlu0 %v561
    %v563 = vpop.xlane.xlu0 %562
    %v564 = vsel %vm524, %v25, 0.0
    %565 = vadd.xlane.f32.xlu0 %v564
    %v566 = vpop.xlane.xlu0 %565
    %v567 = vsel %vm524, %v26, 0.0
    %568 = vadd.xlane.f32.xlu0 %v567
    %v569 = vpop.xlane.xlu0 %568
    %v570 = vsel %vm524, %v27, 0.0
    %571 = vadd.xlane.f32.xlu0 %v570
    %v572 = vpop.xlane.xlu0 %571
    %v573 = vsel %vm524, %v28, 0.0
    %574 = vadd.xlane.f32.xlu0 %v573
    %v575 = vpop.xlane.xlu0 %574
    %v576 = vsel %vm524, %v29, 0.0
    %577 = vadd.xlane.f32.xlu0 %v576
    %v578 = vpop.xlane.xlu0 %577
    %v579 = vsel %vm524, %v30, 0.0
    %580 = vadd.xlane.f32.xlu0 %v579
    %v581 = vpop.xlane.xlu0 %580
    %v582 = vsel %vm524, %v31, 0.0
    %583 = vadd.xlane.f32.xlu0 %v582
    %v584 = vpop.xlane.xlu0 %583
    %v585 = vsel %vm524, %v32, 0.0
    %586 = vadd.xlane.f32.xlu0 %v585
    %v587 = vpop.xlane.xlu0 %586
    %v588 = vsel %vm524, %v33, 0.0
    %589 = vadd.xlane.f32.xlu0 %v588
    %v590 = vpop.xlane.xlu0 %589
    %v591 = vsel %vm524, %v34, 0.0
    %592 = vadd.xlane.f32.xlu0 %v591
    %v593 = vpop.xlane.xlu0 %592
    %v594 = vsel %vm524, %v35, 0.0
    %595 = vadd.xlane.f32.xlu0 %v594
    %v596 = vpop.xlane.xlu0 %595
    %v597 = vsel %vm524, %v36, 0.0
    %598 = vadd.xlane.f32.xlu0 %v597
    %v599 = vpop.xlane.xlu0 %598
    %v600 = vsel %vm524, %v37, 0.0
    %601 = vadd.xlane.f32.xlu0 %v600
    %v602 = vpop.xlane.xlu0 %601
    %v603 = vsel %vm524, %v38, 0.0
    %604 = vadd.xlane.f32.xlu0 %v603
    %v605 = vpop.xlane.xlu0 %604
    %v606 = vsel %vm524, %v39, 0.0
    %607 = vadd.xlane.f32.xlu0 %v606
    %v608 = vpop.xlane.xlu0 %607
    %v609 = vsel %vm524, %v40, 0.0
    %610 = vadd.xlane.f32.xlu0 %v609
    %v611 = vpop.xlane.xlu0 %610
    %v612 = vsel %vm524, %v41, 0.0
    %613 = vadd.xlane.f32.xlu0 %v612
    %v614 = vpop.xlane.xlu0 %613
    %v615 = vsel %vm524, %v42, 0.0
    %616 = vadd.xlane.f32.xlu0 %v615
    %v617 = vpop.xlane.xlu0 %616
    %v618 = vsel %vm524, %v43, 0.0
    %619 = vadd.xlane.f32.xlu0 %v618
    %v620 = vpop.xlane.xlu0 %619
    %v621 = vsel %vm524, %v44, 0.0
    %622 = vadd.xlane.f32.xlu0 %v621
    %v623 = vpop.xlane.xlu0 %622
    %v624 = vsel %vm524, %v45, 0.0
    %625 = vadd.xlane.f32.xlu0 %v624
    %v626 = vpop.xlane.xlu0 %625
    %v627 = vsel %vm524, %v46, 0.0
    %628 = vadd.xlane.f32.xlu0 %v627
    %v629 = vpop.xlane.xlu0 %628
    %v630 = vsel %vm524, %v47, 0.0
    %631 = vadd.xlane.f32.xlu0 %v630
    %v632 = vpop.xlane.xlu0 %631
    %v633 = vsel %vm524, %v48, 0.0
    %634 = vadd.xlane.f32.xlu0 %v633
    %v635 = vpop.xlane.xlu0 %634
    %v636 = vsel %vm524, %v49, 0.0
    %637 = vadd.xlane.f32.xlu0 %v636
    %v638 = vpop.xlane.xlu0 %637
    %v639 = vsel %vm524, %v50, 0.0
    %640 = vadd.xlane.f32.xlu0 %v639
    %v641 = vpop.xlane.xlu0 %640
    %v642 = vsel %vm524, %v51, 0.0
    %643 = vadd.xlane.f32.xlu0 %v642
    %v644 = vpop.xlane.xlu0 %643
    %v645 = vsel %vm524, %v52, 0.0
    %646 = vadd.xlane.f32.xlu0 %v645
    %v647 = vpop.xlane.xlu0 %646
    %v648 = vsel %vm524, %v53, 0.0
    %649 = vadd.xlane.f32.xlu0 %v648
    %v650 = vpop.xlane.xlu0 %649
    %v651 = vsel %vm524, %v54, 0.0
    %652 = vadd.xlane.f32.xlu0 %v651
    %v653 = vpop.xlane.xlu0 %652
    %v654 = vsel %vm524, %v55, 0.0
    %655 = vadd.xlane.f32.xlu0 %v654
    %v656 = vpop.xlane.xlu0 %655
    %v657 = vsel %vm524, %v56, 0.0
    %658 = vadd.xlane.f32.xlu0 %v657
    %v659 = vpop.xlane.xlu0 %658
    %v660 = vsel %vm524, %v57, 0.0
    %661 = vadd.xlane.f32.xlu0 %v660
    %v662 = vpop.xlane.xlu0 %661
    %v663 = vsel %vm524, %v58, 0.0
    %664 = vadd.xlane.f32.xlu0 %v663
    %v665 = vpop.xlane.xlu0 %664
    %v666 = vsel %vm524, %v59, 0.0
    %667 = vadd.xlane.f32.xlu0 %v666
    %v668 = vpop.xlane.xlu0 %667
    %v669 = vsel %vm524, %v60, 0.0
    %670 = vadd.xlane.f32.xlu0 %v669
    %v671 = vpop.xlane.xlu0 %670
    %v672 = vsel %vm524, %v61, 0.0
    %673 = vadd.xlane.f32.xlu0 %v672
    %v674 = vpop.xlane.xlu0 %673
    %v675 = vsel %vm524, %v62, 0.0
    %676 = vadd.xlane.f32.xlu0 %v675
    %v677 = vpop.xlane.xlu0 %676
    %v678 = vsel %vm524, %v63, 0.0
    %679 = vadd.xlane.f32.xlu0 %v678
    %v680 = vpop.xlane.xlu0 %679
    %v681 = vsel %vm524, %v64, 0.0
    %682 = vadd.xlane.f32.xlu0 %v681
    %v683 = vpop.xlane.xlu0 %682
    %v684 = vsel %vm524, %v65, 0.0
    %685 = vadd.xlane.f32.xlu0 %v684
    %v686 = vpop.xlane.xlu0 %685
    %v687 = vsel %vm524, %v66, 0.0
    %688 = vadd.xlane.f32.xlu0 %v687
    %v689 = vpop.xlane.xlu0 %688
    %v690 = vsel %vm524, %v67, 0.0
    %691 = vadd.xlane.f32.xlu0 %v690
    %v692 = vpop.xlane.xlu0 %691
    %v693 = vsel %vm524, %v68, 0.0
    %694 = vadd.xlane.f32.xlu0 %v693
    %v695 = vpop.xlane.xlu0 %694
    %v696 = vsel %vm524, %v69, 0.0
    %697 = vadd.xlane.f32.xlu0 %v696
    %v698 = vpop.xlane.xlu0 %697
    %v699 = vsel %vm524, %v70, 0.0
    %700 = vadd.xlane.f32.xlu0 %v699
    %v701 = vpop.xlane.xlu0 %700
    %v702 = vsel %vm524, %v71, 0.0
    %703 = vadd.xlane.f32.xlu0 %v702
    %v704 = vpop.xlane.xlu0 %703
    %v705 = vsel %vm524, %v72, 0.0
    %706 = vadd.xlane.f32.xlu0 %v705
    %v707 = vpop.xlane.xlu0 %706
    %v708 = vsel %vm524, %v73, 0.0
    %709 = vadd.xlane.f32.xlu0 %v708
    %v710 = vpop.xlane.xlu0 %709
    %v711 = vsel %vm524, %v74, 0.0
    %712 = vadd.xlane.f32.xlu0 %v711
    %v713 = vpop.xlane.xlu0 %712
    %v714 = vsel %vm524, %v75, 0.0
    %715 = vadd.xlane.f32.xlu0 %v714
    %v716 = vpop.xlane.xlu0 %715
    %v717 = vsel %vm524, %v76, 0.0
    %718 = vadd.xlane.f32.xlu0 %v717
    %v719 = vpop.xlane.xlu0 %718
    %v720 = vsel %vm524, %v77, 0.0
    %721 = vadd.xlane.f32.xlu0 %v720
    %v722 = vpop.xlane.xlu0 %721
    %v723 = vsel %vm524, %v78, 0.0
    %724 = vadd.xlane.f32.xlu0 %v723
    %v725 = vpop.xlane.xlu0 %724
    %v726 = vsel %vm524, %v79, 0.0
    %727 = vadd.xlane.f32.xlu0 %v726
    %v728 = vpop.xlane.xlu0 %727
    %v729 = vsel %vm524, %v80, 0.0
    %730 = vadd.xlane.f32.xlu0 %v729
    %v731 = vpop.xlane.xlu0 %730
    %v732 = vsel %vm524, %v81, 0.0
    %733 = vadd.xlane.f32.xlu0 %v732
    %v734 = vpop.xlane.xlu0 %733
    %v735 = vsel %vm524, %v82, 0.0
    %736 = vadd.xlane.f32.xlu0 %v735
    %v737 = vpop.xlane.xlu0 %736
    %v738 = vsel %vm524, %v83, 0.0
    %739 = vadd.xlane.f32.xlu0 %v738
    %v740 = vpop.xlane.xlu0 %739
    %v741 = vsel %vm524, %v84, 0.0
    %742 = vadd.xlane.f32.xlu0 %v741
    %v743 = vpop.xlane.xlu0 %742
    %v744 = vsel %vm524, %v85, 0.0
    %745 = vadd.xlane.f32.xlu0 %v744
    %v746 = vpop.xlane.xlu0 %745
    %v747 = vsel %vm524, %v86, 0.0
    %748 = vadd.xlane.f32.xlu0 %v747
    %v749 = vpop.xlane.xlu0 %748
    %v750 = vsel %vm524, %v87, 0.0
    %751 = vadd.xlane.f32.xlu0 %v750
    %v752 = vpop.xlane.xlu0 %751
    %v753 = vsel %vm524, %v88, 0.0
    %754 = vadd.xlane.f32.xlu0 %v753
    %v755 = vpop.xlane.xlu0 %754
    %v756 = vsel %vm524, %v89, 0.0
    %757 = vadd.xlane.f32.xlu0 %v756
    %v758 = vpop.xlane.xlu0 %757
    %v759 = vsel %vm524, %v90, 0.0
    %760 = vadd.xlane.f32.xlu0 %v759
    %v761 = vpop.xlane.xlu0 %760
    %v762 = vsel %vm524, %v91, 0.0
    %763 = vadd.xlane.f32.xlu0 %v762
    %v764 = vpop.xlane.xlu0 %763
    %v765 = vsel %vm524, %v92, 0.0
    %766 = vadd.xlane.f32.xlu0 %v765
    %v767 = vpop.xlane.xlu0 %766
    %v768 = vsel %vm524, %v93, 0.0
    %769 = vadd.xlane.f32.xlu0 %v768
    %v770 = vpop.xlane.xlu0 %769
    %v771 = vsel %vm524, %v94, 0.0
    %772 = vadd.xlane.f32.xlu0 %v771
    %v773 = vpop.xlane.xlu0 %772
    %v774 = vsel %vm524, %v95, 0.0
    %775 = vadd.xlane.f32.xlu0 %v774
    %v776 = vpop.xlane.xlu0 %775
    %v777 = vsel %vm524, %v96, 0.0
    %778 = vadd.xlane.f32.xlu0 %v777
    %v779 = vpop.xlane.xlu0 %778
    %v780 = vsel %vm524, %v97, 0.0
    %781 = vadd.xlane.f32.xlu0 %v780
    %v782 = vpop.xlane.xlu0 %781
    %v783 = vsel %vm524, %v98, 0.0
    %784 = vadd.xlane.f32.xlu0 %v783
    %v785 = vpop.xlane.xlu0 %784
    %v786 = vsel %vm524, %v99, 0.0
    %787 = vadd.xlane.f32.xlu0 %v786
    %v788 = vpop.xlane.xlu0 %787
    %v789 = vsel %vm524, %v100, 0.0
    %790 = vadd.xlane.f32.xlu0 %v789
    %v791 = vpop.xlane.xlu0 %790
    %v792 = vsel %vm524, %v101, 0.0
    %793 = vadd.xlane.f32.xlu0 %v792
    %v794 = vpop.xlane.xlu0 %793
    %v795 = vsel %vm524, %v102, 0.0
    %796 = vadd.xlane.f32.xlu0 %v795
    %v797 = vpop.xlane.xlu0 %796
    %v798 = vsel %vm524, %v103, 0.0
    %799 = vadd.xlane.f32.xlu0 %v798
    %v800 = vpop.xlane.xlu0 %799
    %v801 = vsel %vm524, %v104, 0.0
    %802 = vadd.xlane.f32.xlu0 %v801
    %v803 = vpop.xlane.xlu0 %802
    %v804 = vsel %vm524, %v105, 0.0
    %805 = vadd.xlane.f32.xlu0 %v804
    %v806 = vpop.xlane.xlu0 %805
    %v807 = vsel %vm524, %v106, 0.0
    %808 = vadd.xlane.f32.xlu0 %v807
    %v809 = vpop.xlane.xlu0 %808
    %v810 = vsel %vm524, %v107, 0.0
    %811 = vadd.xlane.f32.xlu0 %v810
    %v812 = vpop.xlane.xlu0 %811
    %v813 = vsel %vm524, %v108, 0.0
    %814 = vadd.xlane.f32.xlu0 %v813
    %v815 = vpop.xlane.xlu0 %814
    %v816 = vsel %vm524, %v109, 0.0
    %817 = vadd.xlane.f32.xlu0 %v816
    %v818 = vpop.xlane.xlu0 %817
    %v819 = vsel %vm524, %v110, 0.0
    %820 = vadd.xlane.f32.xlu0 %v819
    %v821 = vpop.xlane.xlu0 %820
    %v822 = vsel %vm524, %v111, 0.0
    %823 = vadd.xlane.f32.xlu0 %v822
    %v824 = vpop.xlane.xlu0 %823
    %v825 = vsel %vm524, %v112, 0.0
    %826 = vadd.xlane.f32.xlu0 %v825
    %v827 = vpop.xlane.xlu0 %826
    %v828 = vsel %vm524, %v113, 0.0
    %829 = vadd.xlane.f32.xlu0 %v828
    %v830 = vpop.xlane.xlu0 %829
    %v831 = vsel %vm524, %v114, 0.0
    %832 = vadd.xlane.f32.xlu0 %v831
    %v833 = vpop.xlane.xlu0 %832
    %v834 = vsel %vm524, %v115, 0.0
    %835 = vadd.xlane.f32.xlu0 %v834
    %v836 = vpop.xlane.xlu0 %835
    %v837 = vsel %vm524, %v116, 0.0
    %838 = vadd.xlane.f32.xlu0 %v837
    %v839 = vpop.xlane.xlu0 %838
    %v840 = vsel %vm524, %v117, 0.0
    %841 = vadd.xlane.f32.xlu0 %v840
    %v842 = vpop.xlane.xlu0 %841
    %v843 = vsel %vm524, %v118, 0.0
    %844 = vadd.xlane.f32.xlu0 %v843
    %v845 = vpop.xlane.xlu0 %844
    %v846 = vsel %vm524, %v119, 0.0
    %847 = vadd.xlane.f32.xlu0 %v846
    %v848 = vpop.xlane.xlu0 %847
    %v849 = vsel %vm524, %v120, 0.0
    %850 = vadd.xlane.f32.xlu0 %v849
    %v851 = vpop.xlane.xlu0 %850
    %v852 = vsel %vm524, %v121, 0.0
    %853 = vadd.xlane.f32.xlu0 %v852
    %v854 = vpop.xlane.xlu0 %853
    %v855 = vsel %vm524, %v122, 0.0
    %856 = vadd.xlane.f32.xlu0 %v855
    %v857 = vpop.xlane.xlu0 %856
    %v858 = vsel %vm524, %v123, 0.0
    %859 = vadd.xlane.f32.xlu0 %v858
    %v860 = vpop.xlane.xlu0 %859
    %v861 = vsel %vm524, %v124, 0.0
    %862 = vadd.xlane.f32.xlu0 %v861
    %v863 = vpop.xlane.xlu0 %862
    %v864 = vsel %vm524, %v125, 0.0
    %865 = vadd.xlane.f32.xlu0 %v864
    %v866 = vpop.xlane.xlu0 %865
    %v867 = vsel %vm524, %v126, 0.0
    %868 = vadd.xlane.f32.xlu0 %v867
    %v869 = vpop.xlane.xlu0 %868
    %v870 = vsel %vm524, %v127, 0.0
    %871 = vadd.xlane.f32.xlu0 %v870
    %v872 = vpop.xlane.xlu0 %871
    %v873 = vsel %vm524, %v128, 0.0
    %874 = vadd.xlane.f32.xlu0 %v873
    %v875 = vpop.xlane.xlu0 %874
    %v876 = vsel %vm524, %v129, 0.0
    %877 = vadd.xlane.f32.xlu0 %v876
    %v878 = vpop.xlane.xlu0 %877
    %v879 = vsel %vm524, %v130, 0.0
    %880 = vadd.xlane.f32.xlu0 %v879
    %v881 = vpop.xlane.xlu0 %880
    %v882 = vsel %vm524, %v131, 0.0
    %883 = vadd.xlane.f32.xlu0 %v882
    %v884 = vpop.xlane.xlu0 %883
    %v885 = vsel %vm524, %v132, 0.0
    %886 = vadd.xlane.f32.xlu0 %v885
    %v887 = vpop.xlane.xlu0 %886
    %v888 = vsel %vm524, %v133, 0.0
    %889 = vadd.xlane.f32.xlu0 %v888
    %v890 = vpop.xlane.xlu0 %889
    %v891 = vsel %vm524, %v134, 0.0
    %892 = vadd.xlane.f32.xlu0 %v891
    %v893 = vpop.xlane.xlu0 %892
    %v894 = vsel %vm524, %v135, 0.0
    %895 = vadd.xlane.f32.xlu0 %v894
    %v896 = vpop.xlane.xlu0 %895
    %v897 = vsel %vm524, %v136, 0.0
    %898 = vadd.xlane.f32.xlu0 %v897
    %v899 = vpop.xlane.xlu0 %898
    %v900 = vsel %vm524, %v137, 0.0
    %901 = vadd.xlane.f32.xlu0 %v900
    %v902 = vpop.xlane.xlu0 %901
    %v903 = vsel %vm524, %v138, 0.0
    %904 = vadd.xlane.f32.xlu0 %v903
    %v905 = vpop.xlane.xlu0 %904
    %v906 = vsel %vm524, %v139, 0.0
    %907 = vadd.xlane.f32.xlu0 %v906
    %v908 = vpop.xlane.xlu0 %907
    %v909 = vsel %vm524, %v140, 0.0
    %910 = vadd.xlane.f32.xlu0 %v909
    %v911 = vpop.xlane.xlu0 %910
    %v912 = vsel %vm524, %v141, 0.0
    %913 = vadd.xlane.f32.xlu0 %v912
    %v914 = vpop.xlane.xlu0 %913
    %v915 = vsel %vm524, %v142, 0.0
    %916 = vadd.xlane.f32.xlu0 %v915
    %v917 = vpop.xlane.xlu0 %916
    %v918 = vsel %vm524, %v143, 0.0
    %919 = vadd.xlane.f32.xlu0 %v918
    %v920 = vpop.xlane.xlu0 %919
    %v921 = vsel %vm524, %v144, 0.0
    %922 = vadd.xlane.f32.xlu0 %v921
    %v923 = vpop.xlane.xlu0 %922
    %v924 = vsel %vm524, %v145, 0.0
    %925 = vadd.xlane.f32.xlu0 %v924
    %v926 = vpop.xlane.xlu0 %925
    %v927 = vsel %vm524, %v146, 0.0
    %928 = vadd.xlane.f32.xlu0 %v927
    %v929 = vpop.xlane.xlu0 %928
    %v930 = vsel %vm524, %v147, 0.0
    %931 = vadd.xlane.f32.xlu0 %v930
    %v932 = vpop.xlane.xlu0 %931
    %v933 = vsel %vm524, %v148, 0.0
    %934 = vadd.xlane.f32.xlu0 %v933
    %v935 = vpop.xlane.xlu0 %934
    %v936 = vsel %vm524, %v149, 0.0
    %937 = vadd.xlane.f32.xlu0 %v936
    %v938 = vpop.xlane.xlu0 %937
    %v939 = vsel %vm524, %v150, 0.0
    %940 = vadd.xlane.f32.xlu0 %v939
    %v941 = vpop.xlane.xlu0 %940
    %v942 = vsel %vm524, %v151, 0.0
    %943 = vadd.xlane.f32.xlu0 %v942
    %v944 = vpop.xlane.xlu0 %943
    %v945 = vsel %vm524, %v152, 0.0
    %946 = vadd.xlane.f32.xlu0 %v945
    %v947 = vpop.xlane.xlu0 %946
    %v948 = vsel %vm524, %v153, 0.0
    %949 = vadd.xlane.f32.xlu0 %v948
    %v950 = vpop.xlane.xlu0 %949
    %v951 = vsel %vm524, %v154, 0.0
    %952 = vadd.xlane.f32.xlu0 %v951
    %v953 = vpop.xlane.xlu0 %952
    %v954 = vsel %vm524, %v155, 0.0
    %955 = vadd.xlane.f32.xlu0 %v954
    %v956 = vpop.xlane.xlu0 %955
    %v957 = vsel %vm524, %v156, 0.0
    %958 = vadd.xlane.f32.xlu0 %v957
    %v959 = vpop.xlane.xlu0 %958
    %v960 = vsel %vm524, %v157, 0.0
    %961 = vadd.xlane.f32.xlu0 %v960
    %v962 = vpop.xlane.xlu0 %961
    %v963 = vsel %vm524, %v158, 0.0
    %964 = vadd.xlane.f32.xlu0 %v963
    %v965 = vpop.xlane.xlu0 %964
    %v966 = vsel %vm524, %v159, 0.0
    %967 = vadd.xlane.f32.xlu0 %v966
    %v968 = vpop.xlane.xlu0 %967
    %v969 = vsel %vm524, %v160, 0.0
    %970 = vadd.xlane.f32.xlu0 %v969
    %v971 = vpop.xlane.xlu0 %970
    %v972 = vsel %vm524, %v161, 0.0
    %973 = vadd.xlane.f32.xlu0 %v972
    %v974 = vpop.xlane.xlu0 %973
    %v975 = vsel %vm524, %v162, 0.0
    %976 = vadd.xlane.f32.xlu0 %v975
    %v977 = vpop.xlane.xlu0 %976
    %v978 = vsel %vm524, %v163, 0.0
    %979 = vadd.xlane.f32.xlu0 %v978
    %v980 = vpop.xlane.xlu0 %979
    %v981 = vsel %vm524, %v164, 0.0
    %982 = vadd.xlane.f32.xlu0 %v981
    %v983 = vpop.xlane.xlu0 %982
    %v984 = vsel %vm524, %v165, 0.0
    %985 = vadd.xlane.f32.xlu0 %v984
    %v986 = vpop.xlane.xlu0 %985
    %v987 = vsel %vm524, %v166, 0.0
    %988 = vadd.xlane.f32.xlu0 %v987
    %v989 = vpop.xlane.xlu0 %988
    %v990 = vsel %vm524, %v167, 0.0
    %991 = vadd.xlane.f32.xlu0 %v990
    %v992 = vpop.xlane.xlu0 %991
    %v993 = vsel %vm524, %v168, 0.0
    %994 = vadd.xlane.f32.xlu0 %v993
    %v995 = vpop.xlane.xlu0 %994
    %v996 = vsel %vm524, %v169, 0.0
    %997 = vadd.xlane.f32.xlu0 %v996
    %v998 = vpop.xlane.xlu0 %997
    %v999 = vsel %vm524, %v170, 0.0
    %1000 = vadd.xlane.f32.xlu0 %v999
    %v1001 = vpop.xlane.xlu0 %1000
    %v1002 = vsel %vm524, %v171, 0.0
    %1003 = vadd.xlane.f32.xlu0 %v1002
    %v1004 = vpop.xlane.xlu0 %1003
    %v1005 = vsel %vm524, %v172, 0.0
    %1006 = vadd.xlane.f32.xlu0 %v1005
    %v1007 = vpop.xlane.xlu0 %1006
    %v1008 = vsel %vm524, %v173, 0.0
    %1009 = vadd.xlane.f32.xlu0 %v1008
    %v1010 = vpop.xlane.xlu0 %1009
    %v1011 = vsel %vm524, %v174, 0.0
    %1012 = vadd.xlane.f32.xlu0 %v1011
    %v1013 = vpop.xlane.xlu0 %1012
    %v1014 = vsel %vm524, %v175, 0.0
    %1015 = vadd.xlane.f32.xlu0 %v1014
    %v1016 = vpop.xlane.xlu0 %1015
    %v1017 = vsel %vm524, %v176, 0.0
    %1018 = vadd.xlane.f32.xlu0 %v1017
    %v1019 = vpop.xlane.xlu0 %1018
    %v1020 = vsel %vm524, %v177, 0.0
    %1021 = vadd.xlane.f32.xlu0 %v1020
    %v1022 = vpop.xlane.xlu0 %1021
    %v1023 = vsel %vm524, %v178, 0.0
    %1024 = vadd.xlane.f32.xlu0 %v1023
    %v1025 = vpop.xlane.xlu0 %1024
    %v1026 = vsel %vm524, %v179, 0.0
    %1027 = vadd.xlane.f32.xlu0 %v1026
    %v1028 = vpop.xlane.xlu0 %1027
    %v1029 = vsel %vm524, %v180, 0.0
    %1030 = vadd.xlane.f32.xlu0 %v1029
    %v1031 = vpop.xlane.xlu0 %1030
    %v1032 = vsel %vm524, %v181, 0.0
    %1033 = vadd.xlane.f32.xlu0 %v1032
    %v1034 = vpop.xlane.xlu0 %1033
    %v1035 = vsel %vm524, %v182, 0.0
    %1036 = vadd.xlane.f32.xlu0 %v1035
    %v1037 = vpop.xlane.xlu0 %1036
    %v1038 = vsel %vm524, %v183, 0.0
    %1039 = vadd.xlane.f32.xlu0 %v1038
    %v1040 = vpop.xlane.xlu0 %1039
    %v1041 = vsel %vm524, %v184, 0.0
    %1042 = vadd.xlane.f32.xlu0 %v1041
    %v1043 = vpop.xlane.xlu0 %1042
    %v1044 = vsel %vm524, %v185, 0.0
    %1045 = vadd.xlane.f32.xlu0 %v1044
    %v1046 = vpop.xlane.xlu0 %1045
    %v1047 = vsel %vm524, %v186, 0.0
    %1048 = vadd.xlane.f32.xlu0 %v1047
    %v1049 = vpop.xlane.xlu0 %1048
    %v1050 = vsel %vm524, %v187, 0.0
    %1051 = vadd.xlane.f32.xlu0 %v1050
    %v1052 = vpop.xlane.xlu0 %1051
    %v1053 = vsel %vm524, %v188, 0.0
    %1054 = vadd.xlane.f32.xlu0 %v1053
    %v1055 = vpop.xlane.xlu0 %1054
    %v1056 = vsel %vm524, %v189, 0.0
    %1057 = vadd.xlane.f32.xlu0 %v1056
    %v1058 = vpop.xlane.xlu0 %1057
    %v1059 = vsel %vm524, %v190, 0.0
    %1060 = vadd.xlane.f32.xlu0 %v1059
    %v1061 = vpop.xlane.xlu0 %1060
    %v1062 = vsel %vm524, %v191, 0.0
    %1063 = vadd.xlane.f32.xlu0 %v1062
    %v1064 = vpop.xlane.xlu0 %1063
    %v1065 = vsel %vm524, %v192, 0.0
    %1066 = vadd.xlane.f32.xlu0 %v1065
    %v1067 = vpop.xlane.xlu0 %1066
    %v1068 = vsel %vm524, %v193, 0.0
    %1069 = vadd.xlane.f32.xlu0 %v1068
    %v1070 = vpop.xlane.xlu0 %1069
    %v1071 = vsel %vm524, %v194, 0.0
    %1072 = vadd.xlane.f32.xlu0 %v1071
    %v1073 = vpop.xlane.xlu0 %1072
    %v1074 = vsel %vm524, %v195, 0.0
    %1075 = vadd.xlane.f32.xlu0 %v1074
    %v1076 = vpop.xlane.xlu0 %1075
    %v1077 = vsel %vm524, %v196, 0.0
    %1078 = vadd.xlane.f32.xlu0 %v1077
    %v1079 = vpop.xlane.xlu0 %1078
    %v1080 = vsel %vm524, %v197, 0.0
    %1081 = vadd.xlane.f32.xlu0 %v1080
    %v1082 = vpop.xlane.xlu0 %1081
    %v1083 = vsel %vm524, %v198, 0.0
    %1084 = vadd.xlane.f32.xlu0 %v1083
    %v1085 = vpop.xlane.xlu0 %1084
    %v1086 = vsel %vm524, %v199, 0.0
    %1087 = vadd.xlane.f32.xlu0 %v1086
    %v1088 = vpop.xlane.xlu0 %1087
    %v1089 = vsel %vm524, %v200, 0.0
    %1090 = vadd.xlane.f32.xlu0 %v1089
    %v1091 = vpop.xlane.xlu0 %1090
    %v1092 = vsel %vm524, %v201, 0.0
    %1093 = vadd.xlane.f32.xlu0 %v1092
    %v1094 = vpop.xlane.xlu0 %1093
    %v1095 = vsel %vm524, %v202, 0.0
    %1096 = vadd.xlane.f32.xlu0 %v1095
    %v1097 = vpop.xlane.xlu0 %1096
    %v1098 = vsel %vm524, %v203, 0.0
    %1099 = vadd.xlane.f32.xlu0 %v1098
    %v1100 = vpop.xlane.xlu0 %1099
    %v1101 = vsel %vm524, %v204, 0.0
    %1102 = vadd.xlane.f32.xlu0 %v1101
    %v1103 = vpop.xlane.xlu0 %1102
    %v1104 = vsel %vm524, %v205, 0.0
    %1105 = vadd.xlane.f32.xlu0 %v1104
    %v1106 = vpop.xlane.xlu0 %1105
    %v1107 = vsel %vm524, %v206, 0.0
    %1108 = vadd.xlane.f32.xlu0 %v1107
    %v1109 = vpop.xlane.xlu0 %1108
    %v1110 = vsel %vm524, %v207, 0.0
    %1111 = vadd.xlane.f32.xlu0 %v1110
    %v1112 = vpop.xlane.xlu0 %1111
    %v1113 = vsel %vm524, %v208, 0.0
    %1114 = vadd.xlane.f32.xlu0 %v1113
    %v1115 = vpop.xlane.xlu0 %1114
    %v1116 = vsel %vm524, %v209, 0.0
    %1117 = vadd.xlane.f32.xlu0 %v1116
    %v1118 = vpop.xlane.xlu0 %1117
    %v1119 = vsel %vm524, %v210, 0.0
    %1120 = vadd.xlane.f32.xlu0 %v1119
    %v1121 = vpop.xlane.xlu0 %1120
    %v1122 = vsel %vm524, %v211, 0.0
    %1123 = vadd.xlane.f32.xlu0 %v1122
    %v1124 = vpop.xlane.xlu0 %1123
    %v1125 = vsel %vm524, %v212, 0.0
    %1126 = vadd.xlane.f32.xlu0 %v1125
    %v1127 = vpop.xlane.xlu0 %1126
    %v1128 = vsel %vm524, %v213, 0.0
    %1129 = vadd.xlane.f32.xlu0 %v1128
    %v1130 = vpop.xlane.xlu0 %1129
    %v1131 = vsel %vm524, %v214, 0.0
    %1132 = vadd.xlane.f32.xlu0 %v1131
    %v1133 = vpop.xlane.xlu0 %1132
    %v1134 = vsel %vm524, %v215, 0.0
    %1135 = vadd.xlane.f32.xlu0 %v1134
    %v1136 = vpop.xlane.xlu0 %1135
    %v1137 = vsel %vm524, %v216, 0.0
    %1138 = vadd.xlane.f32.xlu0 %v1137
    %v1139 = vpop.xlane.xlu0 %1138
    %v1140 = vsel %vm524, %v217, 0.0
    %1141 = vadd.xlane.f32.xlu0 %v1140
    %v1142 = vpop.xlane.xlu0 %1141
    %v1143 = vsel %vm524, %v218, 0.0
    %1144 = vadd.xlane.f32.xlu0 %v1143
    %v1145 = vpop.xlane.xlu0 %1144
    %v1146 = vsel %vm524, %v219, 0.0
    %1147 = vadd.xlane.f32.xlu0 %v1146
    %v1148 = vpop.xlane.xlu0 %1147
    %v1149 = vsel %vm524, %v220, 0.0
    %1150 = vadd.xlane.f32.xlu0 %v1149
    %v1151 = vpop.xlane.xlu0 %1150
    %v1152 = vsel %vm524, %v221, 0.0
    %1153 = vadd.xlane.f32.xlu0 %v1152
    %v1154 = vpop.xlane.xlu0 %1153
    %v1155 = vsel %vm524, %v222, 0.0
    %1156 = vadd.xlane.f32.xlu0 %v1155
    %v1157 = vpop.xlane.xlu0 %1156
    %v1158 = vsel %vm524, %v223, 0.0
    %1159 = vadd.xlane.f32.xlu0 %v1158
    %v1160 = vpop.xlane.xlu0 %1159
    %v1161 = vsel %vm524, %v224, 0.0
    %1162 = vadd.xlane.f32.xlu0 %v1161
    %v1163 = vpop.xlane.xlu0 %1162
    %v1164 = vsel %vm524, %v225, 0.0
    %1165 = vadd.xlane.f32.xlu0 %v1164
    %v1166 = vpop.xlane.xlu0 %1165
    %v1167 = vsel %vm524, %v226, 0.0
    %1168 = vadd.xlane.f32.xlu0 %v1167
    %v1169 = vpop.xlane.xlu0 %1168
    %v1170 = vsel %vm524, %v227, 0.0
    %1171 = vadd.xlane.f32.xlu0 %v1170
    %v1172 = vpop.xlane.xlu0 %1171
    %v1173 = vsel %vm524, %v228, 0.0
    %1174 = vadd.xlane.f32.xlu0 %v1173
    %v1175 = vpop.xlane.xlu0 %1174
    %v1176 = vsel %vm524, %v229, 0.0
    %1177 = vadd.xlane.f32.xlu0 %v1176
    %v1178 = vpop.xlane.xlu0 %1177
    %v1179 = vsel %vm524, %v230, 0.0
    %1180 = vadd.xlane.f32.xlu0 %v1179
    %v1181 = vpop.xlane.xlu0 %1180
    %v1182 = vsel %vm524, %v231, 0.0
    %1183 = vadd.xlane.f32.xlu0 %v1182
    %v1184 = vpop.xlane.xlu0 %1183
    %v1185 = vsel %vm524, %v232, 0.0
    %1186 = vadd.xlane.f32.xlu0 %v1185
    %v1187 = vpop.xlane.xlu0 %1186
    %v1188 = vsel %vm524, %v233, 0.0
    %1189 = vadd.xlane.f32.xlu0 %v1188
    %v1190 = vpop.xlane.xlu0 %1189
    %v1191 = vsel %vm524, %v234, 0.0
    %1192 = vadd.xlane.f32.xlu0 %v1191
    %v1193 = vpop.xlane.xlu0 %1192
    %v1194 = vsel %vm524, %v235, 0.0
    %1195 = vadd.xlane.f32.xlu0 %v1194
    %v1196 = vpop.xlane.xlu0 %1195
    %v1197 = vsel %vm524, %v236, 0.0
    %1198 = vadd.xlane.f32.xlu0 %v1197
    %v1199 = vpop.xlane.xlu0 %1198
    %v1200 = vsel %vm524, %v237, 0.0
    %1201 = vadd.xlane.f32.xlu0 %v1200
    %v1202 = vpop.xlane.xlu0 %1201
    %v1203 = vsel %vm524, %v238, 0.0
    %1204 = vadd.xlane.f32.xlu0 %v1203
    %v1205 = vpop.xlane.xlu0 %1204
    %v1206 = vsel %vm524, %v239, 0.0
    %1207 = vadd.xlane.f32.xlu0 %v1206
    %v1208 = vpop.xlane.xlu0 %1207
    %v1209 = vsel %vm524, %v240, 0.0
    %1210 = vadd.xlane.f32.xlu0 %v1209
    %v1211 = vpop.xlane.xlu0 %1210
    %v1212 = vsel %vm524, %v241, 0.0
    %1213 = vadd.xlane.f32.xlu0 %v1212
    %v1214 = vpop.xlane.xlu0 %1213
    %v1215 = vsel %vm524, %v242, 0.0
    %1216 = vadd.xlane.f32.xlu0 %v1215
    %v1217 = vpop.xlane.xlu0 %1216
    %v1218 = vsel %vm524, %v243, 0.0
    %1219 = vadd.xlane.f32.xlu0 %v1218
    %v1220 = vpop.xlane.xlu0 %1219
    %v1221 = vsel %vm524, %v244, 0.0
    %1222 = vadd.xlane.f32.xlu0 %v1221
    %v1223 = vpop.xlane.xlu0 %1222
    %v1224 = vsel %vm524, %v245, 0.0
    %1225 = vadd.xlane.f32.xlu0 %v1224
    %v1226 = vpop.xlane.xlu0 %1225
    %v1227 = vsel %vm524, %v246, 0.0
    %1228 = vadd.xlane.f32.xlu0 %v1227
    %v1229 = vpop.xlane.xlu0 %1228
    %v1230 = vsel %vm524, %v247, 0.0
    %1231 = vadd.xlane.f32.xlu0 %v1230
    %v1232 = vpop.xlane.xlu0 %1231
    %v1233 = vsel %vm524, %v248, 0.0
    %1234 = vadd.xlane.f32.xlu0 %v1233
    %v1235 = vpop.xlane.xlu0 %1234
    %v1236 = vsel %vm524, %v249, 0.0
    %1237 = vadd.xlane.f32.xlu0 %v1236
    %v1238 = vpop.xlane.xlu0 %1237
    %v1239 = vsel %vm524, %v250, 0.0
    %1240 = vadd.xlane.f32.xlu0 %v1239
    %v1241 = vpop.xlane.xlu0 %1240
    %v1242 = vsel %vm524, %v251, 0.0
    %1243 = vadd.xlane.f32.xlu0 %v1242
    %v1244 = vpop.xlane.xlu0 %1243
    %v1245 = vsel %vm524, %v252, 0.0
    %1246 = vadd.xlane.f32.xlu0 %v1245
    %v1247 = vpop.xlane.xlu0 %1246
    %v1248 = vsel %vm524, %v253, 0.0
    %1249 = vadd.xlane.f32.xlu0 %v1248
    %v1250 = vpop.xlane.xlu0 %1249
    %v1251 = vsel %vm524, %v254, 0.0
    %1252 = vadd.xlane.f32.xlu0 %v1251
    %v1253 = vpop.xlane.xlu0 %1252
    %v1254 = vsel %vm524, %v255, 0.0
    %1255 = vadd.xlane.f32.xlu0 %v1254
    %v1256 = vpop.xlane.xlu0 %1255
    %v1257 = vsel %vm524, %v256, 0.0
    %1258 = vadd.xlane.f32.xlu0 %v1257
    %v1259 = vpop.xlane.xlu0 %1258
    %v1260 = vsel %vm524, %v257, 0.0
    %1261 = vadd.xlane.f32.xlu0 %v1260
    %v1262 = vpop.xlane.xlu0 %1261
    %v1263 = vsel %vm524, %v258, 0.0
    %1264 = vadd.xlane.f32.xlu0 %v1263
    %v1265 = vpop.xlane.xlu0 %1264
    %v1266 = vsel %vm524, %v259, 0.0
    %1267 = vadd.xlane.f32.xlu0 %v1266
    %v1268 = vpop.xlane.xlu0 %1267
    %v1269 = vsel %vm524, %v260, 0.0
    %1270 = vadd.xlane.f32.xlu0 %v1269
    %v1271 = vpop.xlane.xlu0 %1270
    %v1272 = vsel %vm524, %v261, 0.0
    %1273 = vadd.xlane.f32.xlu0 %v1272
    %v1274 = vpop.xlane.xlu0 %1273
    %v1275 = vsel %vm524, %v262, 0.0
    %1276 = vadd.xlane.f32.xlu0 %v1275
    %v1277 = vpop.xlane.xlu0 %1276
    %v1278 = vsel %vm524, %v263, 0.0
    %1279 = vadd.xlane.f32.xlu0 %v1278
    %v1280 = vpop.xlane.xlu0 %1279
    %v1281 = vsel %vm524, %v264, 0.0
    %1282 = vadd.xlane.f32.xlu0 %v1281
    %v1283 = vpop.xlane.xlu0 %1282
    %v1284 = vsel %vm524, %v265, 0.0
    %1285 = vadd.xlane.f32.xlu0 %v1284
    %v1286 = vpop.xlane.xlu0 %1285
    %v1287 = vsel %vm524, %v266, 0.0
    %1288 = vadd.xlane.f32.xlu0 %v1287
    %v1289 = vpop.xlane.xlu0 %1288
    %v1290 = vsel %vm524, %v267, 0.0
    %1291 = vadd.xlane.f32.xlu0 %v1290
    %v1292 = vpop.xlane.xlu0 %1291
    %v1293 = vsel %vm524, %v268, 0.0
    %1294 = vadd.xlane.f32.xlu0 %v1293
    %v1295 = vpop.xlane.xlu0 %1294
    %v1296 = vsel %vm524, %v269, 0.0
    %1297 = vadd.xlane.f32.xlu0 %v1296
    %v1298 = vpop.xlane.xlu0 %1297
    %v1299 = vsel %vm524, %v270, 0.0
    %1300 = vadd.xlane.f32.xlu0 %v1299
    %v1301 = vpop.xlane.xlu0 %1300
    %v1302 = vsel %vm524, %v271, 0.0
    %1303 = vadd.xlane.f32.xlu0 %v1302
    %v1304 = vpop.xlane.xlu0 %1303
    %v1305 = vsel %vm524, %v272, 0.0
    %1306 = vadd.xlane.f32.xlu0 %v1305
    %v1307 = vpop.xlane.xlu0 %1306
    %v1308 = vsel %vm524, %v273, 0.0
    %1309 = vadd.xlane.f32.xlu0 %v1308
    %v1310 = vpop.xlane.xlu0 %1309
    %v1311 = vsel %vm524, %v274, 0.0
    %1312 = vadd.xlane.f32.xlu0 %v1311
    %v1313 = vpop.xlane.xlu0 %1312
    %v1314 = vsel %vm524, %v275, 0.0
    %1315 = vadd.xlane.f32.xlu0 %v1314
    %v1316 = vpop.xlane.xlu0 %1315
    %v1317 = vsel %vm524, %v276, 0.0
    %1318 = vadd.xlane.f32.xlu0 %v1317
    %v1319 = vpop.xlane.xlu0 %1318
    %v1320 = vsel %vm524, %v277, 0.0
    %1321 = vadd.xlane.f32.xlu0 %v1320
    %v1322 = vpop.xlane.xlu0 %1321
    %v1323 = vsel %vm524, %v278, 0.0
    %1324 = vadd.xlane.f32.xlu0 %v1323
    %v1325 = vpop.xlane.xlu0 %1324
    %v1326 = vsel %vm524, %v279, 0.0
    %1327 = vadd.xlane.f32.xlu0 %v1326
    %v1328 = vpop.xlane.xlu0 %1327
    %v1329 = vsel %vm524, %v280, 0.0
    %1330 = vadd.xlane.f32.xlu0 %v1329
    %v1331 = vpop.xlane.xlu0 %1330
    %v1332 = vsel %vm524, %v281, 0.0
    %1333 = vadd.xlane.f32.xlu0 %v1332
    %v1334 = vpop.xlane.xlu0 %1333
    %v1335 = vsel %vm524, %v282, 0.0
    %1336 = vadd.xlane.f32.xlu0 %v1335
    %v1337 = vpop.xlane.xlu0 %1336
    %v1338 = vsel %vm524, %v283, 0.0
    %1339 = vadd.xlane.f32.xlu0 %v1338
    %v1340 = vpop.xlane.xlu0 %1339
    %v1341 = vsel %vm524, %v284, 0.0
    %1342 = vadd.xlane.f32.xlu0 %v1341
    %v1343 = vpop.xlane.xlu0 %1342
    %v1344 = vsel %vm524, %v285, 0.0
    %1345 = vadd.xlane.f32.xlu0 %v1344
    %v1346 = vpop.xlane.xlu0 %1345
    %v1347 = vsel %vm524, %v286, 0.0
    %1348 = vadd.xlane.f32.xlu0 %v1347
    %v1349 = vpop.xlane.xlu0 %1348
    %v1350 = vsel %vm524, %v287, 0.0
    %1351 = vadd.xlane.f32.xlu0 %v1350
    %v1352 = vpop.xlane.xlu0 %1351
    %v1353 = vsel %vm524, %v288, 0.0
    %1354 = vadd.xlane.f32.xlu0 %v1353
    %v1355 = vpop.xlane.xlu0 %1354
    %v1356 = vsel %vm524, %v289, 0.0
    %1357 = vadd.xlane.f32.xlu0 %v1356
    %v1358 = vpop.xlane.xlu0 %1357
    %v1359 = vsel %vm524, %v290, 0.0
    %1360 = vadd.xlane.f32.xlu0 %v1359
    %v1361 = vpop.xlane.xlu0 %1360
    %v1362 = vsel %vm524, %v291, 0.0
    %1363 = vadd.xlane.f32.xlu0 %v1362
    %v1364 = vpop.xlane.xlu0 %1363
    %v1365 = vsel %vm524, %v292, 0.0
    %1366 = vadd.xlane.f32.xlu0 %v1365
    %v1367 = vpop.xlane.xlu0 %1366
    %v1368 = vsel %vm524, %v293, 0.0
    %1369 = vadd.xlane.f32.xlu0 %v1368
    %v1370 = vpop.xlane.xlu0 %1369
    %v1371 = vsel %vm524, %v294, 0.0
    %1372 = vadd.xlane.f32.xlu0 %v1371
    %v1373 = vpop.xlane.xlu0 %1372
    %v1374 = vsel %vm524, %v295, 0.0
    %1375 = vadd.xlane.f32.xlu0 %v1374
    %v1376 = vpop.xlane.xlu0 %1375
    %v1377 = vsel %vm524, %v296, 0.0
    %1378 = vadd.xlane.f32.xlu0 %v1377
    %v1379 = vpop.xlane.xlu0 %1378
    %v1380 = vsel %vm524, %v297, 0.0
    %1381 = vadd.xlane.f32.xlu0 %v1380
    %v1382 = vpop.xlane.xlu0 %1381
    %v1383 = vsel %vm524, %v298, 0.0
    %1384 = vadd.xlane.f32.xlu0 %v1383
    %v1385 = vpop.xlane.xlu0 %1384
    %v1386 = vsel %vm524, %v299, 0.0
    %1387 = vadd.xlane.f32.xlu0 %v1386
    %v1388 = vpop.xlane.xlu0 %1387
    %v1389 = vsel %vm524, %v300, 0.0
    %1390 = vadd.xlane.f32.xlu0 %v1389
    %v1391 = vpop.xlane.xlu0 %1390
    %v1392 = vsel %vm524, %v301, 0.0
    %1393 = vadd.xlane.f32.xlu0 %v1392
    %v1394 = vpop.xlane.xlu0 %1393
    %v1395 = vsel %vm524, %v302, 0.0
    %1396 = vadd.xlane.f32.xlu0 %v1395
    %v1397 = vpop.xlane.xlu0 %1396
    %v1398 = vsel %vm524, %v303, 0.0
    %1399 = vadd.xlane.f32.xlu0 %v1398
    %v1400 = vpop.xlane.xlu0 %1399
    %v1401 = vsel %vm524, %v304, 0.0
    %1402 = vadd.xlane.f32.xlu0 %v1401
    %v1403 = vpop.xlane.xlu0 %1402
    %v1404 = vsel %vm524, %v305, 0.0
    %1405 = vadd.xlane.f32.xlu0 %v1404
    %v1406 = vpop.xlane.xlu0 %1405
    %v1407 = vsel %vm524, %v306, 0.0
    %1408 = vadd.xlane.f32.xlu0 %v1407
    %v1409 = vpop.xlane.xlu0 %1408
    %v1410 = vsel %vm524, %v307, 0.0
    %1411 = vadd.xlane.f32.xlu0 %v1410
    %v1412 = vpop.xlane.xlu0 %1411
    %v1413 = vsel %vm524, %v308, 0.0
    %1414 = vadd.xlane.f32.xlu0 %v1413
    %v1415 = vpop.xlane.xlu0 %1414
    %v1416 = vsel %vm524, %v309, 0.0
    %1417 = vadd.xlane.f32.xlu0 %v1416
    %v1418 = vpop.xlane.xlu0 %1417
    %v1419 = vsel %vm524, %v310, 0.0
    %1420 = vadd.xlane.f32.xlu0 %v1419
    %v1421 = vpop.xlane.xlu0 %1420
    %v1422 = vsel %vm524, %v311, 0.0
    %1423 = vadd.xlane.f32.xlu0 %v1422
    %v1424 = vpop.xlane.xlu0 %1423
    %v1425 = vsel %vm524, %v312, 0.0
    %1426 = vadd.xlane.f32.xlu0 %v1425
    %v1427 = vpop.xlane.xlu0 %1426
    %v1428 = vsel %vm524, %v313, 0.0
    %1429 = vadd.xlane.f32.xlu0 %v1428
    %v1430 = vpop.xlane.xlu0 %1429
    %v1431 = vsel %vm524, %v314, 0.0
    %1432 = vadd.xlane.f32.xlu0 %v1431
    %v1433 = vpop.xlane.xlu0 %1432
    %v1434 = vsel %vm524, %v315, 0.0
    %1435 = vadd.xlane.f32.xlu0 %v1434
    %v1436 = vpop.xlane.xlu0 %1435
    %v1437 = vsel %vm524, %v316, 0.0
    %1438 = vadd.xlane.f32.xlu0 %v1437
    %v1439 = vpop.xlane.xlu0 %1438
    %v1440 = vsel %vm524, %v317, 0.0
    %1441 = vadd.xlane.f32.xlu0 %v1440
    %v1442 = vpop.xlane.xlu0 %1441
    %v1443 = vsel %vm524, %v318, 0.0
    %1444 = vadd.xlane.f32.xlu0 %v1443
    %v1445 = vpop.xlane.xlu0 %1444
    %v1446 = vsel %vm524, %v319, 0.0
    %1447 = vadd.xlane.f32.xlu0 %v1446
    %v1448 = vpop.xlane.xlu0 %1447
    %v1449 = vsel %vm524, %v320, 0.0
    %1450 = vadd.xlane.f32.xlu0 %v1449
    %v1451 = vpop.xlane.xlu0 %1450
    %v1452 = vsel %vm524, %v321, 0.0
    %1453 = vadd.xlane.f32.xlu0 %v1452
    %v1454 = vpop.xlane.xlu0 %1453
    %v1455 = vsel %vm524, %v322, 0.0
    %1456 = vadd.xlane.f32.xlu0 %v1455
    %v1457 = vpop.xlane.xlu0 %1456
    %v1458 = vsel %vm524, %v323, 0.0
    %1459 = vadd.xlane.f32.xlu0 %v1458
    %v1460 = vpop.xlane.xlu0 %1459
    %v1461 = vsel %vm524, %v324, 0.0
    %1462 = vadd.xlane.f32.xlu0 %v1461
    %v1463 = vpop.xlane.xlu0 %1462
    %v1464 = vsel %vm524, %v325, 0.0
    %1465 = vadd.xlane.f32.xlu0 %v1464
    %v1466 = vpop.xlane.xlu0 %1465
    %v1467 = vsel %vm524, %v326, 0.0
    %1468 = vadd.xlane.f32.xlu0 %v1467
    %v1469 = vpop.xlane.xlu0 %1468
    %v1470 = vsel %vm524, %v327, 0.0
    %1471 = vadd.xlane.f32.xlu0 %v1470
    %v1472 = vpop.xlane.xlu0 %1471
    %v1473 = vsel %vm524, %v328, 0.0
    %1474 = vadd.xlane.f32.xlu0 %v1473
    %v1475 = vpop.xlane.xlu0 %1474
    %v1476 = vsel %vm524, %v329, 0.0
    %1477 = vadd.xlane.f32.xlu0 %v1476
    %v1478 = vpop.xlane.xlu0 %1477
    %v1479 = vsel %vm524, %v330, 0.0
    %1480 = vadd.xlane.f32.xlu0 %v1479
    %v1481 = vpop.xlane.xlu0 %1480
    %v1482 = vsel %vm524, %v331, 0.0
    %1483 = vadd.xlane.f32.xlu0 %v1482
    %v1484 = vpop.xlane.xlu0 %1483
    %v1485 = vsel %vm524, %v332, 0.0
    %1486 = vadd.xlane.f32.xlu0 %v1485
    %v1487 = vpop.xlane.xlu0 %1486
    %v1488 = vsel %vm524, %v333, 0.0
    %1489 = vadd.xlane.f32.xlu0 %v1488
    %v1490 = vpop.xlane.xlu0 %1489
    %v1491 = vsel %vm524, %v334, 0.0
    %1492 = vadd.xlane.f32.xlu0 %v1491
    %v1493 = vpop.xlane.xlu0 %1492
    %v1494 = vsel %vm524, %v335, 0.0
    %1495 = vadd.xlane.f32.xlu0 %v1494
    %v1496 = vpop.xlane.xlu0 %1495
    %v1497 = vsel %vm524, %v336, 0.0
    %1498 = vadd.xlane.f32.xlu0 %v1497
    %v1499 = vpop.xlane.xlu0 %1498
    %v1500 = vsel %vm524, %v337, 0.0
    %1501 = vadd.xlane.f32.xlu0 %v1500
    %v1502 = vpop.xlane.xlu0 %1501
    %v1503 = vsel %vm524, %v338, 0.0
    %1504 = vadd.xlane.f32.xlu0 %v1503
    %v1505 = vpop.xlane.xlu0 %1504
    %v1506 = vsel %vm524, %v339, 0.0
    %1507 = vadd.xlane.f32.xlu0 %v1506
    %v1508 = vpop.xlane.xlu0 %1507
    %v1509 = vsel %vm524, %v340, 0.0
    %1510 = vadd.xlane.f32.xlu0 %v1509
    %v1511 = vpop.xlane.xlu0 %1510
    %v1512 = vsel %vm524, %v341, 0.0
    %1513 = vadd.xlane.f32.xlu0 %v1512
    %v1514 = vpop.xlane.xlu0 %1513
    %v1515 = vsel %vm524, %v342, 0.0
    %1516 = vadd.xlane.f32.xlu0 %v1515
    %v1517 = vpop.xlane.xlu0 %1516
    %v1518 = vsel %vm524, %v343, 0.0
    %1519 = vadd.xlane.f32.xlu0 %v1518
    %v1520 = vpop.xlane.xlu0 %1519
    %v1521 = vsel %vm524, %v344, 0.0
    %1522 = vadd.xlane.f32.xlu0 %v1521
    %v1523 = vpop.xlane.xlu0 %1522
    %v1524 = vsel %vm524, %v345, 0.0
    %1525 = vadd.xlane.f32.xlu0 %v1524
    %v1526 = vpop.xlane.xlu0 %1525
    %v1527 = vsel %vm524, %v346, 0.0
    %1528 = vadd.xlane.f32.xlu0 %v1527
    %v1529 = vpop.xlane.xlu0 %1528
    %v1530 = vsel %vm524, %v347, 0.0
    %1531 = vadd.xlane.f32.xlu0 %v1530
    %v1532 = vpop.xlane.xlu0 %1531
    %v1533 = vsel %vm524, %v348, 0.0
    %1534 = vadd.xlane.f32.xlu0 %v1533
    %v1535 = vpop.xlane.xlu0 %1534
    %v1536 = vsel %vm524, %v349, 0.0
    %1537 = vadd.xlane.f32.xlu0 %v1536
    %v1538 = vpop.xlane.xlu0 %1537
    %v1539 = vsel %vm524, %v350, 0.0
    %1540 = vadd.xlane.f32.xlu0 %v1539
    %v1541 = vpop.xlane.xlu0 %1540
    %v1542 = vsel %vm524, %v351, 0.0
    %1543 = vadd.xlane.f32.xlu0 %v1542
    %v1544 = vpop.xlane.xlu0 %1543
    %v1545 = vsel %vm524, %v352, 0.0
    %1546 = vadd.xlane.f32.xlu0 %v1545
    %v1547 = vpop.xlane.xlu0 %1546
    %v1548 = vsel %vm524, %v353, 0.0
    %1549 = vadd.xlane.f32.xlu0 %v1548
    %v1550 = vpop.xlane.xlu0 %1549
    %v1551 = vsel %vm524, %v354, 0.0
    %1552 = vadd.xlane.f32.xlu0 %v1551
    %v1553 = vpop.xlane.xlu0 %1552
    %v1554 = vsel %vm524, %v355, 0.0
    %1555 = vadd.xlane.f32.xlu0 %v1554
    %v1556 = vpop.xlane.xlu0 %1555
    %v1557 = vsel %vm524, %v356, 0.0
    %1558 = vadd.xlane.f32.xlu0 %v1557
    %v1559 = vpop.xlane.xlu0 %1558
    %v1560 = vsel %vm524, %v357, 0.0
    %1561 = vadd.xlane.f32.xlu0 %v1560
    %v1562 = vpop.xlane.xlu0 %1561
    %v1563 = vsel %vm524, %v358, 0.0
    %1564 = vadd.xlane.f32.xlu0 %v1563
    %v1565 = vpop.xlane.xlu0 %1564
    %v1566 = vsel %vm524, %v359, 0.0
    %1567 = vadd.xlane.f32.xlu0 %v1566
    %v1568 = vpop.xlane.xlu0 %1567
    %v1569 = vsel %vm524, %v360, 0.0
    %1570 = vadd.xlane.f32.xlu0 %v1569
    %v1571 = vpop.xlane.xlu0 %1570
    %v1572 = vsel %vm524, %v361, 0.0
    %1573 = vadd.xlane.f32.xlu0 %v1572
    %v1574 = vpop.xlane.xlu0 %1573
    %v1575 = vsel %vm524, %v362, 0.0
    %1576 = vadd.xlane.f32.xlu0 %v1575
    %v1577 = vpop.xlane.xlu0 %1576
    %v1578 = vsel %vm524, %v363, 0.0
    %1579 = vadd.xlane.f32.xlu0 %v1578
    %v1580 = vpop.xlane.xlu0 %1579
    %v1581 = vsel %vm524, %v364, 0.0
    %1582 = vadd.xlane.f32.xlu0 %v1581
    %v1583 = vpop.xlane.xlu0 %1582
    %v1584 = vsel %vm524, %v365, 0.0
    %1585 = vadd.xlane.f32.xlu0 %v1584
    %v1586 = vpop.xlane.xlu0 %1585
    %v1587 = vsel %vm524, %v366, 0.0
    %1588 = vadd.xlane.f32.xlu0 %v1587
    %v1589 = vpop.xlane.xlu0 %1588
    %v1590 = vsel %vm524, %v367, 0.0
    %1591 = vadd.xlane.f32.xlu0 %v1590
    %v1592 = vpop.xlane.xlu0 %1591
    %v1593 = vsel %vm524, %v368, 0.0
    %1594 = vadd.xlane.f32.xlu0 %v1593
    %v1595 = vpop.xlane.xlu0 %1594
    %v1596 = vsel %vm524, %v369, 0.0
    %1597 = vadd.xlane.f32.xlu0 %v1596
    %v1598 = vpop.xlane.xlu0 %1597
    %v1599 = vsel %vm524, %v370, 0.0
    %1600 = vadd.xlane.f32.xlu0 %v1599
    %v1601 = vpop.xlane.xlu0 %1600
    %v1602 = vsel %vm524, %v371, 0.0
    %1603 = vadd.xlane.f32.xlu0 %v1602
    %v1604 = vpop.xlane.xlu0 %1603
    %v1605 = vsel %vm524, %v372, 0.0
    %1606 = vadd.xlane.f32.xlu0 %v1605
    %v1607 = vpop.xlane.xlu0 %1606
    %v1608 = vsel %vm524, %v373, 0.0
    %1609 = vadd.xlane.f32.xlu0 %v1608
    %v1610 = vpop.xlane.xlu0 %1609
    %v1611 = vsel %vm524, %v374, 0.0
    %1612 = vadd.xlane.f32.xlu0 %v1611
    %v1613 = vpop.xlane.xlu0 %1612
    %v1614 = vsel %vm524, %v375, 0.0
    %1615 = vadd.xlane.f32.xlu0 %v1614
    %v1616 = vpop.xlane.xlu0 %1615
    %v1617 = vsel %vm524, %v376, 0.0
    %1618 = vadd.xlane.f32.xlu0 %v1617
    %v1619 = vpop.xlane.xlu0 %1618
    %v1620 = vsel %vm524, %v377, 0.0
    %1621 = vadd.xlane.f32.xlu0 %v1620
    %v1622 = vpop.xlane.xlu0 %1621
    %v1623 = vsel %vm524, %v378, 0.0
    %1624 = vadd.xlane.f32.xlu0 %v1623
    %v1625 = vpop.xlane.xlu0 %1624
    %v1626 = vsel %vm524, %v379, 0.0
    %1627 = vadd.xlane.f32.xlu0 %v1626
    %v1628 = vpop.xlane.xlu0 %1627
    %v1629 = vsel %vm524, %v380, 0.0
    %1630 = vadd.xlane.f32.xlu0 %v1629
    %v1631 = vpop.xlane.xlu0 %1630
    %v1632 = vsel %vm524, %v381, 0.0
    %1633 = vadd.xlane.f32.xlu0 %v1632
    %v1634 = vpop.xlane.xlu0 %1633
    %v1635 = vsel %vm524, %v382, 0.0
    %1636 = vadd.xlane.f32.xlu0 %v1635
    %v1637 = vpop.xlane.xlu0 %1636
    %v1638 = vsel %vm524, %v383, 0.0
    %1639 = vadd.xlane.f32.xlu0 %v1638
    %v1640 = vpop.xlane.xlu0 %1639
    %v1641 = vsel %vm524, %v384, 0.0
    %1642 = vadd.xlane.f32.xlu0 %v1641
    %v1643 = vpop.xlane.xlu0 %1642
    %v1644 = vsel %vm524, %v385, 0.0
    %1645 = vadd.xlane.f32.xlu0 %v1644
    %v1646 = vpop.xlane.xlu0 %1645
    %v1647 = vsel %vm524, %v386, 0.0
    %1648 = vadd.xlane.f32.xlu0 %v1647
    %v1649 = vpop.xlane.xlu0 %1648
    %v1650 = vsel %vm524, %v387, 0.0
    %1651 = vadd.xlane.f32.xlu0 %v1650
    %v1652 = vpop.xlane.xlu0 %1651
    %v1653 = vsel %vm524, %v388, 0.0
    %1654 = vadd.xlane.f32.xlu0 %v1653
    %v1655 = vpop.xlane.xlu0 %1654
    %v1656 = vsel %vm524, %v389, 0.0
    %1657 = vadd.xlane.f32.xlu0 %v1656
    %v1658 = vpop.xlane.xlu0 %1657
    %v1659 = vsel %vm524, %v390, 0.0
    %1660 = vadd.xlane.f32.xlu0 %v1659
    %v1661 = vpop.xlane.xlu0 %1660
    %v1662 = vsel %vm524, %v391, 0.0
    %1663 = vadd.xlane.f32.xlu0 %v1662
    %v1664 = vpop.xlane.xlu0 %1663
    %v1665 = vsel %vm524, %v392, 0.0
    %1666 = vadd.xlane.f32.xlu0 %v1665
    %v1667 = vpop.xlane.xlu0 %1666
    %v1668 = vsel %vm524, %v393, 0.0
    %1669 = vadd.xlane.f32.xlu0 %v1668
    %v1670 = vpop.xlane.xlu0 %1669
    %v1671 = vsel %vm524, %v394, 0.0
    %1672 = vadd.xlane.f32.xlu0 %v1671
    %v1673 = vpop.xlane.xlu0 %1672
    %v1674 = vsel %vm524, %v395, 0.0
    %1675 = vadd.xlane.f32.xlu0 %v1674
    %v1676 = vpop.xlane.xlu0 %1675
    %v1677 = vsel %vm524, %v396, 0.0
    %1678 = vadd.xlane.f32.xlu0 %v1677
    %v1679 = vpop.xlane.xlu0 %1678
    %v1680 = vsel %vm524, %v397, 0.0
    %1681 = vadd.xlane.f32.xlu0 %v1680
    %v1682 = vpop.xlane.xlu0 %1681
    %v1683 = vsel %vm524, %v398, 0.0
    %1684 = vadd.xlane.f32.xlu0 %v1683
    %v1685 = vpop.xlane.xlu0 %1684
    %v1686 = vsel %vm524, %v399, 0.0
    %1687 = vadd.xlane.f32.xlu0 %v1686
    %v1688 = vpop.xlane.xlu0 %1687
    %v1689 = vsel %vm524, %v400, 0.0
    %1690 = vadd.xlane.f32.xlu0 %v1689
    %v1691 = vpop.xlane.xlu0 %1690
    %v1692 = vsel %vm524, %v401, 0.0
    %1693 = vadd.xlane.f32.xlu0 %v1692
    %v1694 = vpop.xlane.xlu0 %1693
    %v1695 = vsel %vm524, %v402, 0.0
    %1696 = vadd.xlane.f32.xlu0 %v1695
    %v1697 = vpop.xlane.xlu0 %1696
    %v1698 = vsel %vm524, %v403, 0.0
    %1699 = vadd.xlane.f32.xlu0 %v1698
    %v1700 = vpop.xlane.xlu0 %1699
    %v1701 = vsel %vm524, %v404, 0.0
    %1702 = vadd.xlane.f32.xlu0 %v1701
    %v1703 = vpop.xlane.xlu0 %1702
    %v1704 = vsel %vm524, %v405, 0.0
    %1705 = vadd.xlane.f32.xlu0 %v1704
    %v1706 = vpop.xlane.xlu0 %1705
    %v1707 = vsel %vm524, %v406, 0.0
    %1708 = vadd.xlane.f32.xlu0 %v1707
    %v1709 = vpop.xlane.xlu0 %1708
    %v1710 = vsel %vm524, %v407, 0.0
    %1711 = vadd.xlane.f32.xlu0 %v1710
    %v1712 = vpop.xlane.xlu0 %1711
    %v1713 = vsel %vm524, %v408, 0.0
    %1714 = vadd.xlane.f32.xlu0 %v1713
    %v1715 = vpop.xlane.xlu0 %1714
    %v1716 = vsel %vm524, %v409, 0.0
    %1717 = vadd.xlane.f32.xlu0 %v1716
    %v1718 = vpop.xlane.xlu0 %1717
    %v1719 = vsel %vm524, %v410, 0.0
    %1720 = vadd.xlane.f32.xlu0 %v1719
    %v1721 = vpop.xlane.xlu0 %1720
    %v1722 = vsel %vm524, %v411, 0.0
    %1723 = vadd.xlane.f32.xlu0 %v1722
    %v1724 = vpop.xlane.xlu0 %1723
    %v1725 = vsel %vm524, %v412, 0.0
    %1726 = vadd.xlane.f32.xlu0 %v1725
    %v1727 = vpop.xlane.xlu0 %1726
    %v1728 = vsel %vm524, %v413, 0.0
    %1729 = vadd.xlane.f32.xlu0 %v1728
    %v1730 = vpop.xlane.xlu0 %1729
    %v1731 = vsel %vm524, %v414, 0.0
    %1732 = vadd.xlane.f32.xlu0 %v1731
    %v1733 = vpop.xlane.xlu0 %1732
    %v1734 = vsel %vm524, %v415, 0.0
    %1735 = vadd.xlane.f32.xlu0 %v1734
    %v1736 = vpop.xlane.xlu0 %1735
    %v1737 = vsel %vm524, %v416, 0.0
    %1738 = vadd.xlane.f32.xlu0 %v1737
    %v1739 = vpop.xlane.xlu0 %1738
    %v1740 = vsel %vm524, %v417, 0.0
    %1741 = vadd.xlane.f32.xlu0 %v1740
    %v1742 = vpop.xlane.xlu0 %1741
    %v1743 = vsel %vm524, %v418, 0.0
    %1744 = vadd.xlane.f32.xlu0 %v1743
    %v1745 = vpop.xlane.xlu0 %1744
    %v1746 = vsel %vm524, %v419, 0.0
    %1747 = vadd.xlane.f32.xlu0 %v1746
    %v1748 = vpop.xlane.xlu0 %1747
    %v1749 = vsel %vm524, %v420, 0.0
    %1750 = vadd.xlane.f32.xlu0 %v1749
    %v1751 = vpop.xlane.xlu0 %1750
    %v1752 = vsel %vm524, %v421, 0.0
    %1753 = vadd.xlane.f32.xlu0 %v1752
    %v1754 = vpop.xlane.xlu0 %1753
    %v1755 = vsel %vm524, %v422, 0.0
    %1756 = vadd.xlane.f32.xlu0 %v1755
    %v1757 = vpop.xlane.xlu0 %1756
    %v1758 = vsel %vm524, %v423, 0.0
    %1759 = vadd.xlane.f32.xlu0 %v1758
    %v1760 = vpop.xlane.xlu0 %1759
    %v1761 = vsel %vm524, %v424, 0.0
    %1762 = vadd.xlane.f32.xlu0 %v1761
    %v1763 = vpop.xlane.xlu0 %1762
    %v1764 = vsel %vm524, %v425, 0.0
    %1765 = vadd.xlane.f32.xlu0 %v1764
    %v1766 = vpop.xlane.xlu0 %1765
    %v1767 = vsel %vm524, %v426, 0.0
    %1768 = vadd.xlane.f32.xlu0 %v1767
    %v1769 = vpop.xlane.xlu0 %1768
    %v1770 = vsel %vm524, %v427, 0.0
    %1771 = vadd.xlane.f32.xlu0 %v1770
    %v1772 = vpop.xlane.xlu0 %1771
    %v1773 = vsel %vm524, %v428, 0.0
    %1774 = vadd.xlane.f32.xlu0 %v1773
    %v1775 = vpop.xlane.xlu0 %1774
    %v1776 = vsel %vm524, %v429, 0.0
    %1777 = vadd.xlane.f32.xlu0 %v1776
    %v1778 = vpop.xlane.xlu0 %1777
    %v1779 = vsel %vm524, %v430, 0.0
    %1780 = vadd.xlane.f32.xlu0 %v1779
    %v1781 = vpop.xlane.xlu0 %1780
    %v1782 = vsel %vm524, %v431, 0.0
    %1783 = vadd.xlane.f32.xlu0 %v1782
    %v1784 = vpop.xlane.xlu0 %1783
    %v1785 = vsel %vm524, %v432, 0.0
    %1786 = vadd.xlane.f32.xlu0 %v1785
    %v1787 = vpop.xlane.xlu0 %1786
    %v1788 = vsel %vm524, %v433, 0.0
    %1789 = vadd.xlane.f32.xlu0 %v1788
    %v1790 = vpop.xlane.xlu0 %1789
    %v1791 = vsel %vm524, %v434, 0.0
    %1792 = vadd.xlane.f32.xlu0 %v1791
    %v1793 = vpop.xlane.xlu0 %1792
    %v1794 = vsel %vm524, %v435, 0.0
    %1795 = vadd.xlane.f32.xlu0 %v1794
    %v1796 = vpop.xlane.xlu0 %1795
    %v1797 = vsel %vm524, %v436, 0.0
    %1798 = vadd.xlane.f32.xlu0 %v1797
    %v1799 = vpop.xlane.xlu0 %1798
    %v1800 = vsel %vm524, %v437, 0.0
    %1801 = vadd.xlane.f32.xlu0 %v1800
    %v1802 = vpop.xlane.xlu0 %1801
    %v1803 = vsel %vm524, %v438, 0.0
    %1804 = vadd.xlane.f32.xlu0 %v1803
    %v1805 = vpop.xlane.xlu0 %1804
    %v1806 = vsel %vm524, %v439, 0.0
    %1807 = vadd.xlane.f32.xlu0 %v1806
    %v1808 = vpop.xlane.xlu0 %1807
    %v1809 = vsel %vm524, %v440, 0.0
    %1810 = vadd.xlane.f32.xlu0 %v1809
    %v1811 = vpop.xlane.xlu0 %1810
    %v1812 = vsel %vm524, %v441, 0.0
    %1813 = vadd.xlane.f32.xlu0 %v1812
    %v1814 = vpop.xlane.xlu0 %1813
    %v1815 = vsel %vm524, %v442, 0.0
    %1816 = vadd.xlane.f32.xlu0 %v1815
    %v1817 = vpop.xlane.xlu0 %1816
    %v1818 = vsel %vm524, %v443, 0.0
    %1819 = vadd.xlane.f32.xlu0 %v1818
    %v1820 = vpop.xlane.xlu0 %1819
    %v1821 = vsel %vm524, %v444, 0.0
    %1822 = vadd.xlane.f32.xlu0 %v1821
    %v1823 = vpop.xlane.xlu0 %1822
    %v1824 = vsel %vm524, %v445, 0.0
    %1825 = vadd.xlane.f32.xlu0 %v1824
    %v1826 = vpop.xlane.xlu0 %1825
    %v1827 = vsel %vm524, %v446, 0.0
    %1828 = vadd.xlane.f32.xlu0 %v1827
    %v1829 = vpop.xlane.xlu0 %1828
    %v1830 = vsel %vm524, %v447, 0.0
    %1831 = vadd.xlane.f32.xlu0 %v1830
    %v1832 = vpop.xlane.xlu0 %1831
    %v1833 = vsel %vm524, %v448, 0.0
    %1834 = vadd.xlane.f32.xlu0 %v1833
    %v1835 = vpop.xlane.xlu0 %1834
    %v1836 = vsel %vm524, %v449, 0.0
    %1837 = vadd.xlane.f32.xlu0 %v1836
    %v1838 = vpop.xlane.xlu0 %1837
    %v1839 = vsel %vm524, %v450, 0.0
    %1840 = vadd.xlane.f32.xlu0 %v1839
    %v1841 = vpop.xlane.xlu0 %1840
    %v1842 = vsel %vm524, %v451, 0.0
    %1843 = vadd.xlane.f32.xlu0 %v1842
    %v1844 = vpop.xlane.xlu0 %1843
    %v1845 = vsel %vm524, %v452, 0.0
    %1846 = vadd.xlane.f32.xlu0 %v1845
    %v1847 = vpop.xlane.xlu0 %1846
    %v1848 = vsel %vm524, %v453, 0.0
    %1849 = vadd.xlane.f32.xlu0 %v1848
    %v1850 = vpop.xlane.xlu0 %1849
    %v1851 = vsel %vm524, %v454, 0.0
    %1852 = vadd.xlane.f32.xlu0 %v1851
    %v1853 = vpop.xlane.xlu0 %1852
    %v1854 = vsel %vm524, %v455, 0.0
    %1855 = vadd.xlane.f32.xlu0 %v1854
    %v1856 = vpop.xlane.xlu0 %1855
    %v1857 = vsel %vm524, %v456, 0.0
    %1858 = vadd.xlane.f32.xlu0 %v1857
    %v1859 = vpop.xlane.xlu0 %1858
    %v1860 = vsel %vm524, %v457, 0.0
    %1861 = vadd.xlane.f32.xlu0 %v1860
    %v1862 = vpop.xlane.xlu0 %1861
    %v1863 = vsel %vm524, %v458, 0.0
    %1864 = vadd.xlane.f32.xlu0 %v1863
    %v1865 = vpop.xlane.xlu0 %1864
    %v1866 = vsel %vm524, %v459, 0.0
    %1867 = vadd.xlane.f32.xlu0 %v1866
    %v1868 = vpop.xlane.xlu0 %1867
    %v1869 = vsel %vm524, %v460, 0.0
    %1870 = vadd.xlane.f32.xlu0 %v1869
    %v1871 = vpop.xlane.xlu0 %1870
    %v1872 = vsel %vm524, %v461, 0.0
    %1873 = vadd.xlane.f32.xlu0 %v1872
    %v1874 = vpop.xlane.xlu0 %1873
    %v1875 = vsel %vm524, %v462, 0.0
    %1876 = vadd.xlane.f32.xlu0 %v1875
    %v1877 = vpop.xlane.xlu0 %1876
    %v1878 = vsel %vm524, %v463, 0.0
    %1879 = vadd.xlane.f32.xlu0 %v1878
    %v1880 = vpop.xlane.xlu0 %1879
    %v1881 = vsel %vm524, %v464, 0.0
    %1882 = vadd.xlane.f32.xlu0 %v1881
    %v1883 = vpop.xlane.xlu0 %1882
    %v1884 = vsel %vm524, %v465, 0.0
    %1885 = vadd.xlane.f32.xlu0 %v1884
    %v1886 = vpop.xlane.xlu0 %1885
    %v1887 = vsel %vm524, %v466, 0.0
    %1888 = vadd.xlane.f32.xlu0 %v1887
    %v1889 = vpop.xlane.xlu0 %1888
    %v1890 = vsel %vm524, %v467, 0.0
    %1891 = vadd.xlane.f32.xlu0 %v1890
    %v1892 = vpop.xlane.xlu0 %1891
    %v1893 = vsel %vm524, %v468, 0.0
    %1894 = vadd.xlane.f32.xlu0 %v1893
    %v1895 = vpop.xlane.xlu0 %1894
    %v1896 = vsel %vm524, %v469, 0.0
    %1897 = vadd.xlane.f32.xlu0 %v1896
    %v1898 = vpop.xlane.xlu0 %1897
    %v1899 = vsel %vm524, %v470, 0.0
    %1900 = vadd.xlane.f32.xlu0 %v1899
    %v1901 = vpop.xlane.xlu0 %1900
    %v1902 = vsel %vm524, %v471, 0.0
    %1903 = vadd.xlane.f32.xlu0 %v1902
    %v1904 = vpop.xlane.xlu0 %1903
    %v1905 = vsel %vm524, %v472, 0.0
    %1906 = vadd.xlane.f32.xlu0 %v1905
    %v1907 = vpop.xlane.xlu0 %1906
    %v1908 = vsel %vm524, %v473, 0.0
    %1909 = vadd.xlane.f32.xlu0 %v1908
    %v1910 = vpop.xlane.xlu0 %1909
    %v1911 = vsel %vm524, %v474, 0.0
    %1912 = vadd.xlane.f32.xlu0 %v1911
    %v1913 = vpop.xlane.xlu0 %1912
    %v1914 = vsel %vm524, %v475, 0.0
    %1915 = vadd.xlane.f32.xlu0 %v1914
    %v1916 = vpop.xlane.xlu0 %1915
    %v1917 = vsel %vm524, %v476, 0.0
    %1918 = vadd.xlane.f32.xlu0 %v1917
    %v1919 = vpop.xlane.xlu0 %1918
    %v1920 = vsel %vm524, %v477, 0.0
    %1921 = vadd.xlane.f32.xlu0 %v1920
    %v1922 = vpop.xlane.xlu0 %1921
    %v1923 = vsel %vm524, %v478, 0.0
    %1924 = vadd.xlane.f32.xlu0 %v1923
    %v1925 = vpop.xlane.xlu0 %1924
    %v1926 = vsel %vm524, %v479, 0.0
    %1927 = vadd.xlane.f32.xlu0 %v1926
    %v1928 = vpop.xlane.xlu0 %1927
    %v1929 = vsel %vm524, %v480, 0.0
    %1930 = vadd.xlane.f32.xlu0 %v1929
    %v1931 = vpop.xlane.xlu0 %1930
    %v1932 = vsel %vm524, %v481, 0.0
    %1933 = vadd.xlane.f32.xlu0 %v1932
    %v1934 = vpop.xlane.xlu0 %1933
    %v1935 = vsel %vm524, %v482, 0.0
    %1936 = vadd.xlane.f32.xlu0 %v1935
    %v1937 = vpop.xlane.xlu0 %1936
    %v1938 = vsel %vm524, %v483, 0.0
    %1939 = vadd.xlane.f32.xlu0 %v1938
    %v1940 = vpop.xlane.xlu0 %1939
    %v1941 = vsel %vm524, %v484, 0.0
    %1942 = vadd.xlane.f32.xlu0 %v1941
    %v1943 = vpop.xlane.xlu0 %1942
    %v1944 = vsel %vm524, %v485, 0.0
    %1945 = vadd.xlane.f32.xlu0 %v1944
    %v1946 = vpop.xlane.xlu0 %1945
    %v1947 = vsel %vm524, %v486, 0.0
    %1948 = vadd.xlane.f32.xlu0 %v1947
    %v1949 = vpop.xlane.xlu0 %1948
    %v1950 = vsel %vm524, %v487, 0.0
    %1951 = vadd.xlane.f32.xlu0 %v1950
    %v1952 = vpop.xlane.xlu0 %1951
    %v1953 = vsel %vm524, %v488, 0.0
    %1954 = vadd.xlane.f32.xlu0 %v1953
    %v1955 = vpop.xlane.xlu0 %1954
    %v1956 = vsel %vm524, %v489, 0.0
    %1957 = vadd.xlane.f32.xlu0 %v1956
    %v1958 = vpop.xlane.xlu0 %1957
    %v1959 = vsel %vm524, %v490, 0.0
    %1960 = vadd.xlane.f32.xlu0 %v1959
    %v1961 = vpop.xlane.xlu0 %1960
    %v1962 = vsel %vm524, %v491, 0.0
    %1963 = vadd.xlane.f32.xlu0 %v1962
    %v1964 = vpop.xlane.xlu0 %1963
    %v1965 = vsel %vm524, %v492, 0.0
    %1966 = vadd.xlane.f32.xlu0 %v1965
    %v1967 = vpop.xlane.xlu0 %1966
    %v1968 = vsel %vm524, %v493, 0.0
    %1969 = vadd.xlane.f32.xlu0 %v1968
    %v1970 = vpop.xlane.xlu0 %1969
    %v1971 = vsel %vm524, %v494, 0.0
    %1972 = vadd.xlane.f32.xlu0 %v1971
    %v1973 = vpop.xlane.xlu0 %1972
    %v1974 = vsel %vm524, %v495, 0.0
    %1975 = vadd.xlane.f32.xlu0 %v1974
    %v1976 = vpop.xlane.xlu0 %1975
    %v1977 = vsel %vm524, %v496, 0.0
    %1978 = vadd.xlane.f32.xlu0 %v1977
    %v1979 = vpop.xlane.xlu0 %1978
    %v1980 = vsel %vm524, %v497, 0.0
    %1981 = vadd.xlane.f32.xlu0 %v1980
    %v1982 = vpop.xlane.xlu0 %1981
    %v1983 = vsel %vm524, %v498, 0.0
    %1984 = vadd.xlane.f32.xlu0 %v1983
    %v1985 = vpop.xlane.xlu0 %1984
    %v1986 = vsel %vm524, %v499, 0.0
    %1987 = vadd.xlane.f32.xlu0 %v1986
    %v1988 = vpop.xlane.xlu0 %1987
    %v1989 = vsel %vm524, %v500, 0.0
    %1990 = vadd.xlane.f32.xlu0 %v1989
    %v1991 = vpop.xlane.xlu0 %1990
    %v1992 = vsel %vm524, %v501, 0.0
    %1993 = vadd.xlane.f32.xlu0 %v1992
    %v1994 = vpop.xlane.xlu0 %1993
    %v1995 = vsel %vm524, %v502, 0.0
    %1996 = vadd.xlane.f32.xlu0 %v1995
    %v1997 = vpop.xlane.xlu0 %1996
    %v1998 = vsel %vm524, %v503, 0.0
    %1999 = vadd.xlane.f32.xlu0 %v1998
    %v2000 = vpop.xlane.xlu0 %1999
    %v2001 = vsel %vm524, %v504, 0.0
    %2002 = vadd.xlane.f32.xlu0 %v2001
    %v2003 = vpop.xlane.xlu0 %2002
    %v2004 = vsel %vm524, %v505, 0.0
    %2005 = vadd.xlane.f32.xlu0 %v2004
    %v2006 = vpop.xlane.xlu0 %2005
    %v2007 = vsel %vm524, %v506, 0.0
    %2008 = vadd.xlane.f32.xlu0 %v2007
    %v2009 = vpop.xlane.xlu0 %2008
    %v2010 = vsel %vm524, %v507, 0.0
    %2011 = vadd.xlane.f32.xlu0 %v2010
    %v2012 = vpop.xlane.xlu0 %2011
    %v2013 = vsel %vm524, %v508, 0.0
    %2014 = vadd.xlane.f32.xlu0 %v2013
    %v2015 = vpop.xlane.xlu0 %2014
    %v2016 = vsel %vm524, %v509, 0.0
    %2017 = vadd.xlane.f32.xlu0 %v2016
    %v2018 = vpop.xlane.xlu0 %2017
    %v2019 = vsel %vm524, %v510, 0.0
    %2020 = vadd.xlane.f32.xlu0 %v2019
    %v2021 = vpop.xlane.xlu0 %2020
    %v2022 = vsel %vm524, %v511, 0.0
    %2023 = vadd.xlane.f32.xlu0 %v2022
    %v2024 = vpop.xlane.xlu0 %2023
    %v2025 = vsel %vm524, %v512, 0.0
    %2026 = vadd.xlane.f32.xlu0 %v2025
    %v2027 = vpop.xlane.xlu0 %2026
    %v2028 = vsel %vm524, %v513, 0.0
    %2029 = vadd.xlane.f32.xlu0 %v2028
    %v2030 = vpop.xlane.xlu0 %2029
    %v2031 = vsel %vm524, %v514, 0.0
    %2032 = vadd.xlane.f32.xlu0 %v2031
    %v2033 = vpop.xlane.xlu0 %2032
    %v2034 = vsel %vm524, %v515, 0.0
    %2035 = vadd.xlane.f32.xlu0 %v2034
    %v2036 = vpop.xlane.xlu0 %2035
    %v2037 = vsel %vm524, %v516, 0.0
    %2038 = vadd.xlane.f32.xlu0 %v2037
    %v2039 = vpop.xlane.xlu0 %2038
    %v2040 = vsel %vm524, %v517, 0.0
    %2041 = vadd.xlane.f32.xlu0 %v2040
    %v2042 = vpop.xlane.xlu0 %2041
    %v2043 = vsel %vm524, %v518, 0.0
    %2044 = vadd.xlane.f32.xlu0 %v2043
    %v2045 = vpop.xlane.xlu0 %2044
    %v2046 = vsel %vm524, %v519, 0.0
    %2047 = vadd.xlane.f32.xlu0 %v2046
    %v2048 = vpop.xlane.xlu0 %2047
    %v2049 = vsel %vm524, %v520, 0.0
    %2050 = vadd.xlane.f32.xlu0 %v2049
    %v2051 = vpop.xlane.xlu0 %2050
    %v2052 = vsel %vm524, %v521, 0.0
    %2053 = vadd.xlane.f32.xlu0 %v2052
    %v2054 = vpop.xlane.xlu0 %2053
    %v2055 = vsel %vm524, %v522, 0.0
    %2056 = vadd.xlane.f32.xlu0 %v2055
    %v2057 = vpop.xlane.xlu0 %2056
    %v2058 = vsel %vm524, %v523, 0.0
    %2059 = vadd.xlane.f32.xlu0 %v2058
    %v2060 = vpop.xlane.xlu0 %2059
    %v2061 = vmul.f32 %v527, 0.020408163
    %v2062 = vmul.f32 %v530, 0.020408163
    %v2063 = vmul.f32 %v533, 0.020408163
    %v2064 = vmul.f32 %v536, 0.020408163
    %v2065 = vmul.f32 %v539, 0.020408163
    %v2066 = vmul.f32 %v542, 0.020408163
    %v2067 = vmul.f32 %v545, 0.020408163
    %v2068 = vmul.f32 %v548, 0.020408163
    %v2069 = vmul.f32 %v551, 0.020408163
    %v2070 = vmul.f32 %v554, 0.020408163
    %v2071 = vmul.f32 %v557, 0.020408163
    %v2072 = vmul.f32 %v560, 0.020408163
    %v2073 = vmul.f32 %v563, 0.020408163
    %v2074 = vmul.f32 %v566, 0.020408163
    %v2075 = vmul.f32 %v569, 0.020408163
    %v2076 = vmul.f32 %v572, 0.020408163
    %v2077 = vmul.f32 %v575, 0.020408163
    %v2078 = vmul.f32 %v578, 0.020408163
    %v2079 = vmul.f32 %v581, 0.020408163
    %v2080 = vmul.f32 %v584, 0.020408163
    %v2081 = vmul.f32 %v587, 0.020408163
    %v2082 = vmul.f32 %v590, 0.020408163
    %v2083 = vmul.f32 %v593, 0.020408163
    %v2084 = vmul.f32 %v596, 0.020408163
    %v2085 = vmul.f32 %v599, 0.020408163
    %v2086 = vmul.f32 %v602, 0.020408163
    %v2087 = vmul.f32 %v605, 0.020408163
    %v2088 = vmul.f32 %v608, 0.020408163
    %v2089 = vmul.f32 %v611, 0.020408163
    %v2090 = vmul.f32 %v614, 0.020408163
    %v2091 = vmul.f32 %v617, 0.020408163
    %v2092 = vmul.f32 %v620, 0.020408163
    %v2093 = vmul.f32 %v623, 0.020408163
    %v2094 = vmul.f32 %v626, 0.020408163
    %v2095 = vmul.f32 %v629, 0.020408163
    %v2096 = vmul.f32 %v632, 0.020408163
    %v2097 = vmul.f32 %v635, 0.020408163
    %v2098 = vmul.f32 %v638, 0.020408163
    %v2099 = vmul.f32 %v641, 0.020408163
    %v2100 = vmul.f32 %v644, 0.020408163
    %v2101 = vmul.f32 %v647, 0.020408163
    %v2102 = vmul.f32 %v650, 0.020408163
    %v2103 = vmul.f32 %v653, 0.020408163
    %v2104 = vmul.f32 %v656, 0.020408163
    %v2105 = vmul.f32 %v659, 0.020408163
    %v2106 = vmul.f32 %v662, 0.020408163
    %v2107 = vmul.f32 %v665, 0.020408163
    %v2108 = vmul.f32 %v668, 0.020408163
    %v2109 = vmul.f32 %v671, 0.020408163
    %v2110 = vmul.f32 %v674, 0.020408163
    %v2111 = vmul.f32 %v677, 0.020408163
    %v2112 = vmul.f32 %v680, 0.020408163
    %v2113 = vmul.f32 %v683, 0.020408163
    %v2114 = vmul.f32 %v686, 0.020408163
    %v2115 = vmul.f32 %v689, 0.020408163
    %v2116 = vmul.f32 %v692, 0.020408163
    %v2117 = vmul.f32 %v695, 0.020408163
    %v2118 = vmul.f32 %v698, 0.020408163
    %v2119 = vmul.f32 %v701, 0.020408163
    %v2120 = vmul.f32 %v704, 0.020408163
    %v2121 = vmul.f32 %v707, 0.020408163
    %v2122 = vmul.f32 %v710, 0.020408163
    %v2123 = vmul.f32 %v713, 0.020408163
    %v2124 = vmul.f32 %v716, 0.020408163
    %v2125 = vmul.f32 %v719, 0.020408163
    %v2126 = vmul.f32 %v722, 0.020408163
    %v2127 = vmul.f32 %v725, 0.020408163
    %v2128 = vmul.f32 %v728, 0.020408163
    %v2129 = vmul.f32 %v731, 0.020408163
    %v2130 = vmul.f32 %v734, 0.020408163
    %v2131 = vmul.f32 %v737, 0.020408163
    %v2132 = vmul.f32 %v740, 0.020408163
    %v2133 = vmul.f32 %v743, 0.020408163
    %v2134 = vmul.f32 %v746, 0.020408163
    %v2135 = vmul.f32 %v749, 0.020408163
    %v2136 = vmul.f32 %v752, 0.020408163
    %v2137 = vmul.f32 %v755, 0.020408163
    %v2138 = vmul.f32 %v758, 0.020408163
    %v2139 = vmul.f32 %v761, 0.020408163
    %v2140 = vmul.f32 %v764, 0.020408163
    %v2141 = vmul.f32 %v767, 0.020408163
    %v2142 = vmul.f32 %v770, 0.020408163
    %v2143 = vmul.f32 %v773, 0.020408163
    %v2144 = vmul.f32 %v776, 0.020408163
    %v2145 = vmul.f32 %v779, 0.020408163
    %v2146 = vmul.f32 %v782, 0.020408163
    %v2147 = vmul.f32 %v785, 0.020408163
    %v2148 = vmul.f32 %v788, 0.020408163
    %v2149 = vmul.f32 %v791, 0.020408163
    %v2150 = vmul.f32 %v794, 0.020408163
    %v2151 = vmul.f32 %v797, 0.020408163
    %v2152 = vmul.f32 %v800, 0.020408163
    %v2153 = vmul.f32 %v803, 0.020408163
    %v2154 = vmul.f32 %v806, 0.020408163
    %v2155 = vmul.f32 %v809, 0.020408163
    %v2156 = vmul.f32 %v812, 0.020408163
    %v2157 = vmul.f32 %v815, 0.020408163
    %v2158 = vmul.f32 %v818, 0.020408163
    %v2159 = vmul.f32 %v821, 0.020408163
    %v2160 = vmul.f32 %v824, 0.020408163
    %v2161 = vmul.f32 %v827, 0.020408163
    %v2162 = vmul.f32 %v830, 0.020408163
    %v2163 = vmul.f32 %v833, 0.020408163
    %v2164 = vmul.f32 %v836, 0.020408163
    %v2165 = vmul.f32 %v839, 0.020408163
    %v2166 = vmul.f32 %v842, 0.020408163
    %v2167 = vmul.f32 %v845, 0.020408163
    %v2168 = vmul.f32 %v848, 0.020408163
    %v2169 = vmul.f32 %v851, 0.020408163
    %v2170 = vmul.f32 %v854, 0.020408163
    %v2171 = vmul.f32 %v857, 0.020408163
    %v2172 = vmul.f32 %v860, 0.020408163
    %v2173 = vmul.f32 %v863, 0.020408163
    %v2174 = vmul.f32 %v866, 0.020408163
    %v2175 = vmul.f32 %v869, 0.020408163
    %v2176 = vmul.f32 %v872, 0.020408163
    %v2177 = vmul.f32 %v875, 0.020408163
    %v2178 = vmul.f32 %v878, 0.020408163
    %v2179 = vmul.f32 %v881, 0.020408163
    %v2180 = vmul.f32 %v884, 0.020408163
    %v2181 = vmul.f32 %v887, 0.020408163
    %v2182 = vmul.f32 %v890, 0.020408163
    %v2183 = vmul.f32 %v893, 0.020408163
    %v2184 = vmul.f32 %v896, 0.020408163
    %v2185 = vmul.f32 %v899, 0.020408163
    %v2186 = vmul.f32 %v902, 0.020408163
    %v2187 = vmul.f32 %v905, 0.020408163
    %v2188 = vmul.f32 %v908, 0.020408163
    %v2189 = vmul.f32 %v911, 0.020408163
    %v2190 = vmul.f32 %v914, 0.020408163
    %v2191 = vmul.f32 %v917, 0.020408163
    %v2192 = vmul.f32 %v920, 0.020408163
    %v2193 = vmul.f32 %v923, 0.020408163
    %v2194 = vmul.f32 %v926, 0.020408163
    %v2195 = vmul.f32 %v929, 0.020408163
    %v2196 = vmul.f32 %v932, 0.020408163
    %v2197 = vmul.f32 %v935, 0.020408163
    %v2198 = vmul.f32 %v938, 0.020408163
    %v2199 = vmul.f32 %v941, 0.020408163
    %v2200 = vmul.f32 %v944, 0.020408163
    %v2201 = vmul.f32 %v947, 0.020408163
    %v2202 = vmul.f32 %v950, 0.020408163
    %v2203 = vmul.f32 %v953, 0.020408163
    %v2204 = vmul.f32 %v956, 0.020408163
    %v2205 = vmul.f32 %v959, 0.020408163
    %v2206 = vmul.f32 %v962, 0.020408163
    %v2207 = vmul.f32 %v965, 0.020408163
    %v2208 = vmul.f32 %v968, 0.020408163
    %v2209 = vmul.f32 %v971, 0.020408163
    %v2210 = vmul.f32 %v974, 0.020408163
    %v2211 = vmul.f32 %v977, 0.020408163
    %v2212 = vmul.f32 %v980, 0.020408163
    %v2213 = vmul.f32 %v983, 0.020408163
    %v2214 = vmul.f32 %v986, 0.020408163
    %v2215 = vmul.f32 %v989, 0.020408163
    %v2216 = vmul.f32 %v992, 0.020408163
    %v2217 = vmul.f32 %v995, 0.020408163
    %v2218 = vmul.f32 %v998, 0.020408163
    %v2219 = vmul.f32 %v1001, 0.020408163
    %v2220 = vmul.f32 %v1004, 0.020408163
    %v2221 = vmul.f32 %v1007, 0.020408163
    %v2222 = vmul.f32 %v1010, 0.020408163
    %v2223 = vmul.f32 %v1013, 0.020408163
    %v2224 = vmul.f32 %v1016, 0.020408163
    %v2225 = vmul.f32 %v1019, 0.020408163
    %v2226 = vmul.f32 %v1022, 0.020408163
    %v2227 = vmul.f32 %v1025, 0.020408163
    %v2228 = vmul.f32 %v1028, 0.020408163
    %v2229 = vmul.f32 %v1031, 0.020408163
    %v2230 = vmul.f32 %v1034, 0.020408163
    %v2231 = vmul.f32 %v1037, 0.020408163
    %v2232 = vmul.f32 %v1040, 0.020408163
    %v2233 = vmul.f32 %v1043, 0.020408163
    %v2234 = vmul.f32 %v1046, 0.020408163
    %v2235 = vmul.f32 %v1049, 0.020408163
    %v2236 = vmul.f32 %v1052, 0.020408163
    %v2237 = vmul.f32 %v1055, 0.020408163
    %v2238 = vmul.f32 %v1058, 0.020408163
    %v2239 = vmul.f32 %v1061, 0.020408163
    %v2240 = vmul.f32 %v1064, 0.020408163
    %v2241 = vmul.f32 %v1067, 0.020408163
    %v2242 = vmul.f32 %v1070, 0.020408163
    %v2243 = vmul.f32 %v1073, 0.020408163
    %v2244 = vmul.f32 %v1076, 0.020408163
    %v2245 = vmul.f32 %v1079, 0.020408163
    %v2246 = vmul.f32 %v1082, 0.020408163
    %v2247 = vmul.f32 %v1085, 0.020408163
    %v2248 = vmul.f32 %v1088, 0.020408163
    %v2249 = vmul.f32 %v1091, 0.020408163
    %v2250 = vmul.f32 %v1094, 0.020408163
    %v2251 = vmul.f32 %v1097, 0.020408163
    %v2252 = vmul.f32 %v1100, 0.020408163
    %v2253 = vmul.f32 %v1103, 0.020408163
    %v2254 = vmul.f32 %v1106, 0.020408163
    %v2255 = vmul.f32 %v1109, 0.020408163
    %v2256 = vmul.f32 %v1112, 0.020408163
    %v2257 = vmul.f32 %v1115, 0.020408163
    %v2258 = vmul.f32 %v1118, 0.020408163
    %v2259 = vmul.f32 %v1121, 0.020408163
    %v2260 = vmul.f32 %v1124, 0.020408163
    %v2261 = vmul.f32 %v1127, 0.020408163
    %v2262 = vmul.f32 %v1130, 0.020408163
    %v2263 = vmul.f32 %v1133, 0.020408163
    %v2264 = vmul.f32 %v1136, 0.020408163
    %v2265 = vmul.f32 %v1139, 0.020408163
    %v2266 = vmul.f32 %v1142, 0.020408163
    %v2267 = vmul.f32 %v1145, 0.020408163
    %v2268 = vmul.f32 %v1148, 0.020408163
    %v2269 = vmul.f32 %v1151, 0.020408163
    %v2270 = vmul.f32 %v1154, 0.020408163
    %v2271 = vmul.f32 %v1157, 0.020408163
    %v2272 = vmul.f32 %v1160, 0.020408163
    %v2273 = vmul.f32 %v1163, 0.020408163
    %v2274 = vmul.f32 %v1166, 0.020408163
    %v2275 = vmul.f32 %v1169, 0.020408163
    %v2276 = vmul.f32 %v1172, 0.020408163
    %v2277 = vmul.f32 %v1175, 0.020408163
    %v2278 = vmul.f32 %v1178, 0.020408163
    %v2279 = vmul.f32 %v1181, 0.020408163
    %v2280 = vmul.f32 %v1184, 0.020408163
    %v2281 = vmul.f32 %v1187, 0.020408163
    %v2282 = vmul.f32 %v1190, 0.020408163
    %v2283 = vmul.f32 %v1193, 0.020408163
    %v2284 = vmul.f32 %v1196, 0.020408163
    %v2285 = vmul.f32 %v1199, 0.020408163
    %v2286 = vmul.f32 %v1202, 0.020408163
    %v2287 = vmul.f32 %v1205, 0.020408163
    %v2288 = vmul.f32 %v1208, 0.020408163
    %v2289 = vmul.f32 %v1211, 0.020408163
    %v2290 = vmul.f32 %v1214, 0.020408163
    %v2291 = vmul.f32 %v1217, 0.020408163
    %v2292 = vmul.f32 %v1220, 0.020408163
    %v2293 = vmul.f32 %v1223, 0.020408163
    %v2294 = vmul.f32 %v1226, 0.020408163
    %v2295 = vmul.f32 %v1229, 0.020408163
    %v2296 = vmul.f32 %v1232, 0.020408163
    %v2297 = vmul.f32 %v1235, 0.020408163
    %v2298 = vmul.f32 %v1238, 0.020408163
    %v2299 = vmul.f32 %v1241, 0.020408163
    %v2300 = vmul.f32 %v1244, 0.020408163
    %v2301 = vmul.f32 %v1247, 0.020408163
    %v2302 = vmul.f32 %v1250, 0.020408163
    %v2303 = vmul.f32 %v1253, 0.020408163
    %v2304 = vmul.f32 %v1256, 0.020408163
    %v2305 = vmul.f32 %v1259, 0.020408163
    %v2306 = vmul.f32 %v1262, 0.020408163
    %v2307 = vmul.f32 %v1265, 0.020408163
    %v2308 = vmul.f32 %v1268, 0.020408163
    %v2309 = vmul.f32 %v1271, 0.020408163
    %v2310 = vmul.f32 %v1274, 0.020408163
    %v2311 = vmul.f32 %v1277, 0.020408163
    %v2312 = vmul.f32 %v1280, 0.020408163
    %v2313 = vmul.f32 %v1283, 0.020408163
    %v2314 = vmul.f32 %v1286, 0.020408163
    %v2315 = vmul.f32 %v1289, 0.020408163
    %v2316 = vmul.f32 %v1292, 0.020408163
    %v2317 = vmul.f32 %v1295, 0.020408163
    %v2318 = vmul.f32 %v1298, 0.020408163
    %v2319 = vmul.f32 %v1301, 0.020408163
    %v2320 = vmul.f32 %v1304, 0.020408163
    %v2321 = vmul.f32 %v1307, 0.020408163
    %v2322 = vmul.f32 %v1310, 0.020408163
    %v2323 = vmul.f32 %v1313, 0.020408163
    %v2324 = vmul.f32 %v1316, 0.020408163
    %v2325 = vmul.f32 %v1319, 0.020408163
    %v2326 = vmul.f32 %v1322, 0.020408163
    %v2327 = vmul.f32 %v1325, 0.020408163
    %v2328 = vmul.f32 %v1328, 0.020408163
    %v2329 = vmul.f32 %v1331, 0.020408163
    %v2330 = vmul.f32 %v1334, 0.020408163
    %v2331 = vmul.f32 %v1337, 0.020408163
    %v2332 = vmul.f32 %v1340, 0.020408163
    %v2333 = vmul.f32 %v1343, 0.020408163
    %v2334 = vmul.f32 %v1346, 0.020408163
    %v2335 = vmul.f32 %v1349, 0.020408163
    %v2336 = vmul.f32 %v1352, 0.020408163
    %v2337 = vmul.f32 %v1355, 0.020408163
    %v2338 = vmul.f32 %v1358, 0.020408163
    %v2339 = vmul.f32 %v1361, 0.020408163
    %v2340 = vmul.f32 %v1364, 0.020408163
    %v2341 = vmul.f32 %v1367, 0.020408163
    %v2342 = vmul.f32 %v1370, 0.020408163
    %v2343 = vmul.f32 %v1373, 0.020408163
    %v2344 = vmul.f32 %v1376, 0.020408163
    %v2345 = vmul.f32 %v1379, 0.020408163
    %v2346 = vmul.f32 %v1382, 0.020408163
    %v2347 = vmul.f32 %v1385, 0.020408163
    %v2348 = vmul.f32 %v1388, 0.020408163
    %v2349 = vmul.f32 %v1391, 0.020408163
    %v2350 = vmul.f32 %v1394, 0.020408163
    %v2351 = vmul.f32 %v1397, 0.020408163
    %v2352 = vmul.f32 %v1400, 0.020408163
    %v2353 = vmul.f32 %v1403, 0.020408163
    %v2354 = vmul.f32 %v1406, 0.020408163
    %v2355 = vmul.f32 %v1409, 0.020408163
    %v2356 = vmul.f32 %v1412, 0.020408163
    %v2357 = vmul.f32 %v1415, 0.020408163
    %v2358 = vmul.f32 %v1418, 0.020408163
    %v2359 = vmul.f32 %v1421, 0.020408163
    %v2360 = vmul.f32 %v1424, 0.020408163
    %v2361 = vmul.f32 %v1427, 0.020408163
    %v2362 = vmul.f32 %v1430, 0.020408163
    %v2363 = vmul.f32 %v1433, 0.020408163
    %v2364 = vmul.f32 %v1436, 0.020408163
    %v2365 = vmul.f32 %v1439, 0.020408163
    %v2366 = vmul.f32 %v1442, 0.020408163
    %v2367 = vmul.f32 %v1445, 0.020408163
    %v2368 = vmul.f32 %v1448, 0.020408163
    %v2369 = vmul.f32 %v1451, 0.020408163
    %v2370 = vmul.f32 %v1454, 0.020408163
    %v2371 = vmul.f32 %v1457, 0.020408163
    %v2372 = vmul.f32 %v1460, 0.020408163
    %v2373 = vmul.f32 %v1463, 0.020408163
    %v2374 = vmul.f32 %v1466, 0.020408163
    %v2375 = vmul.f32 %v1469, 0.020408163
    %v2376 = vmul.f32 %v1472, 0.020408163
    %v2377 = vmul.f32 %v1475, 0.020408163
    %v2378 = vmul.f32 %v1478, 0.020408163
    %v2379 = vmul.f32 %v1481, 0.020408163
    %v2380 = vmul.f32 %v1484, 0.020408163
    %v2381 = vmul.f32 %v1487, 0.020408163
    %v2382 = vmul.f32 %v1490, 0.020408163
    %v2383 = vmul.f32 %v1493, 0.020408163
    %v2384 = vmul.f32 %v1496, 0.020408163
    %v2385 = vmul.f32 %v1499, 0.020408163
    %v2386 = vmul.f32 %v1502, 0.020408163
    %v2387 = vmul.f32 %v1505, 0.020408163
    %v2388 = vmul.f32 %v1508, 0.020408163
    %v2389 = vmul.f32 %v1511, 0.020408163
    %v2390 = vmul.f32 %v1514, 0.020408163
    %v2391 = vmul.f32 %v1517, 0.020408163
    %v2392 = vmul.f32 %v1520, 0.020408163
    %v2393 = vmul.f32 %v1523, 0.020408163
    %v2394 = vmul.f32 %v1526, 0.020408163
    %v2395 = vmul.f32 %v1529, 0.020408163
    %v2396 = vmul.f32 %v1532, 0.020408163
    %v2397 = vmul.f32 %v1535, 0.020408163
    %v2398 = vmul.f32 %v1538, 0.020408163
    %v2399 = vmul.f32 %v1541, 0.020408163
    %v2400 = vmul.f32 %v1544, 0.020408163
    %v2401 = vmul.f32 %v1547, 0.020408163
    %v2402 = vmul.f32 %v1550, 0.020408163
    %v2403 = vmul.f32 %v1553, 0.020408163
    %v2404 = vmul.f32 %v1556, 0.020408163
    %v2405 = vmul.f32 %v1559, 0.020408163
    %v2406 = vmul.f32 %v1562, 0.020408163
    %v2407 = vmul.f32 %v1565, 0.020408163
    %v2408 = vmul.f32 %v1568, 0.020408163
    %v2409 = vmul.f32 %v1571, 0.020408163
    %v2410 = vmul.f32 %v1574, 0.020408163
    %v2411 = vmul.f32 %v1577, 0.020408163
    %v2412 = vmul.f32 %v1580, 0.020408163
    %v2413 = vmul.f32 %v1583, 0.020408163
    %v2414 = vmul.f32 %v1586, 0.020408163
    %v2415 = vmul.f32 %v1589, 0.020408163
    %v2416 = vmul.f32 %v1592, 0.020408163
    %v2417 = vmul.f32 %v1595, 0.020408163
    %v2418 = vmul.f32 %v1598, 0.020408163
    %v2419 = vmul.f32 %v1601, 0.020408163
    %v2420 = vmul.f32 %v1604, 0.020408163
    %v2421 = vmul.f32 %v1607, 0.020408163
    %v2422 = vmul.f32 %v1610, 0.020408163
    %v2423 = vmul.f32 %v1613, 0.020408163
    %v2424 = vmul.f32 %v1616, 0.020408163
    %v2425 = vmul.f32 %v1619, 0.020408163
    %v2426 = vmul.f32 %v1622, 0.020408163
    %v2427 = vmul.f32 %v1625, 0.020408163
    %v2428 = vmul.f32 %v1628, 0.020408163
    %v2429 = vmul.f32 %v1631, 0.020408163
    %v2430 = vmul.f32 %v1634, 0.020408163
    %v2431 = vmul.f32 %v1637, 0.020408163
    %v2432 = vmul.f32 %v1640, 0.020408163
    %v2433 = vmul.f32 %v1643, 0.020408163
    %v2434 = vmul.f32 %v1646, 0.020408163
    %v2435 = vmul.f32 %v1649, 0.020408163
    %v2436 = vmul.f32 %v1652, 0.020408163
    %v2437 = vmul.f32 %v1655, 0.020408163
    %v2438 = vmul.f32 %v1658, 0.020408163
    %v2439 = vmul.f32 %v1661, 0.020408163
    %v2440 = vmul.f32 %v1664, 0.020408163
    %v2441 = vmul.f32 %v1667, 0.020408163
    %v2442 = vmul.f32 %v1670, 0.020408163
    %v2443 = vmul.f32 %v1673, 0.020408163
    %v2444 = vmul.f32 %v1676, 0.020408163
    %v2445 = vmul.f32 %v1679, 0.020408163
    %v2446 = vmul.f32 %v1682, 0.020408163
    %v2447 = vmul.f32 %v1685, 0.020408163
    %v2448 = vmul.f32 %v1688, 0.020408163
    %v2449 = vmul.f32 %v1691, 0.020408163
    %v2450 = vmul.f32 %v1694, 0.020408163
    %v2451 = vmul.f32 %v1697, 0.020408163
    %v2452 = vmul.f32 %v1700, 0.020408163
    %v2453 = vmul.f32 %v1703, 0.020408163
    %v2454 = vmul.f32 %v1706, 0.020408163
    %v2455 = vmul.f32 %v1709, 0.020408163
    %v2456 = vmul.f32 %v1712, 0.020408163
    %v2457 = vmul.f32 %v1715, 0.020408163
    %v2458 = vmul.f32 %v1718, 0.020408163
    %v2459 = vmul.f32 %v1721, 0.020408163
    %v2460 = vmul.f32 %v1724, 0.020408163
    %v2461 = vmul.f32 %v1727, 0.020408163
    %v2462 = vmul.f32 %v1730, 0.020408163
    %v2463 = vmul.f32 %v1733, 0.020408163
    %v2464 = vmul.f32 %v1736, 0.020408163
    %v2465 = vmul.f32 %v1739, 0.020408163
    %v2466 = vmul.f32 %v1742, 0.020408163
    %v2467 = vmul.f32 %v1745, 0.020408163
    %v2468 = vmul.f32 %v1748, 0.020408163
    %v2469 = vmul.f32 %v1751, 0.020408163
    %v2470 = vmul.f32 %v1754, 0.020408163
    %v2471 = vmul.f32 %v1757, 0.020408163
    %v2472 = vmul.f32 %v1760, 0.020408163
    %v2473 = vmul.f32 %v1763, 0.020408163
    %v2474 = vmul.f32 %v1766, 0.020408163
    %v2475 = vmul.f32 %v1769, 0.020408163
    %v2476 = vmul.f32 %v1772, 0.020408163
    %v2477 = vmul.f32 %v1775, 0.020408163
    %v2478 = vmul.f32 %v1778, 0.020408163
    %v2479 = vmul.f32 %v1781, 0.020408163
    %v2480 = vmul.f32 %v1784, 0.020408163
    %v2481 = vmul.f32 %v1787, 0.020408163
    %v2482 = vmul.f32 %v1790, 0.020408163
    %v2483 = vmul.f32 %v1793, 0.020408163
    %v2484 = vmul.f32 %v1796, 0.020408163
    %v2485 = vmul.f32 %v1799, 0.020408163
    %v2486 = vmul.f32 %v1802, 0.020408163
    %v2487 = vmul.f32 %v1805, 0.020408163
    %v2488 = vmul.f32 %v1808, 0.020408163
    %v2489 = vmul.f32 %v1811, 0.020408163
    %v2490 = vmul.f32 %v1814, 0.020408163
    %v2491 = vmul.f32 %v1817, 0.020408163
    %v2492 = vmul.f32 %v1820, 0.020408163
    %v2493 = vmul.f32 %v1823, 0.020408163
    %v2494 = vmul.f32 %v1826, 0.020408163
    %v2495 = vmul.f32 %v1829, 0.020408163
    %v2496 = vmul.f32 %v1832, 0.020408163
    %v2497 = vmul.f32 %v1835, 0.020408163
    %v2498 = vmul.f32 %v1838, 0.020408163
    %v2499 = vmul.f32 %v1841, 0.020408163
    %v2500 = vmul.f32 %v1844, 0.020408163
    %v2501 = vmul.f32 %v1847, 0.020408163
    %v2502 = vmul.f32 %v1850, 0.020408163
    %v2503 = vmul.f32 %v1853, 0.020408163
    %v2504 = vmul.f32 %v1856, 0.020408163
    %v2505 = vmul.f32 %v1859, 0.020408163
    %v2506 = vmul.f32 %v1862, 0.020408163
    %v2507 = vmul.f32 %v1865, 0.020408163
    %v2508 = vmul.f32 %v1868, 0.020408163
    %v2509 = vmul.f32 %v1871, 0.020408163
    %v2510 = vmul.f32 %v1874, 0.020408163
    %v2511 = vmul.f32 %v1877, 0.020408163
    %v2512 = vmul.f32 %v1880, 0.020408163
    %v2513 = vmul.f32 %v1883, 0.020408163
    %v2514 = vmul.f32 %v1886, 0.020408163
    %v2515 = vmul.f32 %v1889, 0.020408163
    %v2516 = vmul.f32 %v1892, 0.020408163
    %v2517 = vmul.f32 %v1895, 0.020408163
    %v2518 = vmul.f32 %v1898, 0.020408163
    %v2519 = vmul.f32 %v1901, 0.020408163
    %v2520 = vmul.f32 %v1904, 0.020408163
    %v2521 = vmul.f32 %v1907, 0.020408163
    %v2522 = vmul.f32 %v1910, 0.020408163
    %v2523 = vmul.f32 %v1913, 0.020408163
    %v2524 = vmul.f32 %v1916, 0.020408163
    %v2525 = vmul.f32 %v1919, 0.020408163
    %v2526 = vmul.f32 %v1922, 0.020408163
    %v2527 = vmul.f32 %v1925, 0.020408163
    %v2528 = vmul.f32 %v1928, 0.020408163
    %v2529 = vmul.f32 %v1931, 0.020408163
    %v2530 = vmul.f32 %v1934, 0.020408163
    %v2531 = vmul.f32 %v1937, 0.020408163
    %v2532 = vmul.f32 %v1940, 0.020408163
    %v2533 = vmul.f32 %v1943, 0.020408163
    %v2534 = vmul.f32 %v1946, 0.020408163
    %v2535 = vmul.f32 %v1949, 0.020408163
    %v2536 = vmul.f32 %v1952, 0.020408163
    %v2537 = vmul.f32 %v1955, 0.020408163
    %v2538 = vmul.f32 %v1958, 0.020408163
    %v2539 = vmul.f32 %v1961, 0.020408163
    %v2540 = vmul.f32 %v1964, 0.020408163
    %v2541 = vmul.f32 %v1967, 0.020408163
    %v2542 = vmul.f32 %v1970, 0.020408163
    %v2543 = vmul.f32 %v1973, 0.020408163
    %v2544 = vmul.f32 %v1976, 0.020408163
    %v2545 = vmul.f32 %v1979, 0.020408163
    %v2546 = vmul.f32 %v1982, 0.020408163
    %v2547 = vmul.f32 %v1985, 0.020408163
    %v2548 = vmul.f32 %v1988, 0.020408163
    %v2549 = vmul.f32 %v1991, 0.020408163
    %v2550 = vmul.f32 %v1994, 0.020408163
    %v2551 = vmul.f32 %v1997, 0.020408163
    %v2552 = vmul.f32 %v2000, 0.020408163
    %v2553 = vmul.f32 %v2003, 0.020408163
    %v2554 = vmul.f32 %v2006, 0.020408163
    %v2555 = vmul.f32 %v2009, 0.020408163
    %v2556 = vmul.f32 %v2012, 0.020408163
    %v2557 = vmul.f32 %v2015, 0.020408163
    %v2558 = vmul.f32 %v2018, 0.020408163
    %v2559 = vmul.f32 %v2021, 0.020408163
    %v2560 = vmul.f32 %v2024, 0.020408163
    %v2561 = vmul.f32 %v2027, 0.020408163
    %v2562 = vmul.f32 %v2030, 0.020408163
    %v2563 = vmul.f32 %v2033, 0.020408163
    %v2564 = vmul.f32 %v2036, 0.020408163
    %v2565 = vmul.f32 %v2039, 0.020408163
    %v2566 = vmul.f32 %v2042, 0.020408163
    %v2567 = vmul.f32 %v2045, 0.020408163
    %v2568 = vmul.f32 %v2048, 0.020408163
    %v2569 = vmul.f32 %v2051, 0.020408163
    %v2570 = vmul.f32 %v2054, 0.020408163
    %v2571 = vmul.f32 %v2057, 0.020408163
    %v2572 = vmul.f32 %v2060, 0.020408163
    %v2573 = vld [vmem:[%s1] sm:$0xff]
    %v2574 = vld [vmem:[%s1 + $0x8] sm:$0xff]
    %v2575 = vld [vmem:[%s1 + $0x10] sm:$0xff]
    %v2576 = vld [vmem:[%s1 + $0x18] sm:$0xff]
    %v3089 = vlaneseq
    %v3090 = vand.u32 %v3089, 127
    %v3091 = vperm.slane %v2061, %v3090
    %v3092 = vadd.s32 %v3090, 4294967288
    %v3093 = vperm.slane %v2062, %v3092
    %vm3094 = vcmask 130112
    %v3095 = vsel %vm3094, %v3093, %v3091
    %v3096 = vadd.s32 %v3090, 4294967280
    %v3097 = vperm.slane %v2063, %v3096
    %vm3098 = vcmask 195712
    %v3099 = vsel %vm3098, %v3097, %v3095
    %v3100 = vadd.s32 %v3090, 4294967272
    %v3101 = vperm.slane %v2064, %v3100
    %vm3102 = vcmask 261312
    %v3103 = vsel %vm3102, %v3101, %v3099
    %v3104 = vadd.s32 %v3090, 4294967264
    %v3105 = vperm.slane %v2065, %v3104
    %vm3106 = vcmask 326912
    %v3107 = vsel %vm3106, %v3105, %v3103
    %v3108 = vadd.s32 %v3090, 4294967256
    %v3109 = vperm.slane %v2066, %v3108
    %vm3110 = vcmask 392512
    %v3111 = vsel %vm3110, %v3109, %v3107
    %v3112 = vadd.s32 %v3090, 4294967248
    %v3113 = vperm.slane %v2067, %v3112
    %vm3114 = vcmask 458112
    %v3115 = vsel %vm3114, %v3113, %v3111
    %v3116 = vadd.s32 %v3090, 4294967240
    %v3117 = vperm.slane %v2068, %v3116
    %vm3118 = vcmask 523712
    %v3119 = vsel %vm3118, %v3117, %v3115
    %v3120 = vadd.s32 %v3090, 4294967232
    %v3121 = vperm.slane %v2069, %v3120
    %vm3122 = vcmask 589312
    %v3123 = vsel %vm3122, %v3121, %v3119
    %v3124 = vadd.s32 %v3090, 4294967224
    %v3125 = vperm.slane %v2070, %v3124
    %vm3126 = vcmask 654912
    %v3127 = vsel %vm3126, %v3125, %v3123
    %v3128 = vadd.s32 %v3090, 4294967216
    %v3129 = vperm.slane %v2071, %v3128
    %vm3130 = vcmask 720512
    %v3131 = vsel %vm3130, %v3129, %v3127
    %v3132 = vadd.s32 %v3090, 4294967208
    %v3133 = vperm.slane %v2072, %v3132
    %vm3134 = vcmask 786112
    %v3135 = vsel %vm3134, %v3133, %v3131
    %v3136 = vadd.s32 %v3090, 4294967200
    %v3137 = vperm.slane %v2073, %v3136
    %vm3138 = vcmask 851712
    %v3139 = vsel %vm3138, %v3137, %v3135
    %v3140 = vadd.s32 %v3090, 4294967192
    %v3141 = vperm.slane %v2074, %v3140
    %vm3142 = vcmask 917312
    %v3143 = vsel %vm3142, %v3141, %v3139
    %v3144 = vadd.s32 %v3090, 4294967184
    %v3145 = vperm.slane %v2075, %v3144
    %vm3146 = vcmask 982912
    %v3147 = vsel %vm3146, %v3145, %v3143
    %v3148 = vadd.s32 %v3090, 4294967176
    %v3149 = vperm.slane %v2076, %v3148
    %vm3150 = vcmask 1048512
    %v3151 = vsel %vm3150, %v3149, %v3147
    %v3152 = vperm.slane %v2077, %v3090
    %v3153 = vperm.slane %v2078, %v3092
    %v3154 = vsel %vm3094, %v3153, %v3152
    %v3155 = vperm.slane %v2079, %v3096
    %v3156 = vsel %vm3098, %v3155, %v3154
    %v3157 = vperm.slane %v2080, %v3100
    %v3158 = vsel %vm3102, %v3157, %v3156
    %v3159 = vperm.slane %v2081, %v3104
    %v3160 = vsel %vm3106, %v3159, %v3158
    %v3161 = vperm.slane %v2082, %v3108
    %v3162 = vsel %vm3110, %v3161, %v3160
    %v3163 = vperm.slane %v2083, %v3112
    %v3164 = vsel %vm3114, %v3163, %v3162
    %v3165 = vperm.slane %v2084, %v3116
    %v3166 = vsel %vm3118, %v3165, %v3164
    %v3167 = vperm.slane %v2085, %v3120
    %v3168 = vsel %vm3122, %v3167, %v3166
    %v3169 = vperm.slane %v2086, %v3124
    %v3170 = vsel %vm3126, %v3169, %v3168
    %v3171 = vperm.slane %v2087, %v3128
    %v3172 = vsel %vm3130, %v3171, %v3170
    %v3173 = vperm.slane %v2088, %v3132
    %v3174 = vsel %vm3134, %v3173, %v3172
    %v3175 = vperm.slane %v2089, %v3136
    %v3176 = vsel %vm3138, %v3175, %v3174
    %v3177 = vperm.slane %v2090, %v3140
    %v3178 = vsel %vm3142, %v3177, %v3176
    %v3179 = vperm.slane %v2091, %v3144
    %v3180 = vsel %vm3146, %v3179, %v3178
    %v3181 = vperm.slane %v2092, %v3148
    %v3182 = vsel %vm3150, %v3181, %v3180
    %v3183 = vperm.slane %v2093, %v3090
    %v3184 = vperm.slane %v2094, %v3092
    %v3185 = vsel %vm3094, %v3184, %v3183
    %v3186 = vperm.slane %v2095, %v3096
    %v3187 = vsel %vm3098, %v3186, %v3185
    %v3188 = vperm.slane %v2096, %v3100
    %v3189 = vsel %vm3102, %v3188, %v3187
    %v3190 = vperm.slane %v2097, %v3104
    %v3191 = vsel %vm3106, %v3190, %v3189
    %v3192 = vperm.slane %v2098, %v3108
    %v3193 = vsel %vm3110, %v3192, %v3191
    %v3194 = vperm.slane %v2099, %v3112
    %v3195 = vsel %vm3114, %v3194, %v3193
    %v3196 = vperm.slane %v2100, %v3116
    %v3197 = vsel %vm3118, %v3196, %v3195
    %v3198 = vperm.slane %v2101, %v3120
    %v3199 = vsel %vm3122, %v3198, %v3197
    %v3200 = vperm.slane %v2102, %v3124
    %v3201 = vsel %vm3126, %v3200, %v3199
    %v3202 = vperm.slane %v2103, %v3128
    %v3203 = vsel %vm3130, %v3202, %v3201
    %v3204 = vperm.slane %v2104, %v3132
    %v3205 = vsel %vm3134, %v3204, %v3203
    %v3206 = vperm.slane %v2105, %v3136
    %v3207 = vsel %vm3138, %v3206, %v3205
    %v3208 = vperm.slane %v2106, %v3140
    %v3209 = vsel %vm3142, %v3208, %v3207
    %v3210 = vperm.slane %v2107, %v3144
    %v3211 = vsel %vm3146, %v3210, %v3209
    %v3212 = vperm.slane %v2108, %v3148
    %v3213 = vsel %vm3150, %v3212, %v3211
    %v3214 = vperm.slane %v2109, %v3090
    %v3215 = vperm.slane %v2110, %v3092
    %v3216 = vsel %vm3094, %v3215, %v3214
    %v3217 = vperm.slane %v2111, %v3096
    %v3218 = vsel %vm3098, %v3217, %v3216
    %v3219 = vperm.slane %v2112, %v3100
    %v3220 = vsel %vm3102, %v3219, %v3218
    %v3221 = vperm.slane %v2113, %v3104
    %v3222 = vsel %vm3106, %v3221, %v3220
    %v3223 = vperm.slane %v2114, %v3108
    %v3224 = vsel %vm3110, %v3223, %v3222
    %v3225 = vperm.slane %v2115, %v3112
    %v3226 = vsel %vm3114, %v3225, %v3224
    %v3227 = vperm.slane %v2116, %v3116
    %v3228 = vsel %vm3118, %v3227, %v3226
    %v3229 = vperm.slane %v2117, %v3120
    %v3230 = vsel %vm3122, %v3229, %v3228
    %v3231 = vperm.slane %v2118, %v3124
    %v3232 = vsel %vm3126, %v3231, %v3230
    %v3233 = vperm.slane %v2119, %v3128
    %v3234 = vsel %vm3130, %v3233, %v3232
    %v3235 = vperm.slane %v2120, %v3132
    %v3236 = vsel %vm3134, %v3235, %v3234
    %v3237 = vperm.slane %v2121, %v3136
    %v3238 = vsel %vm3138, %v3237, %v3236
    %v3239 = vperm.slane %v2122, %v3140
    %v3240 = vsel %vm3142, %v3239, %v3238
    %v3241 = vperm.slane %v2123, %v3144
    %v3242 = vsel %vm3146, %v3241, %v3240
    %v3243 = vperm.slane %v2124, %v3148
    %v3244 = vsel %vm3150, %v3243, %v3242
    %v3245 = vperm.slane %v2125, %v3090
    %v3246 = vperm.slane %v2126, %v3092
    %v3247 = vsel %vm3094, %v3246, %v3245
    %v3248 = vperm.slane %v2127, %v3096
    %v3249 = vsel %vm3098, %v3248, %v3247
    %v3250 = vperm.slane %v2128, %v3100
    %v3251 = vsel %vm3102, %v3250, %v3249
    %v3252 = vperm.slane %v2129, %v3104
    %v3253 = vsel %vm3106, %v3252, %v3251
    %v3254 = vperm.slane %v2130, %v3108
    %v3255 = vsel %vm3110, %v3254, %v3253
    %v3256 = vperm.slane %v2131, %v3112
    %v3257 = vsel %vm3114, %v3256, %v3255
    %v3258 = vperm.slane %v2132, %v3116
    %v3259 = vsel %vm3118, %v3258, %v3257
    %v3260 = vperm.slane %v2133, %v3120
    %v3261 = vsel %vm3122, %v3260, %v3259
    %v3262 = vperm.slane %v2134, %v3124
    %v3263 = vsel %vm3126, %v3262, %v3261
    %v3264 = vperm.slane %v2135, %v3128
    %v3265 = vsel %vm3130, %v3264, %v3263
    %v3266 = vperm.slane %v2136, %v3132
    %v3267 = vsel %vm3134, %v3266, %v3265
    %v3268 = vperm.slane %v2137, %v3136
    %v3269 = vsel %vm3138, %v3268, %v3267
    %v3270 = vperm.slane %v2138, %v3140
    %v3271 = vsel %vm3142, %v3270, %v3269
    %v3272 = vperm.slane %v2139, %v3144
    %v3273 = vsel %vm3146, %v3272, %v3271
    %v3274 = vperm.slane %v2140, %v3148
    %v3275 = vsel %vm3150, %v3274, %v3273
    %v3276 = vperm.slane %v2141, %v3090
    %v3277 = vperm.slane %v2142, %v3092
    %v3278 = vsel %vm3094, %v3277, %v3276
    %v3279 = vperm.slane %v2143, %v3096
    %v3280 = vsel %vm3098, %v3279, %v3278
    %v3281 = vperm.slane %v2144, %v3100
    %v3282 = vsel %vm3102, %v3281, %v3280
    %v3283 = vperm.slane %v2145, %v3104
    %v3284 = vsel %vm3106, %v3283, %v3282
    %v3285 = vperm.slane %v2146, %v3108
    %v3286 = vsel %vm3110, %v3285, %v3284
    %v3287 = vperm.slane %v2147, %v3112
    %v3288 = vsel %vm3114, %v3287, %v3286
    %v3289 = vperm.slane %v2148, %v3116
    %v3290 = vsel %vm3118, %v3289, %v3288
    %v3291 = vperm.slane %v2149, %v3120
    %v3292 = vsel %vm3122, %v3291, %v3290
    %v3293 = vperm.slane %v2150, %v3124
    %v3294 = vsel %vm3126, %v3293, %v3292
    %v3295 = vperm.slane %v2151, %v3128
    %v3296 = vsel %vm3130, %v3295, %v3294
    %v3297 = vperm.slane %v2152, %v3132
    %v3298 = vsel %vm3134, %v3297, %v3296
    %v3299 = vperm.slane %v2153, %v3136
    %v3300 = vsel %vm3138, %v3299, %v3298
    %v3301 = vperm.slane %v2154, %v3140
    %v3302 = vsel %vm3142, %v3301, %v3300
    %v3303 = vperm.slane %v2155, %v3144
    %v3304 = vsel %vm3146, %v3303, %v3302
    %v3305 = vperm.slane %v2156, %v3148
    %v3306 = vsel %vm3150, %v3305, %v3304
    %v3307 = vperm.slane %v2157, %v3090
    %v3308 = vperm.slane %v2158, %v3092
    %v3309 = vsel %vm3094, %v3308, %v3307
    %v3310 = vperm.slane %v2159, %v3096
    %v3311 = vsel %vm3098, %v3310, %v3309
    %v3312 = vperm.slane %v2160, %v3100
    %v3313 = vsel %vm3102, %v3312, %v3311
    %v3314 = vperm.slane %v2161, %v3104
    %v3315 = vsel %vm3106, %v3314, %v3313
    %v3316 = vperm.slane %v2162, %v3108
    %v3317 = vsel %vm3110, %v3316, %v3315
    %v3318 = vperm.slane %v2163, %v3112
    %v3319 = vsel %vm3114, %v3318, %v3317
    %v3320 = vperm.slane %v2164, %v3116
    %v3321 = vsel %vm3118, %v3320, %v3319
    %v3322 = vperm.slane %v2165, %v3120
    %v3323 = vsel %vm3122, %v3322, %v3321
    %v3324 = vperm.slane %v2166, %v3124
    %v3325 = vsel %vm3126, %v3324, %v3323
    %v3326 = vperm.slane %v2167, %v3128
    %v3327 = vsel %vm3130, %v3326, %v3325
    %v3328 = vperm.slane %v2168, %v3132
    %v3329 = vsel %vm3134, %v3328, %v3327
    %v3330 = vperm.slane %v2169, %v3136
    %v3331 = vsel %vm3138, %v3330, %v3329
    %v3332 = vperm.slane %v2170, %v3140
    %v3333 = vsel %vm3142, %v3332, %v3331
    %v3334 = vperm.slane %v2171, %v3144
    %v3335 = vsel %vm3146, %v3334, %v3333
    %v3336 = vperm.slane %v2172, %v3148
    %v3337 = vsel %vm3150, %v3336, %v3335
    %v3338 = vperm.slane %v2173, %v3090
    %v3339 = vperm.slane %v2174, %v3092
    %v3340 = vsel %vm3094, %v3339, %v3338
    %v3341 = vperm.slane %v2175, %v3096
    %v3342 = vsel %vm3098, %v3341, %v3340
    %v3343 = vperm.slane %v2176, %v3100
    %v3344 = vsel %vm3102, %v3343, %v3342
    %v3345 = vperm.slane %v2177, %v3104
    %v3346 = vsel %vm3106, %v3345, %v3344
    %v3347 = vperm.slane %v2178, %v3108
    %v3348 = vsel %vm3110, %v3347, %v3346
    %v3349 = vperm.slane %v2179, %v3112
    %v3350 = vsel %vm3114, %v3349, %v3348
    %v3351 = vperm.slane %v2180, %v3116
    %v3352 = vsel %vm3118, %v3351, %v3350
    %v3353 = vperm.slane %v2181, %v3120
    %v3354 = vsel %vm3122, %v3353, %v3352
    %v3355 = vperm.slane %v2182, %v3124
    %v3356 = vsel %vm3126, %v3355, %v3354
    %v3357 = vperm.slane %v2183, %v3128
    %v3358 = vsel %vm3130, %v3357, %v3356
    %v3359 = vperm.slane %v2184, %v3132
    %v3360 = vsel %vm3134, %v3359, %v3358
    %v3361 = vperm.slane %v2185, %v3136
    %v3362 = vsel %vm3138, %v3361, %v3360
    %v3363 = vperm.slane %v2186, %v3140
    %v3364 = vsel %vm3142, %v3363, %v3362
    %v3365 = vperm.slane %v2187, %v3144
    %v3366 = vsel %vm3146, %v3365, %v3364
    %v3367 = vperm.slane %v2188, %v3148
    %v3368 = vsel %vm3150, %v3367, %v3366
    %v3369 = vperm.slane %v2189, %v3090
    %v3370 = vperm.slane %v2190, %v3092
    %v3371 = vsel %vm3094, %v3370, %v3369
    %v3372 = vperm.slane %v2191, %v3096
    %v3373 = vsel %vm3098, %v3372, %v3371
    %v3374 = vperm.slane %v2192, %v3100
    %v3375 = vsel %vm3102, %v3374, %v3373
    %v3376 = vperm.slane %v2193, %v3104
    %v3377 = vsel %vm3106, %v3376, %v3375
    %v3378 = vperm.slane %v2194, %v3108
    %v3379 = vsel %vm3110, %v3378, %v3377
    %v3380 = vperm.slane %v2195, %v3112
    %v3381 = vsel %vm3114, %v3380, %v3379
    %v3382 = vperm.slane %v2196, %v3116
    %v3383 = vsel %vm3118, %v3382, %v3381
    %v3384 = vperm.slane %v2197, %v3120
    %v3385 = vsel %vm3122, %v3384, %v3383
    %v3386 = vperm.slane %v2198, %v3124
    %v3387 = vsel %vm3126, %v3386, %v3385
    %v3388 = vperm.slane %v2199, %v3128
    %v3389 = vsel %vm3130, %v3388, %v3387
    %v3390 = vperm.slane %v2200, %v3132
    %v3391 = vsel %vm3134, %v3390, %v3389
    %v3392 = vperm.slane %v2201, %v3136
    %v3393 = vsel %vm3138, %v3392, %v3391
    %v3394 = vperm.slane %v2202, %v3140
    %v3395 = vsel %vm3142, %v3394, %v3393
    %v3396 = vperm.slane %v2203, %v3144
    %v3397 = vsel %vm3146, %v3396, %v3395
    %v3398 = vperm.slane %v2204, %v3148
    %v3399 = vsel %vm3150, %v3398, %v3397
    %v3400 = vperm.slane %v2205, %v3090
    %v3401 = vperm.slane %v2206, %v3092
    %v3402 = vsel %vm3094, %v3401, %v3400
    %v3403 = vperm.slane %v2207, %v3096
    %v3404 = vsel %vm3098, %v3403, %v3402
    %v3405 = vperm.slane %v2208, %v3100
    %v3406 = vsel %vm3102, %v3405, %v3404
    %v3407 = vperm.slane %v2209, %v3104
    %v3408 = vsel %vm3106, %v3407, %v3406
    %v3409 = vperm.slane %v2210, %v3108
    %v3410 = vsel %vm3110, %v3409, %v3408
    %v3411 = vperm.slane %v2211, %v3112
    %v3412 = vsel %vm3114, %v3411, %v3410
    %v3413 = vperm.slane %v2212, %v3116
    %v3414 = vsel %vm3118, %v3413, %v3412
    %v3415 = vperm.slane %v2213, %v3120
    %v3416 = vsel %vm3122, %v3415, %v3414
    %v3417 = vperm.slane %v2214, %v3124
    %v3418 = vsel %vm3126, %v3417, %v3416
    %v3419 = vperm.slane %v2215, %v3128
    %v3420 = vsel %vm3130, %v3419, %v3418
    %v3421 = vperm.slane %v2216, %v3132
    %v3422 = vsel %vm3134, %v3421, %v3420
    %v3423 = vperm.slane %v2217, %v3136
    %v3424 = vsel %vm3138, %v3423, %v3422
    %v3425 = vperm.slane %v2218, %v3140
    %v3426 = vsel %vm3142, %v3425, %v3424
    %v3427 = vperm.slane %v2219, %v3144
    %v3428 = vsel %vm3146, %v3427, %v3426
    %v3429 = vperm.slane %v2220, %v3148
    %v3430 = vsel %vm3150, %v3429, %v3428
    %v3431 = vperm.slane %v2221, %v3090
    %v3432 = vperm.slane %v2222, %v3092
    %v3433 = vsel %vm3094, %v3432, %v3431
    %v3434 = vperm.slane %v2223, %v3096
    %v3435 = vsel %vm3098, %v3434, %v3433
    %v3436 = vperm.slane %v2224, %v3100
    %v3437 = vsel %vm3102, %v3436, %v3435
    %v3438 = vperm.slane %v2225, %v3104
    %v3439 = vsel %vm3106, %v3438, %v3437
    %v3440 = vperm.slane %v2226, %v3108
    %v3441 = vsel %vm3110, %v3440, %v3439
    %v3442 = vperm.slane %v2227, %v3112
    %v3443 = vsel %vm3114, %v3442, %v3441
    %v3444 = vperm.slane %v2228, %v3116
    %v3445 = vsel %vm3118, %v3444, %v3443
    %v3446 = vperm.slane %v2229, %v3120
    %v3447 = vsel %vm3122, %v3446, %v3445
    %v3448 = vperm.slane %v2230, %v3124
    %v3449 = vsel %vm3126, %v3448, %v3447
    %v3450 = vperm.slane %v2231, %v3128
    %v3451 = vsel %vm3130, %v3450, %v3449
    %v3452 = vperm.slane %v2232, %v3132
    %v3453 = vsel %vm3134, %v3452, %v3451
    %v3454 = vperm.slane %v2233, %v3136
    %v3455 = vsel %vm3138, %v3454, %v3453
    %v3456 = vperm.slane %v2234, %v3140
    %v3457 = vsel %vm3142, %v3456, %v3455
    %v3458 = vperm.slane %v2235, %v3144
    %v3459 = vsel %vm3146, %v3458, %v3457
    %v3460 = vperm.slane %v2236, %v3148
    %v3461 = vsel %vm3150, %v3460, %v3459
    %v3462 = vperm.slane %v2237, %v3090
    %v3463 = vperm.slane %v2238, %v3092
    %v3464 = vsel %vm3094, %v3463, %v3462
    %v3465 = vperm.slane %v2239, %v3096
    %v3466 = vsel %vm3098, %v3465, %v3464
    %v3467 = vperm.slane %v2240, %v3100
    %v3468 = vsel %vm3102, %v3467, %v3466
    %v3469 = vperm.slane %v2241, %v3104
    %v3470 = vsel %vm3106, %v3469, %v3468
    %v3471 = vperm.slane %v2242, %v3108
    %v3472 = vsel %vm3110, %v3471, %v3470
    %v3473 = vperm.slane %v2243, %v3112
    %v3474 = vsel %vm3114, %v3473, %v3472
    %v3475 = vperm.slane %v2244, %v3116
    %v3476 = vsel %vm3118, %v3475, %v3474
    %v3477 = vperm.slane %v2245, %v3120
    %v3478 = vsel %vm3122, %v3477, %v3476
    %v3479 = vperm.slane %v2246, %v3124
    %v3480 = vsel %vm3126, %v3479, %v3478
    %v3481 = vperm.slane %v2247, %v3128
    %v3482 = vsel %vm3130, %v3481, %v3480
    %v3483 = vperm.slane %v2248, %v3132
    %v3484 = vsel %vm3134, %v3483, %v3482
    %v3485 = vperm.slane %v2249, %v3136
    %v3486 = vsel %vm3138, %v3485, %v3484
    %v3487 = vperm.slane %v2250, %v3140
    %v3488 = vsel %vm3142, %v3487, %v3486
    %v3489 = vperm.slane %v2251, %v3144
    %v3490 = vsel %vm3146, %v3489, %v3488
    %v3491 = vperm.slane %v2252, %v3148
    %v3492 = vsel %vm3150, %v3491, %v3490
    %v3493 = vperm.slane %v2253, %v3090
    %v3494 = vperm.slane %v2254, %v3092
    %v3495 = vsel %vm3094, %v3494, %v3493
    %v3496 = vperm.slane %v2255, %v3096
    %v3497 = vsel %vm3098, %v3496, %v3495
    %v3498 = vperm.slane %v2256, %v3100
    %v3499 = vsel %vm3102, %v3498, %v3497
    %v3500 = vperm.slane %v2257, %v3104
    %v3501 = vsel %vm3106, %v3500, %v3499
    %v3502 = vperm.slane %v2258, %v3108
    %v3503 = vsel %vm3110, %v3502, %v3501
    %v3504 = vperm.slane %v2259, %v3112
    %v3505 = vsel %vm3114, %v3504, %v3503
    %v3506 = vperm.slane %v2260, %v3116
    %v3507 = vsel %vm3118, %v3506, %v3505
    %v3508 = vperm.slane %v2261, %v3120
    %v3509 = vsel %vm3122, %v3508, %v3507
    %v3510 = vperm.slane %v2262, %v3124
    %v3511 = vsel %vm3126, %v3510, %v3509
    %v3512 = vperm.slane %v2263, %v3128
    %v3513 = vsel %vm3130, %v3512, %v3511
    %v3514 = vperm.slane %v2264, %v3132
    %v3515 = vsel %vm3134, %v3514, %v3513
    %v3516 = vperm.slane %v2265, %v3136
    %v3517 = vsel %vm3138, %v3516, %v3515
    %v3518 = vperm.slane %v2266, %v3140
    %v3519 = vsel %vm3142, %v3518, %v3517
    %v3520 = vperm.slane %v2267, %v3144
    %v3521 = vsel %vm3146, %v3520, %v3519
    %v3522 = vperm.slane %v2268, %v3148
    %v3523 = vsel %vm3150, %v3522, %v3521
    %v3524 = vperm.slane %v2269, %v3090
    %v3525 = vperm.slane %v2270, %v3092
    %v3526 = vsel %vm3094, %v3525, %v3524
    %v3527 = vperm.slane %v2271, %v3096
    %v3528 = vsel %vm3098, %v3527, %v3526
    %v3529 = vperm.slane %v2272, %v3100
    %v3530 = vsel %vm3102, %v3529, %v3528
    %v3531 = vperm.slane %v2273, %v3104
    %v3532 = vsel %vm3106, %v3531, %v3530
    %v3533 = vperm.slane %v2274, %v3108
    %v3534 = vsel %vm3110, %v3533, %v3532
    %v3535 = vperm.slane %v2275, %v3112
    %v3536 = vsel %vm3114, %v3535, %v3534
    %v3537 = vperm.slane %v2276, %v3116
    %v3538 = vsel %vm3118, %v3537, %v3536
    %v3539 = vperm.slane %v2277, %v3120
    %v3540 = vsel %vm3122, %v3539, %v3538
    %v3541 = vperm.slane %v2278, %v3124
    %v3542 = vsel %vm3126, %v3541, %v3540
    %v3543 = vperm.slane %v2279, %v3128
    %v3544 = vsel %vm3130, %v3543, %v3542
    %v3545 = vperm.slane %v2280, %v3132
    %v3546 = vsel %vm3134, %v3545, %v3544
    %v3547 = vperm.slane %v2281, %v3136
    %v3548 = vsel %vm3138, %v3547, %v3546
    %v3549 = vperm.slane %v2282, %v3140
    %v3550 = vsel %vm3142, %v3549, %v3548
    %v3551 = vperm.slane %v2283, %v3144
    %v3552 = vsel %vm3146, %v3551, %v3550
    %v3553 = vperm.slane %v2284, %v3148
    %v3554 = vsel %vm3150, %v3553, %v3552
    %v3555 = vperm.slane %v2285, %v3090
    %v3556 = vperm.slane %v2286, %v3092
    %v3557 = vsel %vm3094, %v3556, %v3555
    %v3558 = vperm.slane %v2287, %v3096
    %v3559 = vsel %vm3098, %v3558, %v3557
    %v3560 = vperm.slane %v2288, %v3100
    %v3561 = vsel %vm3102, %v3560, %v3559
    %v3562 = vperm.slane %v2289, %v3104
    %v3563 = vsel %vm3106, %v3562, %v3561
    %v3564 = vperm.slane %v2290, %v3108
    %v3565 = vsel %vm3110, %v3564, %v3563
    %v3566 = vperm.slane %v2291, %v3112
    %v3567 = vsel %vm3114, %v3566, %v3565
    %v3568 = vperm.slane %v2292, %v3116
    %v3569 = vsel %vm3118, %v3568, %v3567
    %v3570 = vperm.slane %v2293, %v3120
    %v3571 = vsel %vm3122, %v3570, %v3569
    %v3572 = vperm.slane %v2294, %v3124
    %v3573 = vsel %vm3126, %v3572, %v3571
    %v3574 = vperm.slane %v2295, %v3128
    %v3575 = vsel %vm3130, %v3574, %v3573
    %v3576 = vperm.slane %v2296, %v3132
    %v3577 = vsel %vm3134, %v3576, %v3575
    %v3578 = vperm.slane %v2297, %v3136
    %v3579 = vsel %vm3138, %v3578, %v3577
    %v3580 = vperm.slane %v2298, %v3140
    %v3581 = vsel %vm3142, %v3580, %v3579
    %v3582 = vperm.slane %v2299, %v3144
    %v3583 = vsel %vm3146, %v3582, %v3581
    %v3584 = vperm.slane %v2300, %v3148
    %v3585 = vsel %vm3150, %v3584, %v3583
    %v3586 = vperm.slane %v2301, %v3090
    %v3587 = vperm.slane %v2302, %v3092
    %v3588 = vsel %vm3094, %v3587, %v3586
    %v3589 = vperm.slane %v2303, %v3096
    %v3590 = vsel %vm3098, %v3589, %v3588
    %v3591 = vperm.slane %v2304, %v3100
    %v3592 = vsel %vm3102, %v3591, %v3590
    %v3593 = vperm.slane %v2305, %v3104
    %v3594 = vsel %vm3106, %v3593, %v3592
    %v3595 = vperm.slane %v2306, %v3108
    %v3596 = vsel %vm3110, %v3595, %v3594
    %v3597 = vperm.slane %v2307, %v3112
    %v3598 = vsel %vm3114, %v3597, %v3596
    %v3599 = vperm.slane %v2308, %v3116
    %v3600 = vsel %vm3118, %v3599, %v3598
    %v3601 = vperm.slane %v2309, %v3120
    %v3602 = vsel %vm3122, %v3601, %v3600
    %v3603 = vperm.slane %v2310, %v3124
    %v3604 = vsel %vm3126, %v3603, %v3602
    %v3605 = vperm.slane %v2311, %v3128
    %v3606 = vsel %vm3130, %v3605, %v3604
    %v3607 = vperm.slane %v2312, %v3132
    %v3608 = vsel %vm3134, %v3607, %v3606
    %v3609 = vperm.slane %v2313, %v3136
    %v3610 = vsel %vm3138, %v3609, %v3608
    %v3611 = vperm.slane %v2314, %v3140
    %v3612 = vsel %vm3142, %v3611, %v3610
    %v3613 = vperm.slane %v2315, %v3144
    %v3614 = vsel %vm3146, %v3613, %v3612
    %v3615 = vperm.slane %v2316, %v3148
    %v3616 = vsel %vm3150, %v3615, %v3614
    %v3617 = vperm.slane %v2317, %v3090
    %v3618 = vperm.slane %v2318, %v3092
    %v3619 = vsel %vm3094, %v3618, %v3617
    %v3620 = vperm.slane %v2319, %v3096
    %v3621 = vsel %vm3098, %v3620, %v3619
    %v3622 = vperm.slane %v2320, %v3100
    %v3623 = vsel %vm3102, %v3622, %v3621
    %v3624 = vperm.slane %v2321, %v3104
    %v3625 = vsel %vm3106, %v3624, %v3623
    %v3626 = vperm.slane %v2322, %v3108
    %v3627 = vsel %vm3110, %v3626, %v3625
    %v3628 = vperm.slane %v2323, %v3112
    %v3629 = vsel %vm3114, %v3628, %v3627
    %v3630 = vperm.slane %v2324, %v3116
    %v3631 = vsel %vm3118, %v3630, %v3629
    %v3632 = vperm.slane %v2325, %v3120
    %v3633 = vsel %vm3122, %v3632, %v3631
    %v3634 = vperm.slane %v2326, %v3124
    %v3635 = vsel %vm3126, %v3634, %v3633
    %v3636 = vperm.slane %v2327, %v3128
    %v3637 = vsel %vm3130, %v3636, %v3635
    %v3638 = vperm.slane %v2328, %v3132
    %v3639 = vsel %vm3134, %v3638, %v3637
    %v3640 = vperm.slane %v2329, %v3136
    %v3641 = vsel %vm3138, %v3640, %v3639
    %v3642 = vperm.slane %v2330, %v3140
    %v3643 = vsel %vm3142, %v3642, %v3641
    %v3644 = vperm.slane %v2331, %v3144
    %v3645 = vsel %vm3146, %v3644, %v3643
    %v3646 = vperm.slane %v2332, %v3148
    %v3647 = vsel %vm3150, %v3646, %v3645
    %v3648 = vperm.slane %v2333, %v3090
    %v3649 = vperm.slane %v2334, %v3092
    %v3650 = vsel %vm3094, %v3649, %v3648
    %v3651 = vperm.slane %v2335, %v3096
    %v3652 = vsel %vm3098, %v3651, %v3650
    %v3653 = vperm.slane %v2336, %v3100
    %v3654 = vsel %vm3102, %v3653, %v3652
    %v3655 = vperm.slane %v2337, %v3104
    %v3656 = vsel %vm3106, %v3655, %v3654
    %v3657 = vperm.slane %v2338, %v3108
    %v3658 = vsel %vm3110, %v3657, %v3656
    %v3659 = vperm.slane %v2339, %v3112
    %v3660 = vsel %vm3114, %v3659, %v3658
    %v3661 = vperm.slane %v2340, %v3116
    %v3662 = vsel %vm3118, %v3661, %v3660
    %v3663 = vperm.slane %v2341, %v3120
    %v3664 = vsel %vm3122, %v3663, %v3662
    %v3665 = vperm.slane %v2342, %v3124
    %v3666 = vsel %vm3126, %v3665, %v3664
    %v3667 = vperm.slane %v2343, %v3128
    %v3668 = vsel %vm3130, %v3667, %v3666
    %v3669 = vperm.slane %v2344, %v3132
    %v3670 = vsel %vm3134, %v3669, %v3668
    %v3671 = vperm.slane %v2345, %v3136
    %v3672 = vsel %vm3138, %v3671, %v3670
    %v3673 = vperm.slane %v2346, %v3140
    %v3674 = vsel %vm3142, %v3673, %v3672
    %v3675 = vperm.slane %v2347, %v3144
    %v3676 = vsel %vm3146, %v3675, %v3674
    %v3677 = vperm.slane %v2348, %v3148
    %v3678 = vsel %vm3150, %v3677, %v3676
    %v3679 = vperm.slane %v2349, %v3090
    %v3680 = vperm.slane %v2350, %v3092
    %v3681 = vsel %vm3094, %v3680, %v3679
    %v3682 = vperm.slane %v2351, %v3096
    %v3683 = vsel %vm3098, %v3682, %v3681
    %v3684 = vperm.slane %v2352, %v3100
    %v3685 = vsel %vm3102, %v3684, %v3683
    %v3686 = vperm.slane %v2353, %v3104
    %v3687 = vsel %vm3106, %v3686, %v3685
    %v3688 = vperm.slane %v2354, %v3108
    %v3689 = vsel %vm3110, %v3688, %v3687
    %v3690 = vperm.slane %v2355, %v3112
    %v3691 = vsel %vm3114, %v3690, %v3689
    %v3692 = vperm.slane %v2356, %v3116
    %v3693 = vsel %vm3118, %v3692, %v3691
    %v3694 = vperm.slane %v2357, %v3120
    %v3695 = vsel %vm3122, %v3694, %v3693
    %v3696 = vperm.slane %v2358, %v3124
    %v3697 = vsel %vm3126, %v3696, %v3695
    %v3698 = vperm.slane %v2359, %v3128
    %v3699 = vsel %vm3130, %v3698, %v3697
    %v3700 = vperm.slane %v2360, %v3132
    %v3701 = vsel %vm3134, %v3700, %v3699
    %v3702 = vperm.slane %v2361, %v3136
    %v3703 = vsel %vm3138, %v3702, %v3701
    %v3704 = vperm.slane %v2362, %v3140
    %v3705 = vsel %vm3142, %v3704, %v3703
    %v3706 = vperm.slane %v2363, %v3144
    %v3707 = vsel %vm3146, %v3706, %v3705
    %v3708 = vperm.slane %v2364, %v3148
    %v3709 = vsel %vm3150, %v3708, %v3707
    %v3710 = vperm.slane %v2365, %v3090
    %v3711 = vperm.slane %v2366, %v3092
    %v3712 = vsel %vm3094, %v3711, %v3710
    %v3713 = vperm.slane %v2367, %v3096
    %v3714 = vsel %vm3098, %v3713, %v3712
    %v3715 = vperm.slane %v2368, %v3100
    %v3716 = vsel %vm3102, %v3715, %v3714
    %v3717 = vperm.slane %v2369, %v3104
    %v3718 = vsel %vm3106, %v3717, %v3716
    %v3719 = vperm.slane %v2370, %v3108
    %v3720 = vsel %vm3110, %v3719, %v3718
    %v3721 = vperm.slane %v2371, %v3112
    %v3722 = vsel %vm3114, %v3721, %v3720
    %v3723 = vperm.slane %v2372, %v3116
    %v3724 = vsel %vm3118, %v3723, %v3722
    %v3725 = vperm.slane %v2373, %v3120
    %v3726 = vsel %vm3122, %v3725, %v3724
    %v3727 = vperm.slane %v2374, %v3124
    %v3728 = vsel %vm3126, %v3727, %v3726
    %v3729 = vperm.slane %v2375, %v3128
    %v3730 = vsel %vm3130, %v3729, %v3728
    %v3731 = vperm.slane %v2376, %v3132
    %v3732 = vsel %vm3134, %v3731, %v3730
    %v3733 = vperm.slane %v2377, %v3136
    %v3734 = vsel %vm3138, %v3733, %v3732
    %v3735 = vperm.slane %v2378, %v3140
    %v3736 = vsel %vm3142, %v3735, %v3734
    %v3737 = vperm.slane %v2379, %v3144
    %v3738 = vsel %vm3146, %v3737, %v3736
    %v3739 = vperm.slane %v2380, %v3148
    %v3740 = vsel %vm3150, %v3739, %v3738
    %v3741 = vperm.slane %v2381, %v3090
    %v3742 = vperm.slane %v2382, %v3092
    %v3743 = vsel %vm3094, %v3742, %v3741
    %v3744 = vperm.slane %v2383, %v3096
    %v3745 = vsel %vm3098, %v3744, %v3743
    %v3746 = vperm.slane %v2384, %v3100
    %v3747 = vsel %vm3102, %v3746, %v3745
    %v3748 = vperm.slane %v2385, %v3104
    %v3749 = vsel %vm3106, %v3748, %v3747
    %v3750 = vperm.slane %v2386, %v3108
    %v3751 = vsel %vm3110, %v3750, %v3749
    %v3752 = vperm.slane %v2387, %v3112
    %v3753 = vsel %vm3114, %v3752, %v3751
    %v3754 = vperm.slane %v2388, %v3116
    %v3755 = vsel %vm3118, %v3754, %v3753
    %v3756 = vperm.slane %v2389, %v3120
    %v3757 = vsel %vm3122, %v3756, %v3755
    %v3758 = vperm.slane %v2390, %v3124
    %v3759 = vsel %vm3126, %v3758, %v3757
    %v3760 = vperm.slane %v2391, %v3128
    %v3761 = vsel %vm3130, %v3760, %v3759
    %v3762 = vperm.slane %v2392, %v3132
    %v3763 = vsel %vm3134, %v3762, %v3761
    %v3764 = vperm.slane %v2393, %v3136
    %v3765 = vsel %vm3138, %v3764, %v3763
    %v3766 = vperm.slane %v2394, %v3140
    %v3767 = vsel %vm3142, %v3766, %v3765
    %v3768 = vperm.slane %v2395, %v3144
    %v3769 = vsel %vm3146, %v3768, %v3767
    %v3770 = vperm.slane %v2396, %v3148
    %v3771 = vsel %vm3150, %v3770, %v3769
    %v3772 = vperm.slane %v2397, %v3090
    %v3773 = vperm.slane %v2398, %v3092
    %v3774 = vsel %vm3094, %v3773, %v3772
    %v3775 = vperm.slane %v2399, %v3096
    %v3776 = vsel %vm3098, %v3775, %v3774
    %v3777 = vperm.slane %v2400, %v3100
    %v3778 = vsel %vm3102, %v3777, %v3776
    %v3779 = vperm.slane %v2401, %v3104
    %v3780 = vsel %vm3106, %v3779, %v3778
    %v3781 = vperm.slane %v2402, %v3108
    %v3782 = vsel %vm3110, %v3781, %v3780
    %v3783 = vperm.slane %v2403, %v3112
    %v3784 = vsel %vm3114, %v3783, %v3782
    %v3785 = vperm.slane %v2404, %v3116
    %v3786 = vsel %vm3118, %v3785, %v3784
    %v3787 = vperm.slane %v2405, %v3120
    %v3788 = vsel %vm3122, %v3787, %v3786
    %v3789 = vperm.slane %v2406, %v3124
    %v3790 = vsel %vm3126, %v3789, %v3788
    %v3791 = vperm.slane %v2407, %v3128
    %v3792 = vsel %vm3130, %v3791, %v3790
    %v3793 = vperm.slane %v2408, %v3132
    %v3794 = vsel %vm3134, %v3793, %v3792
    %v3795 = vperm.slane %v2409, %v3136
    %v3796 = vsel %vm3138, %v3795, %v3794
    %v3797 = vperm.slane %v2410, %v3140
    %v3798 = vsel %vm3142, %v3797, %v3796
    %v3799 = vperm.slane %v2411, %v3144
    %v3800 = vsel %vm3146, %v3799, %v3798
    %v3801 = vperm.slane %v2412, %v3148
    %v3802 = vsel %vm3150, %v3801, %v3800
    %v3803 = vperm.slane %v2413, %v3090
    %v3804 = vperm.slane %v2414, %v3092
    %v3805 = vsel %vm3094, %v3804, %v3803
    %v3806 = vperm.slane %v2415, %v3096
    %v3807 = vsel %vm3098, %v3806, %v3805
    %v3808 = vperm.slane %v2416, %v3100
    %v3809 = vsel %vm3102, %v3808, %v3807
    %v3810 = vperm.slane %v2417, %v3104
    %v3811 = vsel %vm3106, %v3810, %v3809
    %v3812 = vperm.slane %v2418, %v3108
    %v3813 = vsel %vm3110, %v3812, %v3811
    %v3814 = vperm.slane %v2419, %v3112
    %v3815 = vsel %vm3114, %v3814, %v3813
    %v3816 = vperm.slane %v2420, %v3116
    %v3817 = vsel %vm3118, %v3816, %v3815
    %v3818 = vperm.slane %v2421, %v3120
    %v3819 = vsel %vm3122, %v3818, %v3817
    %v3820 = vperm.slane %v2422, %v3124
    %v3821 = vsel %vm3126, %v3820, %v3819
    %v3822 = vperm.slane %v2423, %v3128
    %v3823 = vsel %vm3130, %v3822, %v3821
    %v3824 = vperm.slane %v2424, %v3132
    %v3825 = vsel %vm3134, %v3824, %v3823
    %v3826 = vperm.slane %v2425, %v3136
    %v3827 = vsel %vm3138, %v3826, %v3825
    %v3828 = vperm.slane %v2426, %v3140
    %v3829 = vsel %vm3142, %v3828, %v3827
    %v3830 = vperm.slane %v2427, %v3144
    %v3831 = vsel %vm3146, %v3830, %v3829
    %v3832 = vperm.slane %v2428, %v3148
    %v3833 = vsel %vm3150, %v3832, %v3831
    %v3834 = vperm.slane %v2429, %v3090
    %v3835 = vperm.slane %v2430, %v3092
    %v3836 = vsel %vm3094, %v3835, %v3834
    %v3837 = vperm.slane %v2431, %v3096
    %v3838 = vsel %vm3098, %v3837, %v3836
    %v3839 = vperm.slane %v2432, %v3100
    %v3840 = vsel %vm3102, %v3839, %v3838
    %v3841 = vperm.slane %v2433, %v3104
    %v3842 = vsel %vm3106, %v3841, %v3840
    %v3843 = vperm.slane %v2434, %v3108
    %v3844 = vsel %vm3110, %v3843, %v3842
    %v3845 = vperm.slane %v2435, %v3112
    %v3846 = vsel %vm3114, %v3845, %v3844
    %v3847 = vperm.slane %v2436, %v3116
    %v3848 = vsel %vm3118, %v3847, %v3846
    %v3849 = vperm.slane %v2437, %v3120
    %v3850 = vsel %vm3122, %v3849, %v3848
    %v3851 = vperm.slane %v2438, %v3124
    %v3852 = vsel %vm3126, %v3851, %v3850
    %v3853 = vperm.slane %v2439, %v3128
    %v3854 = vsel %vm3130, %v3853, %v3852
    %v3855 = vperm.slane %v2440, %v3132
    %v3856 = vsel %vm3134, %v3855, %v3854
    %v3857 = vperm.slane %v2441, %v3136
    %v3858 = vsel %vm3138, %v3857, %v3856
    %v3859 = vperm.slane %v2442, %v3140
    %v3860 = vsel %vm3142, %v3859, %v3858
    %v3861 = vperm.slane %v2443, %v3144
    %v3862 = vsel %vm3146, %v3861, %v3860
    %v3863 = vperm.slane %v2444, %v3148
    %v3864 = vsel %vm3150, %v3863, %v3862
    %v3865 = vperm.slane %v2445, %v3090
    %v3866 = vperm.slane %v2446, %v3092
    %v3867 = vsel %vm3094, %v3866, %v3865
    %v3868 = vperm.slane %v2447, %v3096
    %v3869 = vsel %vm3098, %v3868, %v3867
    %v3870 = vperm.slane %v2448, %v3100
    %v3871 = vsel %vm3102, %v3870, %v3869
    %v3872 = vperm.slane %v2449, %v3104
    %v3873 = vsel %vm3106, %v3872, %v3871
    %v3874 = vperm.slane %v2450, %v3108
    %v3875 = vsel %vm3110, %v3874, %v3873
    %v3876 = vperm.slane %v2451, %v3112
    %v3877 = vsel %vm3114, %v3876, %v3875
    %v3878 = vperm.slane %v2452, %v3116
    %v3879 = vsel %vm3118, %v3878, %v3877
    %v3880 = vperm.slane %v2453, %v3120
    %v3881 = vsel %vm3122, %v3880, %v3879
    %v3882 = vperm.slane %v2454, %v3124
    %v3883 = vsel %vm3126, %v3882, %v3881
    %v3884 = vperm.slane %v2455, %v3128
    %v3885 = vsel %vm3130, %v3884, %v3883
    %v3886 = vperm.slane %v2456, %v3132
    %v3887 = vsel %vm3134, %v3886, %v3885
    %v3888 = vperm.slane %v2457, %v3136
    %v3889 = vsel %vm3138, %v3888, %v3887
    %v3890 = vperm.slane %v2458, %v3140
    %v3891 = vsel %vm3142, %v3890, %v3889
    %v3892 = vperm.slane %v2459, %v3144
    %v3893 = vsel %vm3146, %v3892, %v3891
    %v3894 = vperm.slane %v2460, %v3148
    %v3895 = vsel %vm3150, %v3894, %v3893
    %v3896 = vperm.slane %v2461, %v3090
    %v3897 = vperm.slane %v2462, %v3092
    %v3898 = vsel %vm3094, %v3897, %v3896
    %v3899 = vperm.slane %v2463, %v3096
    %v3900 = vsel %vm3098, %v3899, %v3898
    %v3901 = vperm.slane %v2464, %v3100
    %v3902 = vsel %vm3102, %v3901, %v3900
    %v3903 = vperm.slane %v2465, %v3104
    %v3904 = vsel %vm3106, %v3903, %v3902
    %v3905 = vperm.slane %v2466, %v3108
    %v3906 = vsel %vm3110, %v3905, %v3904
    %v3907 = vperm.slane %v2467, %v3112
    %v3908 = vsel %vm3114, %v3907, %v3906
    %v3909 = vperm.slane %v2468, %v3116
    %v3910 = vsel %vm3118, %v3909, %v3908
    %v3911 = vperm.slane %v2469, %v3120
    %v3912 = vsel %vm3122, %v3911, %v3910
    %v3913 = vperm.slane %v2470, %v3124
    %v3914 = vsel %vm3126, %v3913, %v3912
    %v3915 = vperm.slane %v2471, %v3128
    %v3916 = vsel %vm3130, %v3915, %v3914
    %v3917 = vperm.slane %v2472, %v3132
    %v3918 = vsel %vm3134, %v3917, %v3916
    %v3919 = vperm.slane %v2473, %v3136
    %v3920 = vsel %vm3138, %v3919, %v3918
    %v3921 = vperm.slane %v2474, %v3140
    %v3922 = vsel %vm3142, %v3921, %v3920
    %v3923 = vperm.slane %v2475, %v3144
    %v3924 = vsel %vm3146, %v3923, %v3922
    %v3925 = vperm.slane %v2476, %v3148
    %v3926 = vsel %vm3150, %v3925, %v3924
    %v3927 = vperm.slane %v2477, %v3090
    %v3928 = vperm.slane %v2478, %v3092
    %v3929 = vsel %vm3094, %v3928, %v3927
    %v3930 = vperm.slane %v2479, %v3096
    %v3931 = vsel %vm3098, %v3930, %v3929
    %v3932 = vperm.slane %v2480, %v3100
    %v3933 = vsel %vm3102, %v3932, %v3931
    %v3934 = vperm.slane %v2481, %v3104
    %v3935 = vsel %vm3106, %v3934, %v3933
    %v3936 = vperm.slane %v2482, %v3108
    %v3937 = vsel %vm3110, %v3936, %v3935
    %v3938 = vperm.slane %v2483, %v3112
    %v3939 = vsel %vm3114, %v3938, %v3937
    %v3940 = vperm.slane %v2484, %v3116
    %v3941 = vsel %vm3118, %v3940, %v3939
    %v3942 = vperm.slane %v2485, %v3120
    %v3943 = vsel %vm3122, %v3942, %v3941
    %v3944 = vperm.slane %v2486, %v3124
    %v3945 = vsel %vm3126, %v3944, %v3943
    %v3946 = vperm.slane %v2487, %v3128
    %v3947 = vsel %vm3130, %v3946, %v3945
    %v3948 = vperm.slane %v2488, %v3132
    %v3949 = vsel %vm3134, %v3948, %v3947
    %v3950 = vperm.slane %v2489, %v3136
    %v3951 = vsel %vm3138, %v3950, %v3949
    %v3952 = vperm.slane %v2490, %v3140
    %v3953 = vsel %vm3142, %v3952, %v3951
    %v3954 = vperm.slane %v2491, %v3144
    %v3955 = vsel %vm3146, %v3954, %v3953
    %v3956 = vperm.slane %v2492, %v3148
    %v3957 = vsel %vm3150, %v3956, %v3955
    %v3958 = vperm.slane %v2493, %v3090
    %v3959 = vperm.slane %v2494, %v3092
    %v3960 = vsel %vm3094, %v3959, %v3958
    %v3961 = vperm.slane %v2495, %v3096
    %v3962 = vsel %vm3098, %v3961, %v3960
    %v3963 = vperm.slane %v2496, %v3100
    %v3964 = vsel %vm3102, %v3963, %v3962
    %v3965 = vperm.slane %v2497, %v3104
    %v3966 = vsel %vm3106, %v3965, %v3964
    %v3967 = vperm.slane %v2498, %v3108
    %v3968 = vsel %vm3110, %v3967, %v3966
    %v3969 = vperm.slane %v2499, %v3112
    %v3970 = vsel %vm3114, %v3969, %v3968
    %v3971 = vperm.slane %v2500, %v3116
    %v3972 = vsel %vm3118, %v3971, %v3970
    %v3973 = vperm.slane %v2501, %v3120
    %v3974 = vsel %vm3122, %v3973, %v3972
    %v3975 = vperm.slane %v2502, %v3124
    %v3976 = vsel %vm3126, %v3975, %v3974
    %v3977 = vperm.slane %v2503, %v3128
    %v3978 = vsel %vm3130, %v3977, %v3976
    %v3979 = vperm.slane %v2504, %v3132
    %v3980 = vsel %vm3134, %v3979, %v3978
    %v3981 = vperm.slane %v2505, %v3136
    %v3982 = vsel %vm3138, %v3981, %v3980
    %v3983 = vperm.slane %v2506, %v3140
    %v3984 = vsel %vm3142, %v3983, %v3982
    %v3985 = vperm.slane %v2507, %v3144
    %v3986 = vsel %vm3146, %v3985, %v3984
    %v3987 = vperm.slane %v2508, %v3148
    %v3988 = vsel %vm3150, %v3987, %v3986
    %v3989 = vperm.slane %v2509, %v3090
    %v3990 = vperm.slane %v2510, %v3092
    %v3991 = vsel %vm3094, %v3990, %v3989
    %v3992 = vperm.slane %v2511, %v3096
    %v3993 = vsel %vm3098, %v3992, %v3991
    %v3994 = vperm.slane %v2512, %v3100
    %v3995 = vsel %vm3102, %v3994, %v3993
    %v3996 = vperm.slane %v2513, %v3104
    %v3997 = vsel %vm3106, %v3996, %v3995
    %v3998 = vperm.slane %v2514, %v3108
    %v3999 = vsel %vm3110, %v3998, %v3997
    %v4000 = vperm.slane %v2515, %v3112
    %v4001 = vsel %vm3114, %v4000, %v3999
    %v4002 = vperm.slane %v2516, %v3116
    %v4003 = vsel %vm3118, %v4002, %v4001
    %v4004 = vperm.slane %v2517, %v3120
    %v4005 = vsel %vm3122, %v4004, %v4003
    %v4006 = vperm.slane %v2518, %v3124
    %v4007 = vsel %vm3126, %v4006, %v4005
    %v4008 = vperm.slane %v2519, %v3128
    %v4009 = vsel %vm3130, %v4008, %v4007
    %v4010 = vperm.slane %v2520, %v3132
    %v4011 = vsel %vm3134, %v4010, %v4009
    %v4012 = vperm.slane %v2521, %v3136
    %v4013 = vsel %vm3138, %v4012, %v4011
    %v4014 = vperm.slane %v2522, %v3140
    %v4015 = vsel %vm3142, %v4014, %v4013
    %v4016 = vperm.slane %v2523, %v3144
    %v4017 = vsel %vm3146, %v4016, %v4015
    %v4018 = vperm.slane %v2524, %v3148
    %v4019 = vsel %vm3150, %v4018, %v4017
    %v4020 = vperm.slane %v2525, %v3090
    %v4021 = vperm.slane %v2526, %v3092
    %v4022 = vsel %vm3094, %v4021, %v4020
    %v4023 = vperm.slane %v2527, %v3096
    %v4024 = vsel %vm3098, %v4023, %v4022
    %v4025 = vperm.slane %v2528, %v3100
    %v4026 = vsel %vm3102, %v4025, %v4024
    %v4027 = vperm.slane %v2529, %v3104
    %v4028 = vsel %vm3106, %v4027, %v4026
    %v4029 = vperm.slane %v2530, %v3108
    %v4030 = vsel %vm3110, %v4029, %v4028
    %v4031 = vperm.slane %v2531, %v3112
    %v4032 = vsel %vm3114, %v4031, %v4030
    %v4033 = vperm.slane %v2532, %v3116
    %v4034 = vsel %vm3118, %v4033, %v4032
    %v4035 = vperm.slane %v2533, %v3120
    %v4036 = vsel %vm3122, %v4035, %v4034
    %v4037 = vperm.slane %v2534, %v3124
    %v4038 = vsel %vm3126, %v4037, %v4036
    %v4039 = vperm.slane %v2535, %v3128
    %v4040 = vsel %vm3130, %v4039, %v4038
    %v4041 = vperm.slane %v2536, %v3132
    %v4042 = vsel %vm3134, %v4041, %v4040
    %v4043 = vperm.slane %v2537, %v3136
    %v4044 = vsel %vm3138, %v4043, %v4042
    %v4045 = vperm.slane %v2538, %v3140
    %v4046 = vsel %vm3142, %v4045, %v4044
    %v4047 = vperm.slane %v2539, %v3144
    %v4048 = vsel %vm3146, %v4047, %v4046
    %v4049 = vperm.slane %v2540, %v3148
    %v4050 = vsel %vm3150, %v4049, %v4048
    %v4051 = vperm.slane %v2541, %v3090
    %v4052 = vperm.slane %v2542, %v3092
    %v4053 = vsel %vm3094, %v4052, %v4051
    %v4054 = vperm.slane %v2543, %v3096
    %v4055 = vsel %vm3098, %v4054, %v4053
    %v4056 = vperm.slane %v2544, %v3100
    %v4057 = vsel %vm3102, %v4056, %v4055
    %v4058 = vperm.slane %v2545, %v3104
    %v4059 = vsel %vm3106, %v4058, %v4057
    %v4060 = vperm.slane %v2546, %v3108
    %v4061 = vsel %vm3110, %v4060, %v4059
    %v4062 = vperm.slane %v2547, %v3112
    %v4063 = vsel %vm3114, %v4062, %v4061
    %v4064 = vperm.slane %v2548, %v3116
    %v4065 = vsel %vm3118, %v4064, %v4063
    %v4066 = vperm.slane %v2549, %v3120
    %v4067 = vsel %vm3122, %v4066, %v4065
    %v4068 = vperm.slane %v2550, %v3124
    %v4069 = vsel %vm3126, %v4068, %v4067
    %v4070 = vperm.slane %v2551, %v3128
    %v4071 = vsel %vm3130, %v4070, %v4069
    %v4072 = vperm.slane %v2552, %v3132
    %v4073 = vsel %vm3134, %v4072, %v4071
    %v4074 = vperm.slane %v2553, %v3136
    %v4075 = vsel %vm3138, %v4074, %v4073
    %v4076 = vperm.slane %v2554, %v3140
    %v4077 = vsel %vm3142, %v4076, %v4075
    %v4078 = vperm.slane %v2555, %v3144
    %v4079 = vsel %vm3146, %v4078, %v4077
    %v4080 = vperm.slane %v2556, %v3148
    %v4081 = vsel %vm3150, %v4080, %v4079
    %v4082 = vperm.slane %v2557, %v3090
    %v4083 = vperm.slane %v2558, %v3092
    %v4084 = vsel %vm3094, %v4083, %v4082
    %v4085 = vperm.slane %v2559, %v3096
    %v4086 = vsel %vm3098, %v4085, %v4084
    %v4087 = vperm.slane %v2560, %v3100
    %v4088 = vsel %vm3102, %v4087, %v4086
    %v4089 = vperm.slane %v2561, %v3104
    %v4090 = vsel %vm3106, %v4089, %v4088
    %v4091 = vperm.slane %v2562, %v3108
    %v4092 = vsel %vm3110, %v4091, %v4090
    %v4093 = vperm.slane %v2563, %v3112
    %v4094 = vsel %vm3114, %v4093, %v4092
    %v4095 = vperm.slane %v2564, %v3116
    %v4096 = vsel %vm3118, %v4095, %v4094
    %v4097 = vperm.slane %v2565, %v3120
    %v4098 = vsel %vm3122, %v4097, %v4096
    %v4099 = vperm.slane %v2566, %v3124
    %v4100 = vsel %vm3126, %v4099, %v4098
    %v4101 = vperm.slane %v2567, %v3128
    %v4102 = vsel %vm3130, %v4101, %v4100
    %v4103 = vperm.slane %v2568, %v3132
    %v4104 = vsel %vm3134, %v4103, %v4102
    %v4105 = vperm.slane %v2569, %v3136
    %v4106 = vsel %vm3138, %v4105, %v4104
    %v4107 = vperm.slane %v2570, %v3140
    %v4108 = vsel %vm3142, %v4107, %v4106
    %v4109 = vperm.slane %v2571, %v3144
    %v4110 = vsel %vm3146, %v4109, %v4108
    %v4111 = vperm.slane %v2572, %v3148
    %v4112 = vsel %vm3150, %v4111, %v4110
    %vm4113 = vcmask 1041409
    %v4114 = vsel %vm4113, %v3647, %v3151
    %v4115 = vsel %vm4113, %v3678, %v3182
    %v4116 = vsel %vm4113, %v3709, %v3213
    %v4117 = vsel %vm4113, %v3740, %v3244
    %v4118 = vsel %vm4113, %v3771, %v3275
    %v4119 = vsel %vm4113, %v3802, %v3306
    %v4120 = vsel %vm4113, %v3833, %v3337
    %v4121 = vsel %vm4113, %v3864, %v3368
    %v4122 = vsel %vm4113, %v3895, %v3399
    %v4123 = vsel %vm4113, %v3926, %v3430
    %v4124 = vsel %vm4113, %v3957, %v3461
    %v4125 = vsel %vm4113, %v3988, %v3492
    %v4126 = vsel %vm4113, %v4019, %v3523
    %v4127 = vsel %vm4113, %v4050, %v3554
    %v4128 = vsel %vm4113, %v4081, %v3585
    %v4129 = vsel %vm4113, %v4112, %v3616
    %4150 = vst [vmem:[#allocation1] ss:$4 sm:$0xff] %v2573
    %s4151 = scalar_lea.vmem [#allocation1], 32
    %4152 = vst [vmem:[%s4151] ss:$4 sm:$0xff] %v2574
    %v4153 = vld.sshfl [vmem:[#allocation1] sm:$0xff pattern:$0x73625140]
    %v4154 = vld.sshfl [vmem:[#allocation1 + $0x8] sm:$0xff pattern:$0x73625140]
    %v4155 = vld.sshfl [vmem:[#allocation1 + $0x10] sm:$0xff pattern:$0x73625140]
    %v4156 = vld.sshfl [vmem:[#allocation1 + $0x18] sm:$0xff pattern:$0x73625140]
    %v4157 = vld.sshfl [vmem:[#allocation1 + $0x20] sm:$0xff pattern:$0x73625140]
    %v4158 = vld.sshfl [vmem:[#allocation1 + $0x28] sm:$0xff pattern:$0x73625140]
    %v4159 = vld.sshfl [vmem:[#allocation1 + $0x30] sm:$0xff pattern:$0x73625140]
    %v4160 = vld.sshfl [vmem:[#allocation1 + $0x38] sm:$0xff pattern:$0x73625140]
    %4161 = vst [vmem:[#allocation1] ss:$4 sm:$0xff] %v2575
    %4162 = vst [vmem:[%s4151] ss:$4 sm:$0xff] %v2576
    %v4163 = vld.sshfl [vmem:[#allocation1] sm:$0xff pattern:$0x73625140]
    %v4164 = vld.sshfl [vmem:[#allocation1 + $0x8] sm:$0xff pattern:$0x73625140]
    %v4165 = vld.sshfl [vmem:[#allocation1 + $0x10] sm:$0xff pattern:$0x73625140]
    %v4166 = vld.sshfl [vmem:[#allocation1 + $0x18] sm:$0xff pattern:$0x73625140]
    %v4167 = vld.sshfl [vmem:[#allocation1 + $0x20] sm:$0xff pattern:$0x73625140]
    %v4168 = vld.sshfl [vmem:[#allocation1 + $0x28] sm:$0xff pattern:$0x73625140]
    %v4169 = vld.sshfl [vmem:[#allocation1 + $0x30] sm:$0xff pattern:$0x73625140]
    %v4170 = vld.sshfl [vmem:[#allocation1 + $0x38] sm:$0xff pattern:$0x73625140]
    %4187 = vmatpush.xpose.msra.mxu0 0.0
    %4188 = vmatpush.xpose.msra.mxu0 0.0
    %4189 = vmatpush.xpose.msra.mxu0 0.0
    %4190 = vmatpush.xpose.msra.mxu0 0.0
    %4191 = vmatpush.xpose.msra.mxu0 0.0
    %4192 = vmatpush.xpose.msra.mxu0 0.0
    %4193 = vmatpush.xpose.msra.mxu0 0.0
    %4194 = vmatpush.xpose.msra.mxu0 0.0
    %4195 = vmatpush.xpose.msra.mxu0 0.0
    %4196 = vmatpush.xpose.msra.mxu0 0.0
    %4197 = vmatpush.xpose.msra.mxu0 0.0
    %4198 = vmatpush.xpose.msra.mxu0 0.0
    %4199 = vmatpush.xpose.msra.mxu0 0.0
    %4200 = vmatpush.xpose.msra.mxu0 0.0
    %4201 = vmatpush.xpose.msra.mxu0 0.0
    %4202 = vmatpush.xpose.msra.mxu0 %v4153
    %4203 = vmatmul.f32.gmra.mxu0 %v4114
    %v4204 = vpop.f32.mrf.mxu0
    %v4205 = vadd.f32 0.0, %v4204
    %4206 = vdwg.mxu0
    %4207 = vmatpush.xpose.msra.mxu0 0.0
    %4208 = vmatpush.xpose.msra.mxu0 0.0
    %4209 = vmatpush.xpose.msra.mxu0 0.0
    %4210 = vmatpush.xpose.msra.mxu0 0.0
    %4211 = vmatpush.xpose.msra.mxu0 0.0
    %4212 = vmatpush.xpose.msra.mxu0 0.0
    %4213 = vmatpush.xpose.msra.mxu0 0.0
    %4214 = vmatpush.xpose.msra.mxu0 0.0
    %4215 = vmatpush.xpose.msra.mxu0 0.0
    %4216 = vmatpush.xpose.msra.mxu0 0.0
    %4217 = vmatpush.xpose.msra.mxu0 0.0
    %4218 = vmatpush.xpose.msra.mxu0 0.0
    %4219 = vmatpush.xpose.msra.mxu0 0.0
    %4220 = vmatpush.xpose.msra.mxu0 0.0
    %4221 = vmatpush.xpose.msra.mxu0 0.0
    %4222 = vmatpush.xpose.msra.mxu0 %v4154
    %4223 = vmatmul.f32.gmra.mxu0 %v4115
    %v4224 = vpop.f32.mrf.mxu0
    %v4225 = vadd.f32 %v4205, %v4224
    %4226 = vdwg.mxu0
    %4227 = vmatpush.xpose.msra.mxu0 0.0
    %4228 = vmatpush.xpose.msra.mxu0 0.0
    %4229 = vmatpush.xpose.msra.mxu0 0.0
    %4230 = vmatpush.xpose.msra.mxu0 0.0
    %4231 = vmatpush.xpose.msra.mxu0 0.0
    %4232 = vmatpush.xpose.msra.mxu0 0.0
    %4233 = vmatpush.xpose.msra.mxu0 0.0
    %4234 = vmatpush.xpose.msra.mxu0 0.0
    %4235 = vmatpush.xpose.msra.mxu0 0.0
    %4236 = vmatpush.xpose.msra.mxu0 0.0
    %4237 = vmatpush.xpose.msra.mxu0 0.0
    %4238 = vmatpush.xpose.msra.mxu0 0.0
    %4239 = vmatpush.xpose.msra.mxu0 0.0
    %4240 = vmatpush.xpose.msra.mxu0 0.0
    %4241 = vmatpush.xpose.msra.mxu0 0.0
    %4242 = vmatpush.xpose.msra.mxu0 %v4155
    %4243 = vmatmul.f32.gmra.mxu0 %v4116
    %v4244 = vpop.f32.mrf.mxu0
    %v4245 = vadd.f32 %v4225, %v4244
    %4246 = vdwg.mxu0
    %4247 = vmatpush.xpose.msra.mxu0 0.0
    %4248 = vmatpush.xpose.msra.mxu0 0.0
    %4249 = vmatpush.xpose.msra.mxu0 0.0
    %4250 = vmatpush.xpose.msra.mxu0 0.0
    %4251 = vmatpush.xpose.msra.mxu0 0.0
    %4252 = vmatpush.xpose.msra.mxu0 0.0
    %4253 = vmatpush.xpose.msra.mxu0 0.0
    %4254 = vmatpush.xpose.msra.mxu0 0.0
    %4255 = vmatpush.xpose.msra.mxu0 0.0
    %4256 = vmatpush.xpose.msra.mxu0 0.0
    %4257 = vmatpush.xpose.msra.mxu0 0.0
    %4258 = vmatpush.xpose.msra.mxu0 0.0
    %4259 = vmatpush.xpose.msra.mxu0 0.0
    %4260 = vmatpush.xpose.msra.mxu0 0.0
    %4261 = vmatpush.xpose.msra.mxu0 0.0
    %4262 = vmatpush.xpose.msra.mxu0 %v4156
    %4263 = vmatmul.f32.gmra.mxu0 %v4117
    %v4264 = vpop.f32.mrf.mxu0
    %v4265 = vadd.f32 %v4245, %v4264
    %4266 = vdwg.mxu0
    %4267 = vmatpush.xpose.msra.mxu0 0.0
    %4268 = vmatpush.xpose.msra.mxu0 0.0
    %4269 = vmatpush.xpose.msra.mxu0 0.0
    %4270 = vmatpush.xpose.msra.mxu0 0.0
    %4271 = vmatpush.xpose.msra.mxu0 0.0
    %4272 = vmatpush.xpose.msra.mxu0 0.0
    %4273 = vmatpush.xpose.msra.mxu0 0.0
    %4274 = vmatpush.xpose.msra.mxu0 0.0
    %4275 = vmatpush.xpose.msra.mxu0 0.0
    %4276 = vmatpush.xpose.msra.mxu0 0.0
    %4277 = vmatpush.xpose.msra.mxu0 0.0
    %4278 = vmatpush.xpose.msra.mxu0 0.0
    %4279 = vmatpush.xpose.msra.mxu0 0.0
    %4280 = vmatpush.xpose.msra.mxu0 0.0
    %4281 = vmatpush.xpose.msra.mxu0 0.0
    %4282 = vmatpush.xpose.msra.mxu0 %v4157
    %4283 = vmatmul.f32.gmra.mxu0 %v4118
    %v4284 = vpop.f32.mrf.mxu0
    %v4285 = vadd.f32 %v4265, %v4284
    %4286 = vdwg.mxu0
    %4287 = vmatpush.xpose.msra.mxu0 0.0
    %4288 = vmatpush.xpose.msra.mxu0 0.0
    %4289 = vmatpush.xpose.msra.mxu0 0.0
    %4290 = vmatpush.xpose.msra.mxu0 0.0
    %4291 = vmatpush.xpose.msra.mxu0 0.0
    %4292 = vmatpush.xpose.msra.mxu0 0.0
    %4293 = vmatpush.xpose.msra.mxu0 0.0
    %4294 = vmatpush.xpose.msra.mxu0 0.0
    %4295 = vmatpush.xpose.msra.mxu0 0.0
    %4296 = vmatpush.xpose.msra.mxu0 0.0
    %4297 = vmatpush.xpose.msra.mxu0 0.0
    %4298 = vmatpush.xpose.msra.mxu0 0.0
    %4299 = vmatpush.xpose.msra.mxu0 0.0
    %4300 = vmatpush.xpose.msra.mxu0 0.0
    %4301 = vmatpush.xpose.msra.mxu0 0.0
    %4302 = vmatpush.xpose.msra.mxu0 %v4158
    %4303 = vmatmul.f32.gmra.mxu0 %v4119
    %v4304 = vpop.f32.mrf.mxu0
    %v4305 = vadd.f32 %v4285, %v4304
    %4306 = vdwg.mxu0
    %4307 = vmatpush.xpose.msra.mxu0 0.0
    %4308 = vmatpush.xpose.msra.mxu0 0.0
    %4309 = vmatpush.xpose.msra.mxu0 0.0
    %4310 = vmatpush.xpose.msra.mxu0 0.0
    %4311 = vmatpush.xpose.msra.mxu0 0.0
    %4312 = vmatpush.xpose.msra.mxu0 0.0
    %4313 = vmatpush.xpose.msra.mxu0 0.0
    %4314 = vmatpush.xpose.msra.mxu0 0.0
    %4315 = vmatpush.xpose.msra.mxu0 0.0
    %4316 = vmatpush.xpose.msra.mxu0 0.0
    %4317 = vmatpush.xpose.msra.mxu0 0.0
    %4318 = vmatpush.xpose.msra.mxu0 0.0
    %4319 = vmatpush.xpose.msra.mxu0 0.0
    %4320 = vmatpush.xpose.msra.mxu0 0.0
    %4321 = vmatpush.xpose.msra.mxu0 0.0
    %4322 = vmatpush.xpose.msra.mxu0 %v4159
    %4323 = vmatmul.f32.gmra.mxu0 %v4120
    %v4324 = vpop.f32.mrf.mxu0
    %v4325 = vadd.f32 %v4305, %v4324
    %4326 = vdwg.mxu0
    %4327 = vmatpush.xpose.msra.mxu0 0.0
    %4328 = vmatpush.xpose.msra.mxu0 0.0
    %4329 = vmatpush.xpose.msra.mxu0 0.0
    %4330 = vmatpush.xpose.msra.mxu0 0.0
    %4331 = vmatpush.xpose.msra.mxu0 0.0
    %4332 = vmatpush.xpose.msra.mxu0 0.0
    %4333 = vmatpush.xpose.msra.mxu0 0.0
    %4334 = vmatpush.xpose.msra.mxu0 0.0
    %4335 = vmatpush.xpose.msra.mxu0 0.0
    %4336 = vmatpush.xpose.msra.mxu0 0.0
    %4337 = vmatpush.xpose.msra.mxu0 0.0
    %4338 = vmatpush.xpose.msra.mxu0 0.0
    %4339 = vmatpush.xpose.msra.mxu0 0.0
    %4340 = vmatpush.xpose.msra.mxu0 0.0
    %4341 = vmatpush.xpose.msra.mxu0 0.0
    %4342 = vmatpush.xpose.msra.mxu0 %v4160
    %4343 = vmatmul.f32.gmra.mxu0 %v4121
    %v4344 = vpop.f32.mrf.mxu0
    %v4345 = vadd.f32 %v4325, %v4344
    %4346 = vdwg.mxu0
    %4347 = vmatpush.xpose.msra.mxu0 0.0
    %4348 = vmatpush.xpose.msra.mxu0 0.0
    %4349 = vmatpush.xpose.msra.mxu0 0.0
    %4350 = vmatpush.xpose.msra.mxu0 0.0
    %4351 = vmatpush.xpose.msra.mxu0 0.0
    %4352 = vmatpush.xpose.msra.mxu0 0.0
    %4353 = vmatpush.xpose.msra.mxu0 0.0
    %4354 = vmatpush.xpose.msra.mxu0 0.0
    %4355 = vmatpush.xpose.msra.mxu0 0.0
    %4356 = vmatpush.xpose.msra.mxu0 0.0
    %4357 = vmatpush.xpose.msra.mxu0 0.0
    %4358 = vmatpush.xpose.msra.mxu0 0.0
    %4359 = vmatpush.xpose.msra.mxu0 0.0
    %4360 = vmatpush.xpose.msra.mxu0 0.0
    %4361 = vmatpush.xpose.msra.mxu0 0.0
    %4362 = vmatpush.xpose.msra.mxu0 %v4163
    %4363 = vmatmul.f32.gmra.mxu0 %v4122
    %v4364 = vpop.f32.mrf.mxu0
    %v4365 = vadd.f32 %v4345, %v4364
    %4366 = vdwg.mxu0
    %4367 = vmatpush.xpose.msra.mxu0 0.0
    %4368 = vmatpush.xpose.msra.mxu0 0.0
    %4369 = vmatpush.xpose.msra.mxu0 0.0
    %4370 = vmatpush.xpose.msra.mxu0 0.0
    %4371 = vmatpush.xpose.msra.mxu0 0.0
    %4372 = vmatpush.xpose.msra.mxu0 0.0
    %4373 = vmatpush.xpose.msra.mxu0 0.0
    %4374 = vmatpush.xpose.msra.mxu0 0.0
    %4375 = vmatpush.xpose.msra.mxu0 0.0
    %4376 = vmatpush.xpose.msra.mxu0 0.0
    %4377 = vmatpush.xpose.msra.mxu0 0.0
    %4378 = vmatpush.xpose.msra.mxu0 0.0
    %4379 = vmatpush.xpose.msra.mxu0 0.0
    %4380 = vmatpush.xpose.msra.mxu0 0.0
    %4381 = vmatpush.xpose.msra.mxu0 0.0
    %4382 = vmatpush.xpose.msra.mxu0 %v4164
    %4383 = vmatmul.f32.gmra.mxu0 %v4123
    %v4384 = vpop.f32.mrf.mxu0
    %v4385 = vadd.f32 %v4365, %v4384
    %4386 = vdwg.mxu0
    %4387 = vmatpush.xpose.msra.mxu0 0.0
    %4388 = vmatpush.xpose.msra.mxu0 0.0
    %4389 = vmatpush.xpose.msra.mxu0 0.0
    %4390 = vmatpush.xpose.msra.mxu0 0.0
    %4391 = vmatpush.xpose.msra.mxu0 0.0
    %4392 = vmatpush.xpose.msra.mxu0 0.0
    %4393 = vmatpush.xpose.msra.mxu0 0.0
    %4394 = vmatpush.xpose.msra.mxu0 0.0
    %4395 = vmatpush.xpose.msra.mxu0 0.0
    %4396 = vmatpush.xpose.msra.mxu0 0.0
    %4397 = vmatpush.xpose.msra.mxu0 0.0
    %4398 = vmatpush.xpose.msra.mxu0 0.0
    %4399 = vmatpush.xpose.msra.mxu0 0.0
    %4400 = vmatpush.xpose.msra.mxu0 0.0
    %4401 = vmatpush.xpose.msra.mxu0 0.0
    %4402 = vmatpush.xpose.msra.mxu0 %v4165
    %4403 = vmatmul.f32.gmra.mxu0 %v4124
    %v4404 = vpop.f32.mrf.mxu0
    %v4405 = vadd.f32 %v4385, %v4404
    %4406 = vdwg.mxu0
    %4407 = vmatpush.xpose.msra.mxu0 0.0
    %4408 = vmatpush.xpose.msra.mxu0 0.0
    %4409 = vmatpush.xpose.msra.mxu0 0.0
    %4410 = vmatpush.xpose.msra.mxu0 0.0
    %4411 = vmatpush.xpose.msra.mxu0 0.0
    %4412 = vmatpush.xpose.msra.mxu0 0.0
    %4413 = vmatpush.xpose.msra.mxu0 0.0
    %4414 = vmatpush.xpose.msra.mxu0 0.0
    %4415 = vmatpush.xpose.msra.mxu0 0.0
    %4416 = vmatpush.xpose.msra.mxu0 0.0
    %4417 = vmatpush.xpose.msra.mxu0 0.0
    %4418 = vmatpush.xpose.msra.mxu0 0.0
    %4419 = vmatpush.xpose.msra.mxu0 0.0
    %4420 = vmatpush.xpose.msra.mxu0 0.0
    %4421 = vmatpush.xpose.msra.mxu0 0.0
    %4422 = vmatpush.xpose.msra.mxu0 %v4166
    %4423 = vmatmul.f32.gmra.mxu0 %v4125
    %v4424 = vpop.f32.mrf.mxu0
    %v4425 = vadd.f32 %v4405, %v4424
    %4426 = vdwg.mxu0
    %4427 = vmatpush.xpose.msra.mxu0 0.0
    %4428 = vmatpush.xpose.msra.mxu0 0.0
    %4429 = vmatpush.xpose.msra.mxu0 0.0
    %4430 = vmatpush.xpose.msra.mxu0 0.0
    %4431 = vmatpush.xpose.msra.mxu0 0.0
    %4432 = vmatpush.xpose.msra.mxu0 0.0
    %4433 = vmatpush.xpose.msra.mxu0 0.0
    %4434 = vmatpush.xpose.msra.mxu0 0.0
    %4435 = vmatpush.xpose.msra.mxu0 0.0
    %4436 = vmatpush.xpose.msra.mxu0 0.0
    %4437 = vmatpush.xpose.msra.mxu0 0.0
    %4438 = vmatpush.xpose.msra.mxu0 0.0
    %4439 = vmatpush.xpose.msra.mxu0 0.0
    %4440 = vmatpush.xpose.msra.mxu0 0.0
    %4441 = vmatpush.xpose.msra.mxu0 0.0
    %4442 = vmatpush.xpose.msra.mxu0 %v4167
    %4443 = vmatmul.f32.gmra.mxu0 %v4126
    %v4444 = vpop.f32.mrf.mxu0
    %v4445 = vadd.f32 %v4425, %v4444
    %4446 = vdwg.mxu0
    %4447 = vmatpush.xpose.msra.mxu0 0.0
    %4448 = vmatpush.xpose.msra.mxu0 0.0
    %4449 = vmatpush.xpose.msra.mxu0 0.0
    %4450 = vmatpush.xpose.msra.mxu0 0.0
    %4451 = vmatpush.xpose.msra.mxu0 0.0
    %4452 = vmatpush.xpose.msra.mxu0 0.0
    %4453 = vmatpush.xpose.msra.mxu0 0.0
    %4454 = vmatpush.xpose.msra.mxu0 0.0
    %4455 = vmatpush.xpose.msra.mxu0 0.0
    %4456 = vmatpush.xpose.msra.mxu0 0.0
    %4457 = vmatpush.xpose.msra.mxu0 0.0
    %4458 = vmatpush.xpose.msra.mxu0 0.0
    %4459 = vmatpush.xpose.msra.mxu0 0.0
    %4460 = vmatpush.xpose.msra.mxu0 0.0
    %4461 = vmatpush.xpose.msra.mxu0 0.0
    %4462 = vmatpush.xpose.msra.mxu0 %v4168
    %4463 = vmatmul.f32.gmra.mxu0 %v4127
    %v4464 = vpop.f32.mrf.mxu0
    %v4465 = vadd.f32 %v4445, %v4464
    %4466 = vdwg.mxu0
    %4467 = vmatpush.xpose.msra.mxu0 0.0
    %4468 = vmatpush.xpose.msra.mxu0 0.0
    %4469 = vmatpush.xpose.msra.mxu0 0.0
    %4470 = vmatpush.xpose.msra.mxu0 0.0
    %4471 = vmatpush.xpose.msra.mxu0 0.0
    %4472 = vmatpush.xpose.msra.mxu0 0.0
    %4473 = vmatpush.xpose.msra.mxu0 0.0
    %4474 = vmatpush.xpose.msra.mxu0 0.0
    %4475 = vmatpush.xpose.msra.mxu0 0.0
    %4476 = vmatpush.xpose.msra.mxu0 0.0
    %4477 = vmatpush.xpose.msra.mxu0 0.0
    %4478 = vmatpush.xpose.msra.mxu0 0.0
    %4479 = vmatpush.xpose.msra.mxu0 0.0
    %4480 = vmatpush.xpose.msra.mxu0 0.0
    %4481 = vmatpush.xpose.msra.mxu0 0.0
    %4482 = vmatpush.xpose.msra.mxu0 %v4169
    %4483 = vmatmul.f32.gmra.mxu0 %v4128
    %v4484 = vpop.f32.mrf.mxu0
    %v4485 = vadd.f32 %v4465, %v4484
    %4486 = vdwg.mxu0
    %4487 = vmatpush.xpose.msra.mxu0 0.0
    %4488 = vmatpush.xpose.msra.mxu0 0.0
    %4489 = vmatpush.xpose.msra.mxu0 0.0
    %4490 = vmatpush.xpose.msra.mxu0 0.0
    %4491 = vmatpush.xpose.msra.mxu0 0.0
    %4492 = vmatpush.xpose.msra.mxu0 0.0
    %4493 = vmatpush.xpose.msra.mxu0 0.0
    %4494 = vmatpush.xpose.msra.mxu0 0.0
    %4495 = vmatpush.xpose.msra.mxu0 0.0
    %4496 = vmatpush.xpose.msra.mxu0 0.0
    %4497 = vmatpush.xpose.msra.mxu0 0.0
    %4498 = vmatpush.xpose.msra.mxu0 0.0
    %4499 = vmatpush.xpose.msra.mxu0 0.0
    %4500 = vmatpush.xpose.msra.mxu0 0.0
    %4501 = vmatpush.xpose.msra.mxu0 0.0
    %4502 = vmatpush.xpose.msra.mxu0 %v4170
    %4503 = vmatmul.f32.gmra.mxu0 %v4129
    %v4504 = vpop.f32.mrf.mxu0
    %v4505 = vadd.f32 %v4485, %v4504
    %4506 = vdwg.mxu0
    %vm4507 = vcmask 9216
    %4508 = vst.msk [vmem:[#allocation2] sm:$0x3] %vm4507, %v4505
    // Predicated region
    $region10: #{tpu_custom_call.1} parent=1 // pred_check
      _
    $region11: #{tpu_custom_call.1} parent=1 // pred_check_branch
      %4510 = sbr.rel (0) target = $region13
    $region12: #{tpu_custom_call.1} parent=1 // pred_region
      %4512 = vsyncadd [#allocation3], 0
      %s4514 = sshll.u32 [#allocation2], 4
      %s4515 = int_to_ptr.vmem [resolvable:$true] %s4514
      %s4516 = sshll.u32 %s2, 4
      %s4517 = int_to_ptr.hbm [resolvable:$true] %s4516
      %4519 = dma.vmem_to_hbm [thread:$0]  %s4515, 32, %s4517, [#allocation3]
    $region13: #{tpu_custom_call.1} parent=1 // pred_fallthru
      _
    // Predicated region
    $region14: #{tpu_custom_call.1} parent=1 // pred_check
      _
    $region15: #{tpu_custom_call.1} parent=1 // pred_check_branch
      %4521 = sbr.rel (0) target = $region17
    $region16: #{tpu_custom_call.1} parent=1 // pred_region
      %4523 = dma.done [#allocation3], 32
    $region17: #{tpu_custom_call.1} parent=1 // pred_fallthru
      _
    %4524 = vsyncpa [#allocation3], 1

</llo_original>
